<compile_context>
chip_gen: v6e
topology: v6e:2x2x1
jax: 0.10.0
libtpu: 0.0.40
codegen_flags: <defaults>
</compile_context>

<pallas_src>
import math
from functools import partial

import jax
import jax.numpy as jnp
from jax.experimental import pallas as pl
from jax.experimental.pallas import tpu as pltpu


COMPUTE_DTYPE = jnp.bfloat16        # matmul operand dtype; accumulation is always f32
LN_EPS = 1e-6                       # ONMT LayerNorm eps


def _tpu_defaults():
    """Per-generation (vmem_limit_bytes, max_row_tile): v7x has 64 MiB VMEM, v5e/v6e 128 MiB."""
    try:
        vmem = getattr(pltpu.get_tpu_info(), "vmem_capacity_bytes", 128 * 1024 * 1024)
    except Exception:
        vmem = 64 * 1024 * 1024
    if vmem <= 64 * 1024 * 1024:
        return 32 * 1024 * 1024, 512          # v7x-class (conservative)
    return 64 * 1024 * 1024, 1024             # v5e / v6e


VMEM_LIMIT, MAX_ROW_TILE = _tpu_defaults()

_DENSE_PARAMS = pltpu.CompilerParams(
    dimension_semantics=("parallel",), vmem_limit_bytes=VMEM_LIMIT)


# ----------------------------- Pallas kernels ------------------------------

def _layernorm_f32(x, g, b):
    mu = jnp.mean(x, axis=-1, keepdims=True)
    var = jnp.mean(jnp.square(x - mu), axis=-1, keepdims=True)
    return (x - mu) * jax.lax.rsqrt(var + LN_EPS) * g + b


def _prenet_kernel(x_ref, w_ref, b_ref, pe_ref, o_ref):
    # Linear(dim_code -> D) with sqrt(D) folded into w/b, plus positional encoding.
    y = jnp.dot(x_ref[0].astype(w_ref.dtype), w_ref[...],
                preferred_element_type=jnp.float32)
    o_ref[0] = (y + b_ref[...] + pe_ref[...]).astype(o_ref.dtype)


def _ln_qkv_kernel(D, x_ref, g_ref, b_ref, w_ref, bias_ref, q_ref, kv_ref):
    # LayerNorm fused with the fused QKV projection; Q and K|V are written as two
    # lane-dense outputs so attention can tile the query axis without re-reading K|V.
    xn = _layernorm_f32(x_ref[...].astype(jnp.float32), g_ref[...], b_ref[...])
    y = jnp.dot(xn.astype(w_ref.dtype), w_ref[...],
                preferred_element_type=jnp.float32) + bias_ref[...]
    q_ref[...] = y[:, :D].astype(q_ref.dtype)
    kv_ref[...] = y[:, D:].astype(kv_ref.dtype)


def _ln_matmul_kernel(relu, x_ref, g_ref, b_ref, w_ref, bias_ref, o_ref):
    # LayerNorm fused with the matmul that consumes it (optionally + ReLU).
    xn = _layernorm_f32(x_ref[...].astype(jnp.float32), g_ref[...], b_ref[...])
    y = jnp.dot(xn.astype(w_ref.dtype), w_ref[...],
                preferred_element_type=jnp.float32) + bias_ref[...]
    if relu:
        y = jnp.maximum(y, 0.0)
    o_ref[...] = y.astype(o_ref.dtype)


def _linear_kernel(x_ref, w_ref, b_ref, o_ref):
    y = jnp.dot(x_ref[...].astype(w_ref.dtype), w_ref[...],
                preferred_element_type=jnp.float32) + b_ref[...]
    o_ref[...] = y.astype(o_ref.dtype)


def _matmul_residual_kernel(x_ref, w_ref, b_ref, res_ref, o_ref):
    # x @ w + b + residual (out-proj + residual add / FFN second matmul + residual).
    y = jnp.dot(x_ref[...].astype(w_ref.dtype), w_ref[...],
                preferred_element_type=jnp.float32) + b_ref[...]
    o_ref[...] = (y + res_ref[...].astype(jnp.float32)).astype(o_ref.dtype)


def _attn_kernel(H, dh, scale, tq, causal, len_ref, q_ref, kv_ref, o_ref):
    # One (batch, query-tile) per grid step. Lane-dense (.., D) I/O; heads split in-kernel
    # via static lane slices; padding/causal masks built from the SMEM length table.
    b = pl.program_id(0)
    qt = pl.program_id(1)
    length = len_ref[b]

    q = q_ref[0]                                   # (tq, D)
    kv = kv_ref[0]                                 # (Tk, 2D): K | V
    D = q.shape[1]
    Tk = kv.shape[0]

    kpos = jax.lax.broadcasted_iota(jnp.int32, (tq, Tk), 1)
    masked = kpos >= length
    if causal:
        qpos = qt * tq + jax.lax.broadcasted_iota(jnp.int32, (tq, Tk), 0)
        masked = masked | (kpos > qpos)
    bias = jnp.where(masked, jnp.float32(-1e9), jnp.float32(0.0))

    outs = []
    for h in range(H):
        qh = q[:, h * dh:(h + 1) * dh]
        kh = kv[:, h * dh:(h + 1) * dh]
        vh = kv[:, D + h * dh:D + (h + 1) * dh]
        s = jax.lax.dot_general(qh, kh, (((1,), (1,)), ((), ())),
                                preferred_element_type=jnp.float32)   # no explicit k.T
        s = s * scale + bias
        s = s - jnp.max(s, axis=-1, keepdims=True)
        p = jnp.exp(s)
        p = p * pl.reciprocal(jnp.sum(p, axis=-1, keepdims=True), approx=False)
        outs.append(jnp.dot(p.astype(vh.dtype), vh,
                            preferred_element_type=jnp.float32))
    o_ref[0] = jnp.concatenate(outs, axis=-1).astype(o_ref.dtype)     # merge heads -> D


# ----------------------------- kernel wrappers ------------------------------

def _pick_tile(M, max_tile=None):
    """Largest row tile that divides M, is a multiple of 8, fits max_tile and keeps
    >= 2 grid steps when possible (so v7x can shard the parallel axis over 2 TCs)."""
    max_tile = MAX_ROW_TILE if max_tile is None else max_tile
    cap = (min(max_tile, max(8, M // 2)) // 8) * 8
    if M > 8 and M % 8 == 0 and cap >= 8:
        for tm in range(cap, 7, -8):
            if M % tm == 0:
                return tm
    return M


def _pick_seq_tile(T, cap=256):
    if T <= cap:
        return T
    for tq in range((cap // 8) * 8, 7, -8):
        if T % tq == 0:
            return tq
    return T


def prenet(x_btc, w, b, pe):
    B, T, C = x_btc.shape
    D = w.shape[1]
    return pl.pallas_call(
        _prenet_kernel,
        out_shape=jax.ShapeDtypeStruct((B, T, D), jnp.float32),
        grid=(B,),
        in_specs=[pl.BlockSpec((1, T, C), lambda i: (i, 0, 0)),
                  pl.BlockSpec((C, D), lambda i: (0, 0)),
                  pl.BlockSpec((1, D), lambda i: (0, 0)),
                  pl.BlockSpec((T, D), lambda i: (0, 0))],
        out_specs=pl.BlockSpec((1, T, D), lambda i: (i, 0, 0)),
        compiler_params=_DENSE_PARAMS,
    )(x_btc, w, b.reshape(1, D), pe)


def ln_qkv(x, g, b_ln, w, b):
    M, D = x.shape
    N = w.shape[1]                       # 3D
    tm = _pick_tile(M)
    return pl.pallas_call(
        partial(_ln_qkv_kernel, D),
        out_shape=(jax.ShapeDtypeStruct((M, D), COMPUTE_DTYPE),
                   jax.ShapeDtypeStruct((M, N - D), COMPUTE_DTYPE)),
        grid=(M // tm,),
        in_specs=[pl.BlockSpec((tm, D), lambda i: (i, 0)),
                  pl.BlockSpec((1, D), lambda i: (0, 0)),
                  pl.BlockSpec((1, D), lambda i: (0, 0)),
                  pl.BlockSpec((D, N), lambda i: (0, 0)),
                  pl.BlockSpec((1, N), lambda i: (0, 0))],
        out_specs=(pl.BlockSpec((tm, D), lambda i: (i, 0)),
                   pl.BlockSpec((tm, N - D), lambda i: (i, 0))),
        compiler_params=_DENSE_PARAMS,
    )(x, g.reshape(1, D), b_ln.reshape(1, D), w, b.reshape(1, N))


def ln_matmul(x, g, b_ln, w, b, relu=False, out_dtype=None):
    M, D = x.shape
    N = w.shape[1]
    tm = _pick_tile(M)
    return pl.pallas_call(
        partial(_ln_matmul_kernel, relu),
        out_shape=jax.ShapeDtypeStruct((M, N), out_dtype or COMPUTE_DTYPE),
        grid=(M // tm,),
        in_specs=[pl.BlockSpec((tm, D), lambda i: (i, 0)),
                  pl.BlockSpec((1, D), lambda i: (0, 0)),
                  pl.BlockSpec((1, D), lambda i: (0, 0)),
                  pl.BlockSpec((D, N), lambda i: (0, 0)),
                  pl.BlockSpec((1, N), lambda i: (0, 0))],
        out_specs=pl.BlockSpec((tm, N), lambda i: (i, 0)),
        compiler_params=_DENSE_PARAMS,
    )(x, g.reshape(1, D), b_ln.reshape(1, D), w, b.reshape(1, N))


def linear(x, w, b, out_dtype=None):
    M, K = x.shape
    N = w.shape[1]
    tm = _pick_tile(M)
    return pl.pallas_call(
        _linear_kernel,
        out_shape=jax.ShapeDtypeStruct((M, N), out_dtype or COMPUTE_DTYPE),
        grid=(M // tm,),
        in_specs=[pl.BlockSpec((tm, K), lambda i: (i, 0)),
                  pl.BlockSpec((K, N), lambda i: (0, 0)),
                  pl.BlockSpec((1, N), lambda i: (0, 0))],
        out_specs=pl.BlockSpec((tm, N), lambda i: (i, 0)),
        compiler_params=_DENSE_PARAMS,
    )(x, w, b.reshape(1, N))


def matmul_residual(x, w, b, res):
    M, K = x.shape
    N = w.shape[1]
    tm = _pick_tile(M)
    return pl.pallas_call(
        _matmul_residual_kernel,
        out_shape=jax.ShapeDtypeStruct((M, N), jnp.float32),   # residual stream stays f32
        grid=(M // tm,),
        in_specs=[pl.BlockSpec((tm, K), lambda i: (i, 0)),
                  pl.BlockSpec((K, N), lambda i: (0, 0)),
                  pl.BlockSpec((1, N), lambda i: (0, 0)),
                  pl.BlockSpec((tm, N), lambda i: (i, 0))],
        out_specs=pl.BlockSpec((tm, N), lambda i: (i, 0)),
        compiler_params=_DENSE_PARAMS,
    )(x, w, b.reshape(1, N), res)


def sdpa(q, kv, lengths, heads, causal):
    # q: (B, Tq, D) bf16, kv: (B, Tk, 2D) bf16 (K|V fused), lengths: (B,) int32 in SMEM.
    # TODO(synk): for very long memory a flash-style Tk-streaming accumulator would be
    # needed; here the full (Tk, 2D) K|V block for one batch element is held in VMEM.
    B, Tq, D = q.shape
    Tk = kv.shape[1]
    dh = D // heads
    tq = _pick_seq_tile(Tq)
    scale = 1.0 / math.sqrt(dh)
    return pl.pallas_call(
        partial(_attn_kernel, heads, dh, scale, tq, causal),
        out_shape=jax.ShapeDtypeStruct((B, Tq, D), COMPUTE_DTYPE),
        grid_spec=pltpu.PrefetchScalarGridSpec(
            num_scalar_prefetch=1,
            grid=(B, Tq // tq),
            in_specs=[pl.BlockSpec((1, tq, D), lambda b, t, lens: (b, t, 0)),
                      pl.BlockSpec((1, Tk, 2 * D), lambda b, t, lens: (b, 0, 0))],
            out_specs=pl.BlockSpec((1, tq, D), lambda b, t, lens: (b, t, 0))),
        compiler_params=pltpu.CompilerParams(
            dimension_semantics=("parallel", "parallel"),
            vmem_limit_bytes=VMEM_LIMIT),
    )(lengths, q, kv)


# ----------------------------- model pieces ------------------------------

def positional_encoding(T, D):
    pos = jnp.arange(T, dtype=jnp.float32)[:, None]
    div = jnp.exp(jnp.arange(0, D, 2, dtype=jnp.float32) * (-math.log(10000.0) / D))
    pe = jnp.zeros((T, D), jnp.float32)
    pe = pe.at[:, 0::2].set(jnp.sin(pos * div))
    pe = pe.at[:, 1::2].set(jnp.cos(pos * div))
    return pe                                                  # (T, D)


def decoder_tx_forward(params, hp, tgt, tgt_lengths, memory_bank, memory_lengths):
    """Returns (text, gate, rep) exactly like Decoder_Tx.forward (eval mode)."""
    T, B, _ = tgt.shape
    S = memory_bank.shape[0]
    D, H = hp['dec_rnn_size'], hp['heads']
    tgt_lengths = tgt_lengths.astype(jnp.int32)
    memory_lengths = memory_lengths.astype(jnp.int32)

    # ---- Prenet: Linear (sqrt(D) folded into weights) + PE, fused in one kernel ----
    pe = positional_encoding(T, D)
    emb = prenet(tgt.transpose(1, 0, 2), params['prenet_w'], params['prenet_b'], pe)
    x2d = emb.reshape(B * T, D)                                # (B*T, D) f32 residual stream

    src2d = memory_bank.transpose(1, 0, 2).reshape(B * S, D).astype(COMPUTE_DTYPE)

    # ---- ONMT TransformerDecoder layers (pre-norm, residual; dropout = identity) ----
    for lp in params['layers']:
        # self attention: LN1 + fused QKV -> lane-dense Q / K|V -> sdpa -> out-proj+res
        q, kv = ln_qkv(x2d, lp['ln1_g'], lp['ln1_b'], lp['sa_wqkv'], lp['sa_bqkv'])
        ctx = sdpa(q.reshape(B, T, D), kv.reshape(B, T, 2 * D),
                   tgt_lengths, H, causal=True)
        x2d = matmul_residual(ctx.reshape(B * T, D), lp['sa_wo'], lp['sa_bo'], x2d)

        # context attention: LN2 + Q projection; fused K|V projection of memory
        qc = ln_matmul(x2d, lp['ln2_g'], lp['ln2_b'], lp['ca_wq'], lp['ca_bq'])
        kvc = linear(src2d, lp['ca_wkv'], lp['ca_bkv'])
        ctx = sdpa(qc.reshape(B, T, D), kvc.reshape(B, S, 2 * D),
                   memory_lengths, H, causal=False)
        y2d = matmul_residual(ctx.reshape(B * T, D), lp['ca_wo'], lp['ca_bo'], x2d)

        # PositionwiseFeedForward: LN + w1 + relu fused, then w2 + residual fused
        inter = ln_matmul(y2d, lp['ff_ln_g'], lp['ff_ln_b'], lp['ff_w1'], lp['ff_b1'],
                          relu=True)
        x2d = matmul_residual(inter, lp['ff_w2'], lp['ff_b2'], y2d)

    # ---- final LayerNorm fused with lane-padded postnet_1|postnet_2 projection ----
    gtr = ln_matmul(x2d, params['ln_f_g'], params['ln_f_b'],
                    params['post_w'], params['post_b'], out_dtype=jnp.float32)
    nc, nr = hp['dim_code'], hp['dim_rep']
    gtr = gtr[:, :1 + nc + nr].reshape(B, T, 1 + nc + nr).transpose(1, 0, 2)
    gate = gtr[:, :, :1]
    text = gtr[:, :, 1:1 + nc]
    rep = gtr[:, :, 1 + nc:]
    return text, gate, rep


# ----------------------------- deterministic params ------------------------------

def init_linear_p(key, din, dout, scale=0.05):
    kw, kb = jax.random.split(key)
    return (scale * jax.random.normal(kw, (din, dout), jnp.float32),
            scale * jax.random.normal(kb, (dout,), jnp.float32))


def init_params(key, hp):
    D, ff, L = hp['dec_rnn_size'], hp['transformer_ff'], hp['dec_layers']
    keys = jax.random.split(key, 4 + L)
    cdt = COMPUTE_DTYPE
    emb_scale = math.sqrt(D)

    prenet_w, prenet_b = init_linear_p(keys[0], hp['dim_code'], D)
    p1w, p1b = init_linear_p(keys[1], D, hp['dim_code'] + 1)
    p2w, p2b = init_linear_p(keys[2], D, hp['dim_rep'])

    # postnet_1|postnet_2 fused and lane-padded to a multiple of 128 (unmasked stores)
    n_out = hp['dim_code'] + 1 + hp['dim_rep']
    n_pad = ((n_out + 127) // 128) * 128
    post_w = jnp.pad(jnp.concatenate([p1w, p2w], axis=1), ((0, 0), (0, n_pad - n_out)))
    post_b = jnp.pad(jnp.concatenate([p1b, p2b]), (0, n_pad - n_out))

    layers = []
    for l in range(L):
        ks = jax.random.split(keys[4 + l], 10)
        wq, bq = init_linear_p(ks[0], D, D)
        wk, bk = init_linear_p(ks[1], D, D)
        wv, bv = init_linear_p(ks[2], D, D)
        wo, bo = init_linear_p(ks[3], D, D)
        cwq, cbq = init_linear_p(ks[4], D, D)
        cwk, cbk = init_linear_p(ks[5], D, D)
        cwv, cbv = init_linear_p(ks[6], D, D)
        cwo, cbo = init_linear_p(ks[7], D, D)
        w1, b1 = init_linear_p(ks[8], D, ff)
        w2, b2 = init_linear_p(ks[9], ff, D)
        layers.append(dict(
            ln1_g=jnp.ones((D,)), ln1_b=jnp.zeros((D,)),
            sa_wqkv=jnp.concatenate([wq, wk, wv], axis=1).astype(cdt),
            sa_bqkv=jnp.concatenate([bq, bk, bv]),
            sa_wo=wo.astype(cdt), sa_bo=bo,
            ln2_g=jnp.ones((D,)), ln2_b=jnp.zeros((D,)),
            ca_wq=cwq.astype(cdt), ca_bq=cbq,
            ca_wkv=jnp.concatenate([cwk, cwv], axis=1).astype(cdt),
            ca_bkv=jnp.concatenate([cbk, cbv]),
            ca_wo=cwo.astype(cdt), ca_bo=cbo,
            ff_ln_g=jnp.ones((D,)), ff_ln_b=jnp.zeros((D,)),
            ff_w1=w1.astype(cdt), ff_b1=b1,
            ff_w2=w2.astype(cdt), ff_b2=b2))

    return dict(
        prenet_w=(prenet_w * emb_scale).astype(cdt),      # sqrt(D) folded into prenet
        prenet_b=prenet_b * emb_scale,
        layers=layers,
        ln_f_g=jnp.ones((D,)), ln_f_b=jnp.zeros((D,)),
        post_w=post_w.astype(cdt), post_b=post_b)


# ----------------------------- demo ------------------------------

if __name__ == "__main__":
    hp = dict(dim_code=16, dec_rnn_size=32, dim_rep=8,
              dec_layers=2, heads=4, transformer_ff=64,
              dec_steps_tx=640, gate_threshold=0.48)   # last two unused in forward

    T, B, S = 8, 2, 16
    key = jax.random.PRNGKey(0)
    k_p, k_tgt, k_mem = jax.random.split(key, 3)

    params = init_params(k_p, hp)
    tgt = jax.random.normal(k_tgt, (T, B, hp['dim_code']), jnp.float32)
    memory_bank = jax.random.normal(k_mem, (S, B, hp['dec_rnn_size']), jnp.float32)
    tgt_lengths = jnp.array([8, 6], jnp.int32)
    memory_lengths = jnp.array([16, 12], jnp.int32)

    # TODO(synk): dropout layers (prenet PE / attention / FFN) are identity here (eval
    # mode); the attention-weight dict ("attns") is not returned since Decoder_Tx.forward
    # discards it.
    fwd = jax.jit(partial(decoder_tx_forward, params, hp))
    text, gate, rep = jax.block_until_ready(
        fwd(tgt, tgt_lengths, memory_bank, memory_lengths))

    assert text.shape == (T, B, hp['dim_code'])
    assert gate.shape == (T, B, 1)
    assert rep.shape == (T, B, hp['dim_rep'])
    assert bool(jnp.all(jnp.isfinite(text)) & jnp.all(jnp.isfinite(gate))
                & jnp.all(jnp.isfinite(rep)))
    print("KERNEL_OK")
</pallas_src>

<mosaic_0001>
module attributes {stable_mosaic.version = 11 : i64} {
  func.func @_prenet_kernel(%arg0: i32, %arg1: memref<1x8x16xf32, #tpu.memory_space<vmem>>, %arg2: memref<16x32xbf16, #tpu.memory_space<vmem>>, %arg3: memref<1x32xf32, #tpu.memory_space<vmem>>, %arg4: memref<8x32xf32, #tpu.memory_space<vmem>>, %arg5: memref<1x8x32xf32, #tpu.memory_space<vmem>>) attributes {dimension_semantics = [#tpu.dimension_semantics<parallel>], iteration_bounds = array<i64: 2>, scalar_prefetch = 0 : i64, scratch_operands = 0 : i64, tpu.core_type = #tpu.core_type<tc>, window_params = [{transform_indices = @transform_0, window_bounds = array<i64: 1, 8, 16>}, {pipeline_mode = #tpu.pipeline_mode<synchronous>, transform_indices = @transform_1, window_bounds = array<i64: 16, 32>}, {pipeline_mode = #tpu.pipeline_mode<synchronous>, transform_indices = @transform_2, window_bounds = array<i64: 1, 32>}, {pipeline_mode = #tpu.pipeline_mode<synchronous>, transform_indices = @transform_3, window_bounds = array<i64: 8, 32>}, {transform_indices = @transform_4, window_bounds = array<i64: 1, 8, 32>}]} {
    %c0 = arith.constant 0 : index
    %c0_0 = arith.constant 0 : index
    %c0_1 = arith.constant 0 : index
    %0 = vector.load %arg1[%c0, %c0_0, %c0_1] : memref<1x8x16xf32, #tpu.memory_space<vmem>>, vector<1x8x16xf32>
    %1 = vector.shape_cast %0 : vector<1x8x16xf32> to vector<8x16xf32>
    %2 = arith.truncf %1 : vector<8x16xf32> to vector<8x16xbf16>
    %c0_2 = arith.constant 0 : index
    %c0_3 = arith.constant 0 : index
    %3 = vector.load %arg2[%c0_2, %c0_3] : memref<16x32xbf16, #tpu.memory_space<vmem>>, vector<16x32xbf16>
    %cst = arith.constant dense<0.000000e+00> : vector<8x32xf32>
    %4 = tpu.matmul %2, %3, %cst {dimension_numbers = #tpu.dot_dimension_numbers<[1], [0], [0], [1], [0, 0, 1, 1], [], []>} : vector<8x16xbf16>, vector<16x32xbf16>, vector<8x32xf32> -> vector<8x32xf32>
    %c0_4 = arith.constant 0 : index
    %c0_5 = arith.constant 0 : index
    %5 = vector.load %arg3[%c0_4, %c0_5] : memref<1x32xf32, #tpu.memory_space<vmem>>, vector<1x32xf32>
    %6 = vector.broadcast %5 : vector<1x32xf32> to vector<8x32xf32>
    %7 = arith.addf %4, %6 : vector<8x32xf32>
    %c0_6 = arith.constant 0 : index
    %c0_7 = arith.constant 0 : index
    %8 = vector.load %arg4[%c0_6, %c0_7] : memref<8x32xf32, #tpu.memory_space<vmem>>, vector<8x32xf32>
    %9 = arith.addf %7, %8 : vector<8x32xf32>
    %c0_8 = arith.constant 0 : index
    %c0_9 = arith.constant 0 : index
    %c0_10 = arith.constant 0 : index
    %10 = vector.load %arg5[%c0_8, %c0_9, %c0_10] : memref<1x8x32xf32, #tpu.memory_space<vmem>>, vector<1x8x32xf32>
    %11 = vector.shape_cast %10 : vector<1x8x32xf32> to vector<8x32xf32>
    %12 = vector.shape_cast %9 : vector<8x32xf32> to vector<1x8x32xf32>
    tpu.vector_store %arg5[%c0_8, %c0_9, %c0_10], %12 {strides = array<i32>} : memref<1x8x32xf32, #tpu.memory_space<vmem>>, vector<1x8x32xf32>,
    return
  }
  func.func @transform_0(%arg0: i32) -> (i32, i32, i32) {
    %c0_i32 = arith.constant 0 : i32
    %c0_i32_0 = arith.constant 0 : i32
    %c0_i32_1 = arith.constant 0 : i32
    return %arg0, %c0_i32, %c0_i32_0 : i32, i32, i32
  }
  func.func @transform_1(%arg0: i32) -> (i32, i32) {
    %c0_i32 = arith.constant 0 : i32
    %c0_i32_0 = arith.constant 0 : i32
    %c0_i32_1 = arith.constant 0 : i32
    return %c0_i32, %c0_i32_0 : i32, i32
  }
  func.func @transform_2(%arg0: i32) -> (i32, i32) {
    %c0_i32 = arith.constant 0 : i32
    %c0_i32_0 = arith.constant 0 : i32
    %c0_i32_1 = arith.constant 0 : i32
    return %c0_i32, %c0_i32_0 : i32, i32
  }
  func.func @transform_3(%arg0: i32) -> (i32, i32) {
    %c0_i32 = arith.constant 0 : i32
    %c0_i32_0 = arith.constant 0 : i32
    %c0_i32_1 = arith.constant 0 : i32
    return %c0_i32, %c0_i32_0 : i32, i32
  }
  func.func @transform_4(%arg0: i32) -> (i32, i32, i32) {
    %c0_i32 = arith.constant 0 : i32
    %c0_i32_0 = arith.constant 0 : i32
    %c0_i32_1 = arith.constant 0 : i32
    return %arg0, %c0_i32, %c0_i32_0 : i32, i32, i32
  }
}

module attributes {stable_mosaic.version = 11 : i64} {
  func.func @_ln_qkv_kernel(%arg0: i32, %arg1: memref<8x32xf32, #tpu.memory_space<vmem>>, %arg2: memref<1x32xf32, #tpu.memory_space<vmem>>, %arg3: memref<1x32xf32, #tpu.memory_space<vmem>>, %arg4: memref<32x96xbf16, #tpu.memory_space<vmem>>, %arg5: memref<1x96xf32, #tpu.memory_space<vmem>>, %arg6: memref<8x32xbf16, #tpu.memory_space<vmem>>, %arg7: memref<8x64xbf16, #tpu.memory_space<vmem>>) attributes {dimension_semantics = [#tpu.dimension_semantics<parallel>], iteration_bounds = array<i64: 2>, scalar_prefetch = 0 : i64, scratch_operands = 0 : i64, tpu.core_type = #tpu.core_type<tc>, window_params = [{transform_indices = @transform_0, window_bounds = array<i64: 8, 32>}, {pipeline_mode = #tpu.pipeline_mode<synchronous>, transform_indices = @transform_1, window_bounds = array<i64: 1, 32>}, {pipeline_mode = #tpu.pipeline_mode<synchronous>, transform_indices = @transform_2, window_bounds = array<i64: 1, 32>}, {pipeline_mode = #tpu.pipeline_mode<synchronous>, transform_indices = @transform_3, window_bounds = array<i64: 32, 96>}, {pipeline_mode = #tpu.pipeline_mode<synchronous>, transform_indices = @transform_4, window_bounds = array<i64: 1, 96>}, {transform_indices = @transform_5, window_bounds = array<i64: 8, 32>}, {transform_indices = @transform_6, window_bounds = array<i64: 8, 64>}]} {
    %c0 = arith.constant 0 : index
    %c0_0 = arith.constant 0 : index
    %0 = vector.load %arg1[%c0, %c0_0] : memref<8x32xf32, #tpu.memory_space<vmem>>, vector<8x32xf32>
    %c0_1 = arith.constant 0 : index
    %c0_2 = arith.constant 0 : index
    %1 = vector.load %arg2[%c0_1, %c0_2] : memref<1x32xf32, #tpu.memory_space<vmem>>, vector<1x32xf32>
    %c0_3 = arith.constant 0 : index
    %c0_4 = arith.constant 0 : index
    %2 = vector.load %arg3[%c0_3, %c0_4] : memref<1x32xf32, #tpu.memory_space<vmem>>, vector<1x32xf32>
    %cst = arith.constant dense<0.000000e+00> : vector<8xf32>
    %3 = vector.multi_reduction <add>, %0, %cst [1] : vector<8x32xf32> to vector<8xf32>
    %4 = vector.shape_cast %3 : vector<8xf32> to vector<8x1xf32>
    %cst_5 = arith.constant 3.200000e+01 : f32
    %5 = vector.broadcast %cst_5 : f32 to vector<8x1xf32>
    %6 = arith.divf %4, %5 : vector<8x1xf32>
    %7 = vector.broadcast %6 : vector<8x1xf32> to vector<8x32xf32>
    %8 = arith.subf %0, %7 : vector<8x32xf32>
    %9 = arith.mulf %8, %8 : vector<8x32xf32>
    %cst_6 = arith.constant dense<0.000000e+00> : vector<8xf32>
    %10 = vector.multi_reduction <add>, %9, %cst_6 [1] : vector<8x32xf32> to vector<8xf32>
    %11 = vector.shape_cast %10 : vector<8xf32> to vector<8x1xf32>
    %cst_7 = arith.constant 3.200000e+01 : f32
    %12 = vector.broadcast %cst_7 : f32 to vector<8x1xf32>
    %13 = arith.divf %11, %12 : vector<8x1xf32>
    %14 = vector.broadcast %6 : vector<8x1xf32> to vector<8x32xf32>
    %15 = arith.subf %0, %14 : vector<8x32xf32>
    %cst_8 = arith.constant 9.99999997E-7 : f32
    %16 = vector.broadcast %cst_8 : f32 to vector<8x1xf32>
    %17 = arith.addf %13, %16 : vector<8x1xf32>
    %18 = math.rsqrt %17 : vector<8x1xf32>
    %19 = vector.broadcast %18 : vector<8x1xf32> to vector<8x32xf32>
    %20 = arith.mulf %15, %19 : vector<8x32xf32>
    %21 = vector.broadcast %1 : vector<1x32xf32> to vector<8x32xf32>
    %22 = arith.mulf %20, %21 : vector<8x32xf32>
    %23 = vector.broadcast %2 : vector<1x32xf32> to vector<8x32xf32>
    %24 = arith.addf %22, %23 : vector<8x32xf32>
    %25 = arith.truncf %24 : vector<8x32xf32> to vector<8x32xbf16>
    %c0_9 = arith.constant 0 : index
    %c0_10 = arith.constant 0 : index
    %26 = vector.load %arg4[%c0_9, %c0_10] : memref<32x96xbf16, #tpu.memory_space<vmem>>, vector<32x96xbf16>
    %cst_11 = arith.constant dense<0.000000e+00> : vector<8x96xf32>
    %27 = tpu.matmul %25, %26, %cst_11 {dimension_numbers = #tpu.dot_dimension_numbers<[1], [0], [0], [1], [0, 0, 1, 1], [], []>} : vector<8x32xbf16>, vector<32x96xbf16>, vector<8x96xf32> -> vector<8x96xf32>
    %c0_12 = arith.constant 0 : index
    %c0_13 = arith.constant 0 : index
    %28 = vector.load %arg5[%c0_12, %c0_13] : memref<1x96xf32, #tpu.memory_space<vmem>>, vector<1x96xf32>
    %29 = vector.broadcast %28 : vector<1x96xf32> to vector<8x96xf32>
    %30 = arith.addf %27, %29 : vector<8x96xf32>
    %31 = vector.extract_strided_slice %30 {offsets = [0, 0], sizes = [8, 32], strides = [1, 1]} : vector<8x96xf32> to vector<8x32xf32>
    %32 = arith.truncf %31 : vector<8x32xf32> to vector<8x32xbf16>
    %c0_14 = arith.constant 0 : index
    %c0_15 = arith.constant 0 : index
    %33 = vector.load %arg6[%c0_14, %c0_15] : memref<8x32xbf16, #tpu.memory_space<vmem>>, vector<8x32xbf16>
    tpu.vector_store %arg6[%c0_14, %c0_15], %32 {strides = array<i32>} : memref<8x32xbf16, #tpu.memory_space<vmem>>, vector<8x32xbf16>,
    %34 = vector.extract_strided_slice %30 {offsets = [0, 32], sizes = [8, 64], strides = [1, 1]} : vector<8x96xf32> to vector<8x64xf32>
    %35 = arith.truncf %34 : vector<8x64xf32> to vector<8x64xbf16>
    %c0_16 = arith.constant 0 : index
    %c0_17 = arith.constant 0 : index
    %36 = vector.load %arg7[%c0_16, %c0_17] : memref<8x64xbf16, #tpu.memory_space<vmem>>, vector<8x64xbf16>
    tpu.vector_store %arg7[%c0_16, %c0_17], %35 {strides = array<i32>} : memref<8x64xbf16, #tpu.memory_space<vmem>>, vector<8x64xbf16>,
    return
  }
  func.func @transform_0(%arg0: i32) -> (i32, i32) {
    %c0_i32 = arith.constant 0 : i32
    %c0_i32_0 = arith.constant 0 : i32
    return %arg0, %c0_i32 : i32, i32
  }
  func.func @transform_1(%arg0: i32) -> (i32, i32) {
    %c0_i32 = arith.constant 0 : i32
    %c0_i32_0 = arith.constant 0 : i32
    %c0_i32_1 = arith.constant 0 : i32
    return %c0_i32, %c0_i32_0 : i32, i32
  }
  func.func @transform_2(%arg0: i32) -> (i32, i32) {
    %c0_i32 = arith.constant 0 : i32
    %c0_i32_0 = arith.constant 0 : i32
    %c0_i32_1 = arith.constant 0 : i32
    return %c0_i32, %c0_i32_0 : i32, i32
  }
  func.func @transform_3(%arg0: i32) -> (i32, i32) {
    %c0_i32 = arith.constant 0 : i32
    %c0_i32_0 = arith.constant 0 : i32
    %c0_i32_1 = arith.constant 0 : i32
    return %c0_i32, %c0_i32_0 : i32, i32
  }
  func.func @transform_4(%arg0: i32) -> (i32, i32) {
    %c0_i32 = arith.constant 0 : i32
    %c0_i32_0 = arith.constant 0 : i32
    %c0_i32_1 = arith.constant 0 : i32
    return %c0_i32, %c0_i32_0 : i32, i32
  }
  func.func @transform_5(%arg0: i32) -> (i32, i32) {
    %c0_i32 = arith.constant 0 : i32
    %c0_i32_0 = arith.constant 0 : i32
    return %arg0, %c0_i32 : i32, i32
  }
  func.func @transform_6(%arg0: i32) -> (i32, i32) {
    %c0_i32 = arith.constant 0 : i32
    %c0_i32_0 = arith.constant 0 : i32
    return %arg0, %c0_i32 : i32, i32
  }
}

module attributes {stable_mosaic.version = 11 : i64} {
  func.func @_attn_kernel(%arg0: i32, %arg1: i32, %arg2: memref<2xi32, #tpu.memory_space<smem>>, %arg3: memref<1x8x32xbf16, #tpu.memory_space<vmem>>, %arg4: memref<1x8x64xbf16, #tpu.memory_space<vmem>>, %arg5: memref<1x8x32xbf16, #tpu.memory_space<vmem>>) attributes {dimension_semantics = [#tpu.dimension_semantics<parallel>, #tpu.dimension_semantics<parallel>], iteration_bounds = array<i64: 2, 1>, scalar_prefetch = 1 : i64, scratch_operands = 0 : i64, tpu.core_type = #tpu.core_type<tc>, window_params = [{transform_indices = @transform_0, window_bounds = array<i64: 1, 8, 32>}, {transform_indices = @transform_1, window_bounds = array<i64: 1, 8, 64>}, {transform_indices = @transform_2, window_bounds = array<i64: 1, 8, 32>}]} {
    %0 = arith.index_cast %arg0 : i32 to index
    %1 = memref.load %arg2[%0] : memref<2xi32, #tpu.memory_space<smem>>
    %c0 = arith.constant 0 : index
    %c0_0 = arith.constant 0 : index
    %c0_1 = arith.constant 0 : index
    %2 = vector.load %arg3[%c0, %c0_0, %c0_1] : memref<1x8x32xbf16, #tpu.memory_space<vmem>>, vector<1x8x32xbf16>
    %3 = vector.shape_cast %2 : vector<1x8x32xbf16> to vector<8x32xbf16>
    %c0_2 = arith.constant 0 : index
    %c0_3 = arith.constant 0 : index
    %c0_4 = arith.constant 0 : index
    %4 = vector.load %arg4[%c0_2, %c0_3, %c0_4] : memref<1x8x64xbf16, #tpu.memory_space<vmem>>, vector<1x8x64xbf16>
    %5 = vector.shape_cast %4 : vector<1x8x64xbf16> to vector<8x64xbf16>
    %6 = tpu.iota {dimensions = array<i32: 1>} : vector<8x8xi32>
    %7 = vector.broadcast %1 : i32 to vector<8x8xi32>
    %8 = arith.cmpi sge, %6, %7 : vector<8x8xi32>
    %c8_i32 = arith.constant 8 : i32
    %9 = arith.muli %arg1, %c8_i32 : i32
    %10 = tpu.iota {dimensions = array<i32: 0>} : vector<8x8xi32>
    %11 = vector.broadcast %9 : i32 to vector<8x8xi32>
    %12 = arith.addi %11, %10 : vector<8x8xi32>
    %13 = arith.cmpi sgt, %6, %12 : vector<8x8xi32>
    %14 = arith.ori %8, %13 : vector<8x8xi1>
    %cst = arith.constant -1.000000e+09 : f32
    %cst_5 = arith.constant 0.000000e+00 : f32
    %15 = vector.broadcast %cst : f32 to vector<8x8xf32>
    %16 = vector.broadcast %cst_5 : f32 to vector<8x8xf32>
    %17 = arith.select %14, %15, %16 : vector<8x8xi1>, vector<8x8xf32>
    %18 = vector.extract_strided_slice %3 {offsets = [0, 0], sizes = [8, 8], strides = [1, 1]} : vector<8x32xbf16> to vector<8x8xbf16>
    %19 = vector.extract_strided_slice %5 {offsets = [0, 0], sizes = [8, 8], strides = [1, 1]} : vector<8x64xbf16> to vector<8x8xbf16>
    %20 = vector.extract_strided_slice %5 {offsets = [0, 32], sizes = [8, 8], strides = [1, 1]} : vector<8x64xbf16> to vector<8x8xbf16>
    %cst_6 = arith.constant dense<0.000000e+00> : vector<8x8xf32>
    %21 = tpu.matmul %18, %19, %cst_6 {dimension_numbers = #tpu.dot_dimension_numbers<[1], [1], [0], [0], [0, 0, 1, 0], [], []>} : vector<8x8xbf16>, vector<8x8xbf16>, vector<8x8xf32> -> vector<8x8xf32>
    %cst_7 = arith.constant 0.353553385 : f32
    %22 = vector.broadcast %cst_7 : f32 to vector<8x8xf32>
    %23 = arith.mulf %21, %22 : vector<8x8xf32>
    %24 = arith.addf %23, %17 : vector<8x8xf32>
    %cst_8 = arith.constant dense<0xFF800000> : vector<8xf32>
    %25 = vector.multi_reduction <maximumf>, %24, %cst_8 [1] : vector<8x8xf32> to vector<8xf32>
    %26 = vector.shape_cast %25 : vector<8xf32> to vector<8x1xf32>
    %27 = vector.broadcast %26 : vector<8x1xf32> to vector<8x8xf32>
    %28 = arith.subf %24, %27 : vector<8x8xf32>
    %29 = math.exp %28 : vector<8x8xf32>
    %cst_9 = arith.constant dense<0.000000e+00> : vector<8xf32>
    %30 = vector.multi_reduction <add>, %29, %cst_9 [1] : vector<8x8xf32> to vector<8xf32>
    %31 = vector.shape_cast %30 : vector<8xf32> to vector<8x1xf32>
    %32 = tpu.reciprocal %31 : vector<8x1xf32> -> vector<8x1xf32>
    %33 = vector.broadcast %32 : vector<8x1xf32> to vector<8x8xf32>
    %34 = arith.mulf %29, %33 : vector<8x8xf32>
    %35 = arith.truncf %34 : vector<8x8xf32> to vector<8x8xbf16>
    %cst_10 = arith.constant dense<0.000000e+00> : vector<8x8xf32>
    %36 = tpu.matmul %35, %20, %cst_10 {dimension_numbers = #tpu.dot_dimension_numbers<[1], [0], [0], [1], [0, 0, 1, 1], [], []>} : vector<8x8xbf16>, vector<8x8xbf16>, vector<8x8xf32> -> vector<8x8xf32>
    %37 = vector.extract_strided_slice %3 {offsets = [0, 8], sizes = [8, 8], strides = [1, 1]} : vector<8x32xbf16> to vector<8x8xbf16>
    %38 = vector.extract_strided_slice %5 {offsets = [0, 8], sizes = [8, 8], strides = [1, 1]} : vector<8x64xbf16> to vector<8x8xbf16>
    %39 = vector.extract_strided_slice %5 {offsets = [0, 40], sizes = [8, 8], strides = [1, 1]} : vector<8x64xbf16> to vector<8x8xbf16>
    %cst_11 = arith.constant dense<0.000000e+00> : vector<8x8xf32>
    %40 = tpu.matmul %37, %38, %cst_11 {dimension_numbers = #tpu.dot_dimension_numbers<[1], [1], [0], [0], [0, 0, 1, 0], [], []>} : vector<8x8xbf16>, vector<8x8xbf16>, vector<8x8xf32> -> vector<8x8xf32>
    %cst_12 = arith.constant 0.353553385 : f32
    %41 = vector.broadcast %cst_12 : f32 to vector<8x8xf32>
    %42 = arith.mulf %40, %41 : vector<8x8xf32>
    %43 = arith.addf %42, %17 : vector<8x8xf32>
    %cst_13 = arith.constant dense<0xFF800000> : vector<8xf32>
    %44 = vector.multi_reduction <maximumf>, %43, %cst_13 [1] : vector<8x8xf32> to vector<8xf32>
    %45 = vector.shape_cast %44 : vector<8xf32> to vector<8x1xf32>
    %46 = vector.broadcast %45 : vector<8x1xf32> to vector<8x8xf32>
    %47 = arith.subf %43, %46 : vector<8x8xf32>
    %48 = math.exp %47 : vector<8x8xf32>
    %cst_14 = arith.constant dense<0.000000e+00> : vector<8xf32>
    %49 = vector.multi_reduction <add>, %48, %cst_14 [1] : vector<8x8xf32> to vector<8xf32>
    %50 = vector.shape_cast %49 : vector<8xf32> to vector<8x1xf32>
    %51 = tpu.reciprocal %50 : vector<8x1xf32> -> vector<8x1xf32>
    %52 = vector.broadcast %51 : vector<8x1xf32> to vector<8x8xf32>
    %53 = arith.mulf %48, %52 : vector<8x8xf32>
    %54 = arith.truncf %53 : vector<8x8xf32> to vector<8x8xbf16>
    %cst_15 = arith.constant dense<0.000000e+00> : vector<8x8xf32>
    %55 = tpu.matmul %54, %39, %cst_15 {dimension_numbers = #tpu.dot_dimension_numbers<[1], [0], [0], [1], [0, 0, 1, 1], [], []>} : vector<8x8xbf16>, vector<8x8xbf16>, vector<8x8xf32> -> vector<8x8xf32>
    %56 = vector.extract_strided_slice %3 {offsets = [0, 16], sizes = [8, 8], strides = [1, 1]} : vector<8x32xbf16> to vector<8x8xbf16>
    %57 = vector.extract_strided_slice %5 {offsets = [0, 16], sizes = [8, 8], strides = [1, 1]} : vector<8x64xbf16> to vector<8x8xbf16>
    %58 = vector.extract_strided_slice %5 {offsets = [0, 48], sizes = [8, 8], strides = [1, 1]} : vector<8x64xbf16> to vector<8x8xbf16>
    %cst_16 = arith.constant dense<0.000000e+00> : vector<8x8xf32>
    %59 = tpu.matmul %56, %57, %cst_16 {dimension_numbers = #tpu.dot_dimension_numbers<[1], [1], [0], [0], [0, 0, 1, 0], [], []>} : vector<8x8xbf16>, vector<8x8xbf16>, vector<8x8xf32> -> vector<8x8xf32>
    %cst_17 = arith.constant 0.353553385 : f32
    %60 = vector.broadcast %cst_17 : f32 to vector<8x8xf32>
    %61 = arith.mulf %59, %60 : vector<8x8xf32>
    %62 = arith.addf %61, %17 : vector<8x8xf32>
    %cst_18 = arith.constant dense<0xFF800000> : vector<8xf32>
    %63 = vector.multi_reduction <maximumf>, %62, %cst_18 [1] : vector<8x8xf32> to vector<8xf32>
    %64 = vector.shape_cast %63 : vector<8xf32> to vector<8x1xf32>
    %65 = vector.broadcast %64 : vector<8x1xf32> to vector<8x8xf32>
    %66 = arith.subf %62, %65 : vector<8x8xf32>
    %67 = math.exp %66 : vector<8x8xf32>
    %cst_19 = arith.constant dense<0.000000e+00> : vector<8xf32>
    %68 = vector.multi_reduction <add>, %67, %cst_19 [1] : vector<8x8xf32> to vector<8xf32>
    %69 = vector.shape_cast %68 : vector<8xf32> to vector<8x1xf32>
    %70 = tpu.reciprocal %69 : vector<8x1xf32> -> vector<8x1xf32>
    %71 = vector.broadcast %70 : vector<8x1xf32> to vector<8x8xf32>
    %72 = arith.mulf %67, %71 : vector<8x8xf32>
    %73 = arith.truncf %72 : vector<8x8xf32> to vector<8x8xbf16>
    %cst_20 = arith.constant dense<0.000000e+00> : vector<8x8xf32>
    %74 = tpu.matmul %73, %58, %cst_20 {dimension_numbers = #tpu.dot_dimension_numbers<[1], [0], [0], [1], [0, 0, 1, 1], [], []>} : vector<8x8xbf16>, vector<8x8xbf16>, vector<8x8xf32> -> vector<8x8xf32>
    %75 = vector.extract_strided_slice %3 {offsets = [0, 24], sizes = [8, 8], strides = [1, 1]} : vector<8x32xbf16> to vector<8x8xbf16>
    %76 = vector.extract_strided_slice %5 {offsets = [0, 24], sizes = [8, 8], strides = [1, 1]} : vector<8x64xbf16> to vector<8x8xbf16>
    %77 = vector.extract_strided_slice %5 {offsets = [0, 56], sizes = [8, 8], strides = [1, 1]} : vector<8x64xbf16> to vector<8x8xbf16>
    %cst_21 = arith.constant dense<0.000000e+00> : vector<8x8xf32>
    %78 = tpu.matmul %75, %76, %cst_21 {dimension_numbers = #tpu.dot_dimension_numbers<[1], [1], [0], [0], [0, 0, 1, 0], [], []>} : vector<8x8xbf16>, vector<8x8xbf16>, vector<8x8xf32> -> vector<8x8xf32>
    %cst_22 = arith.constant 0.353553385 : f32
    %79 = vector.broadcast %cst_22 : f32 to vector<8x8xf32>
    %80 = arith.mulf %78, %79 : vector<8x8xf32>
    %81 = arith.addf %80, %17 : vector<8x8xf32>
    %cst_23 = arith.constant dense<0xFF800000> : vector<8xf32>
    %82 = vector.multi_reduction <maximumf>, %81, %cst_23 [1] : vector<8x8xf32> to vector<8xf32>
    %83 = vector.shape_cast %82 : vector<8xf32> to vector<8x1xf32>
    %84 = vector.broadcast %83 : vector<8x1xf32> to vector<8x8xf32>
    %85 = arith.subf %81, %84 : vector<8x8xf32>
    %86 = math.exp %85 : vector<8x8xf32>
    %cst_24 = arith.constant dense<0.000000e+00> : vector<8xf32>
    %87 = vector.multi_reduction <add>, %86, %cst_24 [1] : vector<8x8xf32> to vector<8xf32>
    %88 = vector.shape_cast %87 : vector<8xf32> to vector<8x1xf32>
    %89 = tpu.reciprocal %88 : vector<8x1xf32> -> vector<8x1xf32>
    %90 = vector.broadcast %89 : vector<8x1xf32> to vector<8x8xf32>
    %91 = arith.mulf %86, %90 : vector<8x8xf32>
    %92 = arith.truncf %91 : vector<8x8xf32> to vector<8x8xbf16>
    %cst_25 = arith.constant dense<0.000000e+00> : vector<8x8xf32>
    %93 = tpu.matmul %92, %77, %cst_25 {dimension_numbers = #tpu.dot_dimension_numbers<[1], [0], [0], [1], [0, 0, 1, 1], [], []>} : vector<8x8xbf16>, vector<8x8xbf16>, vector<8x8xf32> -> vector<8x8xf32>
    %94 = tpu.concatenate %36, %55, %74, %93 in 1 : vector<8x8xf32>, vector<8x8xf32>, vector<8x8xf32>, vector<8x8xf32> -> vector<8x32xf32>
    %95 = arith.truncf %94 : vector<8x32xf32> to vector<8x32xbf16>
    %c0_26 = arith.constant 0 : index
    %c0_27 = arith.constant 0 : index
    %c0_28 = arith.constant 0 : index
    %96 = vector.load %arg5[%c0_26, %c0_27, %c0_28] : memref<1x8x32xbf16, #tpu.memory_space<vmem>>, vector<1x8x32xbf16>
    %97 = vector.shape_cast %96 : vector<1x8x32xbf16> to vector<8x32xbf16>
    %98 = vector.shape_cast %95 : vector<8x32xbf16> to vector<1x8x32xbf16>
    tpu.vector_store %arg5[%c0_26, %c0_27, %c0_28], %98 {strides = array<i32>} : memref<1x8x32xbf16, #tpu.memory_space<vmem>>, vector<1x8x32xbf16>,
    return
  }
  func.func @transform_0(%arg0: i32, %arg1: i32, %arg2: memref<2xi32, #tpu.memory_space<smem>>) -> (i32, i32, i32) {
    %c0_i32 = arith.constant 0 : i32
    %c0_i32_0 = arith.constant 0 : i32
    return %arg0, %arg1, %c0_i32 : i32, i32, i32
  }
  func.func @transform_1(%arg0: i32, %arg1: i32, %arg2: memref<2xi32, #tpu.memory_space<smem>>) -> (i32, i32, i32) {
    %c0_i32 = arith.constant 0 : i32
    %c0_i32_0 = arith.constant 0 : i32
    %c0_i32_1 = arith.constant 0 : i32
    return %arg0, %c0_i32, %c0_i32_0 : i32, i32, i32
  }
  func.func @transform_2(%arg0: i32, %arg1: i32, %arg2: memref<2xi32, #tpu.memory_space<smem>>) -> (i32, i32, i32) {
    %c0_i32 = arith.constant 0 : i32
    %c0_i32_0 = arith.constant 0 : i32
    return %arg0, %arg1, %c0_i32 : i32, i32, i32
  }
}

module attributes {stable_mosaic.version = 11 : i64} {
  func.func @_matmul_residual_kernel(%arg0: i32, %arg1: memref<8x32xbf16, #tpu.memory_space<vmem>>, %arg2: memref<32x32xbf16, #tpu.memory_space<vmem>>, %arg3: memref<1x32xf32, #tpu.memory_space<vmem>>, %arg4: memref<8x32xf32, #tpu.memory_space<vmem>>, %arg5: memref<8x32xf32, #tpu.memory_space<vmem>>) attributes {dimension_semantics = [#tpu.dimension_semantics<parallel>], iteration_bounds = array<i64: 2>, scalar_prefetch = 0 : i64, scratch_operands = 0 : i64, tpu.core_type = #tpu.core_type<tc>, window_params = [{transform_indices = @transform_0, window_bounds = array<i64: 8, 32>}, {pipeline_mode = #tpu.pipeline_mode<synchronous>, transform_indices = @transform_1, window_bounds = array<i64: 32, 32>}, {pipeline_mode = #tpu.pipeline_mode<synchronous>, transform_indices = @transform_2, window_bounds = array<i64: 1, 32>}, {transform_indices = @transform_3, window_bounds = array<i64: 8, 32>}, {transform_indices = @transform_4, window_bounds = array<i64: 8, 32>}]} {
    %c0 = arith.constant 0 : index
    %c0_0 = arith.constant 0 : index
    %0 = vector.load %arg1[%c0, %c0_0] : memref<8x32xbf16, #tpu.memory_space<vmem>>, vector<8x32xbf16>
    %c0_1 = arith.constant 0 : index
    %c0_2 = arith.constant 0 : index
    %1 = vector.load %arg2[%c0_1, %c0_2] : memref<32x32xbf16, #tpu.memory_space<vmem>>, vector<32x32xbf16>
    %cst = arith.constant dense<0.000000e+00> : vector<8x32xf32>
    %2 = tpu.matmul %0, %1, %cst {dimension_numbers = #tpu.dot_dimension_numbers<[1], [0], [0], [1], [0, 0, 1, 1], [], []>} : vector<8x32xbf16>, vector<32x32xbf16>, vector<8x32xf32> -> vector<8x32xf32>
    %c0_3 = arith.constant 0 : index
    %c0_4 = arith.constant 0 : index
    %3 = vector.load %arg3[%c0_3, %c0_4] : memref<1x32xf32, #tpu.memory_space<vmem>>, vector<1x32xf32>
    %4 = vector.broadcast %3 : vector<1x32xf32> to vector<8x32xf32>
    %5 = arith.addf %2, %4 : vector<8x32xf32>
    %c0_5 = arith.constant 0 : index
    %c0_6 = arith.constant 0 : index
    %6 = vector.load %arg4[%c0_5, %c0_6] : memref<8x32xf32, #tpu.memory_space<vmem>>, vector<8x32xf32>
    %7 = arith.addf %5, %6 : vector<8x32xf32>
    %c0_7 = arith.constant 0 : index
    %c0_8 = arith.constant 0 : index
    %8 = vector.load %arg5[%c0_7, %c0_8] : memref<8x32xf32, #tpu.memory_space<vmem>>, vector<8x32xf32>
    tpu.vector_store %arg5[%c0_7, %c0_8], %7 {strides = array<i32>} : memref<8x32xf32, #tpu.memory_space<vmem>>, vector<8x32xf32>,
    return
  }
  func.func @transform_0(%arg0: i32) -> (i32, i32) {
    %c0_i32 = arith.constant 0 : i32
    %c0_i32_0 = arith.constant 0 : i32
    return %arg0, %c0_i32 : i32, i32
  }
  func.func @transform_1(%arg0: i32) -> (i32, i32) {
    %c0_i32 = arith.constant 0 : i32
    %c0_i32_0 = arith.constant 0 : i32
    %c0_i32_1 = arith.constant 0 : i32
    return %c0_i32, %c0_i32_0 : i32, i32
  }
  func.func @transform_2(%arg0: i32) -> (i32, i32) {
    %c0_i32 = arith.constant 0 : i32
    %c0_i32_0 = arith.constant 0 : i32
    %c0_i32_1 = arith.constant 0 : i32
    return %c0_i32, %c0_i32_0 : i32, i32
  }
  func.func @transform_3(%arg0: i32) -> (i32, i32) {
    %c0_i32 = arith.constant 0 : i32
    %c0_i32_0 = arith.constant 0 : i32
    return %arg0, %c0_i32 : i32, i32
  }
  func.func @transform_4(%arg0: i32) -> (i32, i32) {
    %c0_i32 = arith.constant 0 : i32
    %c0_i32_0 = arith.constant 0 : i32
    return %arg0, %c0_i32 : i32, i32
  }
}

module attributes {stable_mosaic.version = 11 : i64} {
  func.func @_ln_matmul_kernel(%arg0: i32, %arg1: memref<8x32xf32, #tpu.memory_space<vmem>>, %arg2: memref<1x32xf32, #tpu.memory_space<vmem>>, %arg3: memref<1x32xf32, #tpu.memory_space<vmem>>, %arg4: memref<32x32xbf16, #tpu.memory_space<vmem>>, %arg5: memref<1x32xf32, #tpu.memory_space<vmem>>, %arg6: memref<8x32xbf16, #tpu.memory_space<vmem>>) attributes {dimension_semantics = [#tpu.dimension_semantics<parallel>], iteration_bounds = array<i64: 2>, scalar_prefetch = 0 : i64, scratch_operands = 0 : i64, tpu.core_type = #tpu.core_type<tc>, window_params = [{transform_indices = @transform_0, window_bounds = array<i64: 8, 32>}, {pipeline_mode = #tpu.pipeline_mode<synchronous>, transform_indices = @transform_1, window_bounds = array<i64: 1, 32>}, {pipeline_mode = #tpu.pipeline_mode<synchronous>, transform_indices = @transform_2, window_bounds = array<i64: 1, 32>}, {pipeline_mode = #tpu.pipeline_mode<synchronous>, transform_indices = @transform_3, window_bounds = array<i64: 32, 32>}, {pipeline_mode = #tpu.pipeline_mode<synchronous>, transform_indices = @transform_4, window_bounds = array<i64: 1, 32>}, {transform_indices = @transform_5, window_bounds = array<i64: 8, 32>}]} {
    %c0 = arith.constant 0 : index
    %c0_0 = arith.constant 0 : index
    %0 = vector.load %arg1[%c0, %c0_0] : memref<8x32xf32, #tpu.memory_space<vmem>>, vector<8x32xf32>
    %c0_1 = arith.constant 0 : index
    %c0_2 = arith.constant 0 : index
    %1 = vector.load %arg2[%c0_1, %c0_2] : memref<1x32xf32, #tpu.memory_space<vmem>>, vector<1x32xf32>
    %c0_3 = arith.constant 0 : index
    %c0_4 = arith.constant 0 : index
    %2 = vector.load %arg3[%c0_3, %c0_4] : memref<1x32xf32, #tpu.memory_space<vmem>>, vector<1x32xf32>
    %cst = arith.constant dense<0.000000e+00> : vector<8xf32>
    %3 = vector.multi_reduction <add>, %0, %cst [1] : vector<8x32xf32> to vector<8xf32>
    %4 = vector.shape_cast %3 : vector<8xf32> to vector<8x1xf32>
    %cst_5 = arith.constant 3.200000e+01 : f32
    %5 = vector.broadcast %cst_5 : f32 to vector<8x1xf32>
    %6 = arith.divf %4, %5 : vector<8x1xf32>
    %7 = vector.broadcast %6 : vector<8x1xf32> to vector<8x32xf32>
    %8 = arith.subf %0, %7 : vector<8x32xf32>
    %9 = arith.mulf %8, %8 : vector<8x32xf32>
    %cst_6 = arith.constant dense<0.000000e+00> : vector<8xf32>
    %10 = vector.multi_reduction <add>, %9, %cst_6 [1] : vector<8x32xf32> to vector<8xf32>
    %11 = vector.shape_cast %10 : vector<8xf32> to vector<8x1xf32>
    %cst_7 = arith.constant 3.200000e+01 : f32
    %12 = vector.broadcast %cst_7 : f32 to vector<8x1xf32>
    %13 = arith.divf %11, %12 : vector<8x1xf32>
    %14 = vector.broadcast %6 : vector<8x1xf32> to vector<8x32xf32>
    %15 = arith.subf %0, %14 : vector<8x32xf32>
    %cst_8 = arith.constant 9.99999997E-7 : f32
    %16 = vector.broadcast %cst_8 : f32 to vector<8x1xf32>
    %17 = arith.addf %13, %16 : vector<8x1xf32>
    %18 = math.rsqrt %17 : vector<8x1xf32>
    %19 = vector.broadcast %18 : vector<8x1xf32> to vector<8x32xf32>
    %20 = arith.mulf %15, %19 : vector<8x32xf32>
    %21 = vector.broadcast %1 : vector<1x32xf32> to vector<8x32xf32>
    %22 = arith.mulf %20, %21 : vector<8x32xf32>
    %23 = vector.broadcast %2 : vector<1x32xf32> to vector<8x32xf32>
    %24 = arith.addf %22, %23 : vector<8x32xf32>
    %25 = arith.truncf %24 : vector<8x32xf32> to vector<8x32xbf16>
    %c0_9 = arith.constant 0 : index
    %c0_10 = arith.constant 0 : index
    %26 = vector.load %arg4[%c0_9, %c0_10] : memref<32x32xbf16, #tpu.memory_space<vmem>>, vector<32x32xbf16>
    %cst_11 = arith.constant dense<0.000000e+00> : vector<8x32xf32>
    %27 = tpu.matmul %25, %26, %cst_11 {dimension_numbers = #tpu.dot_dimension_numbers<[1], [0], [0], [1], [0, 0, 1, 1], [], []>} : vector<8x32xbf16>, vector<32x32xbf16>, vector<8x32xf32> -> vector<8x32xf32>
    %c0_12 = arith.constant 0 : index
    %c0_13 = arith.constant 0 : index
    %28 = vector.load %arg5[%c0_12, %c0_13] : memref<1x32xf32, #tpu.memory_space<vmem>>, vector<1x32xf32>
    %29 = vector.broadcast %28 : vector<1x32xf32> to vector<8x32xf32>
    %30 = arith.addf %27, %29 : vector<8x32xf32>
    %31 = arith.truncf %30 : vector<8x32xf32> to vector<8x32xbf16>
    %c0_14 = arith.constant 0 : index
    %c0_15 = arith.constant 0 : index
    %32 = vector.load %arg6[%c0_14, %c0_15] : memref<8x32xbf16, #tpu.memory_space<vmem>>, vector<8x32xbf16>
    tpu.vector_store %arg6[%c0_14, %c0_15], %31 {strides = array<i32>} : memref<8x32xbf16, #tpu.memory_space<vmem>>, vector<8x32xbf16>,
    return
  }
  func.func @transform_0(%arg0: i32) -> (i32, i32) {
    %c0_i32 = arith.constant 0 : i32
    %c0_i32_0 = arith.constant 0 : i32
    return %arg0, %c0_i32 : i32, i32
  }
  func.func @transform_1(%arg0: i32) -> (i32, i32) {
    %c0_i32 = arith.constant 0 : i32
    %c0_i32_0 = arith.constant 0 : i32
    %c0_i32_1 = arith.constant 0 : i32
    return %c0_i32, %c0_i32_0 : i32, i32
  }
  func.func @transform_2(%arg0: i32) -> (i32, i32) {
    %c0_i32 = arith.constant 0 : i32
    %c0_i32_0 = arith.constant 0 : i32
    %c0_i32_1 = arith.constant 0 : i32
    return %c0_i32, %c0_i32_0 : i32, i32
  }
  func.func @transform_3(%arg0: i32) -> (i32, i32) {
    %c0_i32 = arith.constant 0 : i32
    %c0_i32_0 = arith.constant 0 : i32
    %c0_i32_1 = arith.constant 0 : i32
    return %c0_i32, %c0_i32_0 : i32, i32
  }
  func.func @transform_4(%arg0: i32) -> (i32, i32) {
    %c0_i32 = arith.constant 0 : i32
    %c0_i32_0 = arith.constant 0 : i32
    %c0_i32_1 = arith.constant 0 : i32
    return %c0_i32, %c0_i32_0 : i32, i32
  }
  func.func @transform_5(%arg0: i32) -> (i32, i32) {
    %c0_i32 = arith.constant 0 : i32
    %c0_i32_0 = arith.constant 0 : i32
    return %arg0, %c0_i32 : i32, i32
  }
}

module attributes {stable_mosaic.version = 11 : i64} {
  func.func @_linear_kernel(%arg0: i32, %arg1: memref<16x32xbf16, #tpu.memory_space<vmem>>, %arg2: memref<32x64xbf16, #tpu.memory_space<vmem>>, %arg3: memref<1x64xf32, #tpu.memory_space<vmem>>, %arg4: memref<16x64xbf16, #tpu.memory_space<vmem>>) attributes {dimension_semantics = [#tpu.dimension_semantics<parallel>], iteration_bounds = array<i64: 2>, scalar_prefetch = 0 : i64, scratch_operands = 0 : i64, tpu.core_type = #tpu.core_type<tc>, window_params = [{transform_indices = @transform_0, window_bounds = array<i64: 16, 32>}, {pipeline_mode = #tpu.pipeline_mode<synchronous>, transform_indices = @transform_1, window_bounds = array<i64: 32, 64>}, {pipeline_mode = #tpu.pipeline_mode<synchronous>, transform_indices = @transform_2, window_bounds = array<i64: 1, 64>}, {transform_indices = @transform_3, window_bounds = array<i64: 16, 64>}]} {
    %c0 = arith.constant 0 : index
    %c0_0 = arith.constant 0 : index
    %0 = vector.load %arg1[%c0, %c0_0] : memref<16x32xbf16, #tpu.memory_space<vmem>>, vector<16x32xbf16>
    %c0_1 = arith.constant 0 : index
    %c0_2 = arith.constant 0 : index
    %1 = vector.load %arg2[%c0_1, %c0_2] : memref<32x64xbf16, #tpu.memory_space<vmem>>, vector<32x64xbf16>
    %cst = arith.constant dense<0.000000e+00> : vector<16x64xf32>
    %2 = tpu.matmul %0, %1, %cst {dimension_numbers = #tpu.dot_dimension_numbers<[1], [0], [0], [1], [0, 0, 1, 1], [], []>} : vector<16x32xbf16>, vector<32x64xbf16>, vector<16x64xf32> -> vector<16x64xf32>
    %c0_3 = arith.constant 0 : index
    %c0_4 = arith.constant 0 : index
    %3 = vector.load %arg3[%c0_3, %c0_4] : memref<1x64xf32, #tpu.memory_space<vmem>>, vector<1x64xf32>
    %4 = vector.broadcast %3 : vector<1x64xf32> to vector<16x64xf32>
    %5 = arith.addf %2, %4 : vector<16x64xf32>
    %6 = arith.truncf %5 : vector<16x64xf32> to vector<16x64xbf16>
    %c0_5 = arith.constant 0 : index
    %c0_6 = arith.constant 0 : index
    %7 = vector.load %arg4[%c0_5, %c0_6] : memref<16x64xbf16, #tpu.memory_space<vmem>>, vector<16x64xbf16>
    tpu.vector_store %arg4[%c0_5, %c0_6], %6 {strides = array<i32>} : memref<16x64xbf16, #tpu.memory_space<vmem>>, vector<16x64xbf16>,
    return
  }
  func.func @transform_0(%arg0: i32) -> (i32, i32) {
    %c0_i32 = arith.constant 0 : i32
    %c0_i32_0 = arith.constant 0 : i32
    return %arg0, %c0_i32 : i32, i32
  }
  func.func @transform_1(%arg0: i32) -> (i32, i32) {
    %c0_i32 = arith.constant 0 : i32
    %c0_i32_0 = arith.constant 0 : i32
    %c0_i32_1 = arith.constant 0 : i32
    return %c0_i32, %c0_i32_0 : i32, i32
  }
  func.func @transform_2(%arg0: i32) -> (i32, i32) {
    %c0_i32 = arith.constant 0 : i32
    %c0_i32_0 = arith.constant 0 : i32
    %c0_i32_1 = arith.constant 0 : i32
    return %c0_i32, %c0_i32_0 : i32, i32
  }
  func.func @transform_3(%arg0: i32) -> (i32, i32) {
    %c0_i32 = arith.constant 0 : i32
    %c0_i32_0 = arith.constant 0 : i32
    return %arg0, %c0_i32 : i32, i32
  }
}

module attributes {stable_mosaic.version = 11 : i64} {
  func.func @_ln_matmul_kernel(%arg0: i32, %arg1: memref<8x32xf32, #tpu.memory_space<vmem>>, %arg2: memref<1x32xf32, #tpu.memory_space<vmem>>, %arg3: memref<1x32xf32, #tpu.memory_space<vmem>>, %arg4: memref<32x64xbf16, #tpu.memory_space<vmem>>, %arg5: memref<1x64xf32, #tpu.memory_space<vmem>>, %arg6: memref<8x64xbf16, #tpu.memory_space<vmem>>) attributes {dimension_semantics = [#tpu.dimension_semantics<parallel>], iteration_bounds = array<i64: 2>, scalar_prefetch = 0 : i64, scratch_operands = 0 : i64, tpu.core_type = #tpu.core_type<tc>, window_params = [{transform_indices = @transform_0, window_bounds = array<i64: 8, 32>}, {pipeline_mode = #tpu.pipeline_mode<synchronous>, transform_indices = @transform_1, window_bounds = array<i64: 1, 32>}, {pipeline_mode = #tpu.pipeline_mode<synchronous>, transform_indices = @transform_2, window_bounds = array<i64: 1, 32>}, {pipeline_mode = #tpu.pipeline_mode<synchronous>, transform_indices = @transform_3, window_bounds = array<i64: 32, 64>}, {pipeline_mode = #tpu.pipeline_mode<synchronous>, transform_indices = @transform_4, window_bounds = array<i64: 1, 64>}, {transform_indices = @transform_5, window_bounds = array<i64: 8, 64>}]} {
    %c0 = arith.constant 0 : index
    %c0_0 = arith.constant 0 : index
    %0 = vector.load %arg1[%c0, %c0_0] : memref<8x32xf32, #tpu.memory_space<vmem>>, vector<8x32xf32>
    %c0_1 = arith.constant 0 : index
    %c0_2 = arith.constant 0 : index
    %1 = vector.load %arg2[%c0_1, %c0_2] : memref<1x32xf32, #tpu.memory_space<vmem>>, vector<1x32xf32>
    %c0_3 = arith.constant 0 : index
    %c0_4 = arith.constant 0 : index
    %2 = vector.load %arg3[%c0_3, %c0_4] : memref<1x32xf32, #tpu.memory_space<vmem>>, vector<1x32xf32>
    %cst = arith.constant dense<0.000000e+00> : vector<8xf32>
    %3 = vector.multi_reduction <add>, %0, %cst [1] : vector<8x32xf32> to vector<8xf32>
    %4 = vector.shape_cast %3 : vector<8xf32> to vector<8x1xf32>
    %cst_5 = arith.constant 3.200000e+01 : f32
    %5 = vector.broadcast %cst_5 : f32 to vector<8x1xf32>
    %6 = arith.divf %4, %5 : vector<8x1xf32>
    %7 = vector.broadcast %6 : vector<8x1xf32> to vector<8x32xf32>
    %8 = arith.subf %0, %7 : vector<8x32xf32>
    %9 = arith.mulf %8, %8 : vector<8x32xf32>
    %cst_6 = arith.constant dense<0.000000e+00> : vector<8xf32>
    %10 = vector.multi_reduction <add>, %9, %cst_6 [1] : vector<8x32xf32> to vector<8xf32>
    %11 = vector.shape_cast %10 : vector<8xf32> to vector<8x1xf32>
    %cst_7 = arith.constant 3.200000e+01 : f32
    %12 = vector.broadcast %cst_7 : f32 to vector<8x1xf32>
    %13 = arith.divf %11, %12 : vector<8x1xf32>
    %14 = vector.broadcast %6 : vector<8x1xf32> to vector<8x32xf32>
    %15 = arith.subf %0, %14 : vector<8x32xf32>
    %cst_8 = arith.constant 9.99999997E-7 : f32
    %16 = vector.broadcast %cst_8 : f32 to vector<8x1xf32>
    %17 = arith.addf %13, %16 : vector<8x1xf32>
    %18 = math.rsqrt %17 : vector<8x1xf32>
    %19 = vector.broadcast %18 : vector<8x1xf32> to vector<8x32xf32>
    %20 = arith.mulf %15, %19 : vector<8x32xf32>
    %21 = vector.broadcast %1 : vector<1x32xf32> to vector<8x32xf32>
    %22 = arith.mulf %20, %21 : vector<8x32xf32>
    %23 = vector.broadcast %2 : vector<1x32xf32> to vector<8x32xf32>
    %24 = arith.addf %22, %23 : vector<8x32xf32>
    %25 = arith.truncf %24 : vector<8x32xf32> to vector<8x32xbf16>
    %c0_9 = arith.constant 0 : index
    %c0_10 = arith.constant 0 : index
    %26 = vector.load %arg4[%c0_9, %c0_10] : memref<32x64xbf16, #tpu.memory_space<vmem>>, vector<32x64xbf16>
    %cst_11 = arith.constant dense<0.000000e+00> : vector<8x64xf32>
    %27 = tpu.matmul %25, %26, %cst_11 {dimension_numbers = #tpu.dot_dimension_numbers<[1], [0], [0], [1], [0, 0, 1, 1], [], []>} : vector<8x32xbf16>, vector<32x64xbf16>, vector<8x64xf32> -> vector<8x64xf32>
    %c0_12 = arith.constant 0 : index
    %c0_13 = arith.constant 0 : index
    %28 = vector.load %arg5[%c0_12, %c0_13] : memref<1x64xf32, #tpu.memory_space<vmem>>, vector<1x64xf32>
    %29 = vector.broadcast %28 : vector<1x64xf32> to vector<8x64xf32>
    %30 = arith.addf %27, %29 : vector<8x64xf32>
    %cst_14 = arith.constant 0.000000e+00 : f32
    %31 = vector.broadcast %cst_14 : f32 to vector<8x64xf32>
    %32 = arith.maximumf %30, %31 : vector<8x64xf32>
    %33 = arith.truncf %32 : vector<8x64xf32> to vector<8x64xbf16>
    %c0_15 = arith.constant 0 : index
    %c0_16 = arith.constant 0 : index
    %34 = vector.load %arg6[%c0_15, %c0_16] : memref<8x64xbf16, #tpu.memory_space<vmem>>, vector<8x64xbf16>
    tpu.vector_store %arg6[%c0_15, %c0_16], %33 {strides = array<i32>} : memref<8x64xbf16, #tpu.memory_space<vmem>>, vector<8x64xbf16>,
    return
  }
  func.func @transform_0(%arg0: i32) -> (i32, i32) {
    %c0_i32 = arith.constant 0 : i32
    %c0_i32_0 = arith.constant 0 : i32
    return %arg0, %c0_i32 : i32, i32
  }
  func.func @transform_1(%arg0: i32) -> (i32, i32) {
    %c0_i32 = arith.constant 0 : i32
    %c0_i32_0 = arith.constant 0 : i32
    %c0_i32_1 = arith.constant 0 : i32
    return %c0_i32, %c0_i32_0 : i32, i32
  }
  func.func @transform_2(%arg0: i32) -> (i32, i32) {
    %c0_i32 = arith.constant 0 : i32
    %c0_i32_0 = arith.constant 0 : i32
    %c0_i32_1 = arith.constant 0 : i32
    return %c0_i32, %c0_i32_0 : i32, i32
  }
  func.func @transform_3(%arg0: i32) -> (i32, i32) {
    %c0_i32 = arith.constant 0 : i32
    %c0_i32_0 = arith.constant 0 : i32
    %c0_i32_1 = arith.constant 0 : i32
    return %c0_i32, %c0_i32_0 : i32, i32
  }
  func.func @transform_4(%arg0: i32) -> (i32, i32) {
    %c0_i32 = arith.constant 0 : i32
    %c0_i32_0 = arith.constant 0 : i32
    %c0_i32_1 = arith.constant 0 : i32
    return %c0_i32, %c0_i32_0 : i32, i32
  }
  func.func @transform_5(%arg0: i32) -> (i32, i32) {
    %c0_i32 = arith.constant 0 : i32
    %c0_i32_0 = arith.constant 0 : i32
    return %arg0, %c0_i32 : i32, i32
  }
}

module attributes {stable_mosaic.version = 11 : i64} {
  func.func @_attn_kernel(%arg0: i32, %arg1: i32, %arg2: memref<2xi32, #tpu.memory_space<smem>>, %arg3: memref<1x8x32xbf16, #tpu.memory_space<vmem>>, %arg4: memref<1x16x64xbf16, #tpu.memory_space<vmem>>, %arg5: memref<1x8x32xbf16, #tpu.memory_space<vmem>>) attributes {dimension_semantics = [#tpu.dimension_semantics<parallel>, #tpu.dimension_semantics<parallel>], iteration_bounds = array<i64: 2, 1>, scalar_prefetch = 1 : i64, scratch_operands = 0 : i64, tpu.core_type = #tpu.core_type<tc>, window_params = [{transform_indices = @transform_0, window_bounds = array<i64: 1, 8, 32>}, {transform_indices = @transform_1, window_bounds = array<i64: 1, 16, 64>}, {transform_indices = @transform_2, window_bounds = array<i64: 1, 8, 32>}]} {
    %0 = arith.index_cast %arg0 : i32 to index
    %1 = memref.load %arg2[%0] : memref<2xi32, #tpu.memory_space<smem>>
    %c0 = arith.constant 0 : index
    %c0_0 = arith.constant 0 : index
    %c0_1 = arith.constant 0 : index
    %2 = vector.load %arg3[%c0, %c0_0, %c0_1] : memref<1x8x32xbf16, #tpu.memory_space<vmem>>, vector<1x8x32xbf16>
    %3 = vector.shape_cast %2 : vector<1x8x32xbf16> to vector<8x32xbf16>
    %c0_2 = arith.constant 0 : index
    %c0_3 = arith.constant 0 : index
    %c0_4 = arith.constant 0 : index
    %4 = vector.load %arg4[%c0_2, %c0_3, %c0_4] : memref<1x16x64xbf16, #tpu.memory_space<vmem>>, vector<1x16x64xbf16>
    %5 = vector.shape_cast %4 : vector<1x16x64xbf16> to vector<16x64xbf16>
    %6 = tpu.iota {dimensions = array<i32: 1>} : vector<8x16xi32>
    %7 = vector.broadcast %1 : i32 to vector<8x16xi32>
    %8 = arith.cmpi sge, %6, %7 : vector<8x16xi32>
    %cst = arith.constant -1.000000e+09 : f32
    %cst_5 = arith.constant 0.000000e+00 : f32
    %9 = vector.broadcast %cst : f32 to vector<8x16xf32>
    %10 = vector.broadcast %cst_5 : f32 to vector<8x16xf32>
    %11 = arith.select %8, %9, %10 : vector<8x16xi1>, vector<8x16xf32>
    %12 = vector.extract_strided_slice %3 {offsets = [0, 0], sizes = [8, 8], strides = [1, 1]} : vector<8x32xbf16> to vector<8x8xbf16>
    %13 = vector.extract_strided_slice %5 {offsets = [0, 0], sizes = [16, 8], strides = [1, 1]} : vector<16x64xbf16> to vector<16x8xbf16>
    %14 = vector.extract_strided_slice %5 {offsets = [0, 32], sizes = [16, 8], strides = [1, 1]} : vector<16x64xbf16> to vector<16x8xbf16>
    %cst_6 = arith.constant dense<0.000000e+00> : vector<8x16xf32>
    %15 = tpu.matmul %12, %13, %cst_6 {dimension_numbers = #tpu.dot_dimension_numbers<[1], [1], [0], [0], [0, 0, 1, 0], [], []>} : vector<8x8xbf16>, vector<16x8xbf16>, vector<8x16xf32> -> vector<8x16xf32>
    %cst_7 = arith.constant 0.353553385 : f32
    %16 = vector.broadcast %cst_7 : f32 to vector<8x16xf32>
    %17 = arith.mulf %15, %16 : vector<8x16xf32>
    %18 = arith.addf %17, %11 : vector<8x16xf32>
    %cst_8 = arith.constant dense<0xFF800000> : vector<8xf32>
    %19 = vector.multi_reduction <maximumf>, %18, %cst_8 [1] : vector<8x16xf32> to vector<8xf32>
    %20 = vector.shape_cast %19 : vector<8xf32> to vector<8x1xf32>
    %21 = vector.broadcast %20 : vector<8x1xf32> to vector<8x16xf32>
    %22 = arith.subf %18, %21 : vector<8x16xf32>
    %23 = math.exp %22 : vector<8x16xf32>
    %cst_9 = arith.constant dense<0.000000e+00> : vector<8xf32>
    %24 = vector.multi_reduction <add>, %23, %cst_9 [1] : vector<8x16xf32> to vector<8xf32>
    %25 = vector.shape_cast %24 : vector<8xf32> to vector<8x1xf32>
    %26 = tpu.reciprocal %25 : vector<8x1xf32> -> vector<8x1xf32>
    %27 = vector.broadcast %26 : vector<8x1xf32> to vector<8x16xf32>
    %28 = arith.mulf %23, %27 : vector<8x16xf32>
    %29 = arith.truncf %28 : vector<8x16xf32> to vector<8x16xbf16>
    %cst_10 = arith.constant dense<0.000000e+00> : vector<8x8xf32>
    %30 = tpu.matmul %29, %14, %cst_10 {dimension_numbers = #tpu.dot_dimension_numbers<[1], [0], [0], [1], [0, 0, 1, 1], [], []>} : vector<8x16xbf16>, vector<16x8xbf16>, vector<8x8xf32> -> vector<8x8xf32>
    %31 = vector.extract_strided_slice %3 {offsets = [0, 8], sizes = [8, 8], strides = [1, 1]} : vector<8x32xbf16> to vector<8x8xbf16>
    %32 = vector.extract_strided_slice %5 {offsets = [0, 8], sizes = [16, 8], strides = [1, 1]} : vector<16x64xbf16> to vector<16x8xbf16>
    %33 = vector.extract_strided_slice %5 {offsets = [0, 40], sizes = [16, 8], strides = [1, 1]} : vector<16x64xbf16> to vector<16x8xbf16>
    %cst_11 = arith.constant dense<0.000000e+00> : vector<8x16xf32>
    %34 = tpu.matmul %31, %32, %cst_11 {dimension_numbers = #tpu.dot_dimension_numbers<[1], [1], [0], [0], [0, 0, 1, 0], [], []>} : vector<8x8xbf16>, vector<16x8xbf16>, vector<8x16xf32> -> vector<8x16xf32>
    %cst_12 = arith.constant 0.353553385 : f32
    %35 = vector.broadcast %cst_12 : f32 to vector<8x16xf32>
    %36 = arith.mulf %34, %35 : vector<8x16xf32>
    %37 = arith.addf %36, %11 : vector<8x16xf32>
    %cst_13 = arith.constant dense<0xFF800000> : vector<8xf32>
    %38 = vector.multi_reduction <maximumf>, %37, %cst_13 [1] : vector<8x16xf32> to vector<8xf32>
    %39 = vector.shape_cast %38 : vector<8xf32> to vector<8x1xf32>
    %40 = vector.broadcast %39 : vector<8x1xf32> to vector<8x16xf32>
    %41 = arith.subf %37, %40 : vector<8x16xf32>
    %42 = math.exp %41 : vector<8x16xf32>
    %cst_14 = arith.constant dense<0.000000e+00> : vector<8xf32>
    %43 = vector.multi_reduction <add>, %42, %cst_14 [1] : vector<8x16xf32> to vector<8xf32>
    %44 = vector.shape_cast %43 : vector<8xf32> to vector<8x1xf32>
    %45 = tpu.reciprocal %44 : vector<8x1xf32> -> vector<8x1xf32>
    %46 = vector.broadcast %45 : vector<8x1xf32> to vector<8x16xf32>
    %47 = arith.mulf %42, %46 : vector<8x16xf32>
    %48 = arith.truncf %47 : vector<8x16xf32> to vector<8x16xbf16>
    %cst_15 = arith.constant dense<0.000000e+00> : vector<8x8xf32>
    %49 = tpu.matmul %48, %33, %cst_15 {dimension_numbers = #tpu.dot_dimension_numbers<[1], [0], [0], [1], [0, 0, 1, 1], [], []>} : vector<8x16xbf16>, vector<16x8xbf16>, vector<8x8xf32> -> vector<8x8xf32>
    %50 = vector.extract_strided_slice %3 {offsets = [0, 16], sizes = [8, 8], strides = [1, 1]} : vector<8x32xbf16> to vector<8x8xbf16>
    %51 = vector.extract_strided_slice %5 {offsets = [0, 16], sizes = [16, 8], strides = [1, 1]} : vector<16x64xbf16> to vector<16x8xbf16>
    %52 = vector.extract_strided_slice %5 {offsets = [0, 48], sizes = [16, 8], strides = [1, 1]} : vector<16x64xbf16> to vector<16x8xbf16>
    %cst_16 = arith.constant dense<0.000000e+00> : vector<8x16xf32>
    %53 = tpu.matmul %50, %51, %cst_16 {dimension_numbers = #tpu.dot_dimension_numbers<[1], [1], [0], [0], [0, 0, 1, 0], [], []>} : vector<8x8xbf16>, vector<16x8xbf16>, vector<8x16xf32> -> vector<8x16xf32>
    %cst_17 = arith.constant 0.353553385 : f32
    %54 = vector.broadcast %cst_17 : f32 to vector<8x16xf32>
    %55 = arith.mulf %53, %54 : vector<8x16xf32>
    %56 = arith.addf %55, %11 : vector<8x16xf32>
    %cst_18 = arith.constant dense<0xFF800000> : vector<8xf32>
    %57 = vector.multi_reduction <maximumf>, %56, %cst_18 [1] : vector<8x16xf32> to vector<8xf32>
    %58 = vector.shape_cast %57 : vector<8xf32> to vector<8x1xf32>
    %59 = vector.broadcast %58 : vector<8x1xf32> to vector<8x16xf32>
    %60 = arith.subf %56, %59 : vector<8x16xf32>
    %61 = math.exp %60 : vector<8x16xf32>
    %cst_19 = arith.constant dense<0.000000e+00> : vector<8xf32>
    %62 = vector.multi_reduction <add>, %61, %cst_19 [1] : vector<8x16xf32> to vector<8xf32>
    %63 = vector.shape_cast %62 : vector<8xf32> to vector<8x1xf32>
    %64 = tpu.reciprocal %63 : vector<8x1xf32> -> vector<8x1xf32>
    %65 = vector.broadcast %64 : vector<8x1xf32> to vector<8x16xf32>
    %66 = arith.mulf %61, %65 : vector<8x16xf32>
    %67 = arith.truncf %66 : vector<8x16xf32> to vector<8x16xbf16>
    %cst_20 = arith.constant dense<0.000000e+00> : vector<8x8xf32>
    %68 = tpu.matmul %67, %52, %cst_20 {dimension_numbers = #tpu.dot_dimension_numbers<[1], [0], [0], [1], [0, 0, 1, 1], [], []>} : vector<8x16xbf16>, vector<16x8xbf16>, vector<8x8xf32> -> vector<8x8xf32>
    %69 = vector.extract_strided_slice %3 {offsets = [0, 24], sizes = [8, 8], strides = [1, 1]} : vector<8x32xbf16> to vector<8x8xbf16>
    %70 = vector.extract_strided_slice %5 {offsets = [0, 24], sizes = [16, 8], strides = [1, 1]} : vector<16x64xbf16> to vector<16x8xbf16>
    %71 = vector.extract_strided_slice %5 {offsets = [0, 56], sizes = [16, 8], strides = [1, 1]} : vector<16x64xbf16> to vector<16x8xbf16>
    %cst_21 = arith.constant dense<0.000000e+00> : vector<8x16xf32>
    %72 = tpu.matmul %69, %70, %cst_21 {dimension_numbers = #tpu.dot_dimension_numbers<[1], [1], [0], [0], [0, 0, 1, 0], [], []>} : vector<8x8xbf16>, vector<16x8xbf16>, vector<8x16xf32> -> vector<8x16xf32>
    %cst_22 = arith.constant 0.353553385 : f32
    %73 = vector.broadcast %cst_22 : f32 to vector<8x16xf32>
    %74 = arith.mulf %72, %73 : vector<8x16xf32>
    %75 = arith.addf %74, %11 : vector<8x16xf32>
    %cst_23 = arith.constant dense<0xFF800000> : vector<8xf32>
    %76 = vector.multi_reduction <maximumf>, %75, %cst_23 [1] : vector<8x16xf32> to vector<8xf32>
    %77 = vector.shape_cast %76 : vector<8xf32> to vector<8x1xf32>
    %78 = vector.broadcast %77 : vector<8x1xf32> to vector<8x16xf32>
    %79 = arith.subf %75, %78 : vector<8x16xf32>
    %80 = math.exp %79 : vector<8x16xf32>
    %cst_24 = arith.constant dense<0.000000e+00> : vector<8xf32>
    %81 = vector.multi_reduction <add>, %80, %cst_24 [1] : vector<8x16xf32> to vector<8xf32>
    %82 = vector.shape_cast %81 : vector<8xf32> to vector<8x1xf32>
    %83 = tpu.reciprocal %82 : vector<8x1xf32> -> vector<8x1xf32>
    %84 = vector.broadcast %83 : vector<8x1xf32> to vector<8x16xf32>
    %85 = arith.mulf %80, %84 : vector<8x16xf32>
    %86 = arith.truncf %85 : vector<8x16xf32> to vector<8x16xbf16>
    %cst_25 = arith.constant dense<0.000000e+00> : vector<8x8xf32>
    %87 = tpu.matmul %86, %71, %cst_25 {dimension_numbers = #tpu.dot_dimension_numbers<[1], [0], [0], [1], [0, 0, 1, 1], [], []>} : vector<8x16xbf16>, vector<16x8xbf16>, vector<8x8xf32> -> vector<8x8xf32>
    %88 = tpu.concatenate %30, %49, %68, %87 in 1 : vector<8x8xf32>, vector<8x8xf32>, vector<8x8xf32>, vector<8x8xf32> -> vector<8x32xf32>
    %89 = arith.truncf %88 : vector<8x32xf32> to vector<8x32xbf16>
    %c0_26 = arith.constant 0 : index
    %c0_27 = arith.constant 0 : index
    %c0_28 = arith.constant 0 : index
    %90 = vector.load %arg5[%c0_26, %c0_27, %c0_28] : memref<1x8x32xbf16, #tpu.memory_space<vmem>>, vector<1x8x32xbf16>
    %91 = vector.shape_cast %90 : vector<1x8x32xbf16> to vector<8x32xbf16>
    %92 = vector.shape_cast %89 : vector<8x32xbf16> to vector<1x8x32xbf16>
    tpu.vector_store %arg5[%c0_26, %c0_27, %c0_28], %92 {strides = array<i32>} : memref<1x8x32xbf16, #tpu.memory_space<vmem>>, vector<1x8x32xbf16>,
    return
  }
  func.func @transform_0(%arg0: i32, %arg1: i32, %arg2: memref<2xi32, #tpu.memory_space<smem>>) -> (i32, i32, i32) {
    %c0_i32 = arith.constant 0 : i32
    %c0_i32_0 = arith.constant 0 : i32
    return %arg0, %arg1, %c0_i32 : i32, i32, i32
  }
  func.func @transform_1(%arg0: i32, %arg1: i32, %arg2: memref<2xi32, #tpu.memory_space<smem>>) -> (i32, i32, i32) {
    %c0_i32 = arith.constant 0 : i32
    %c0_i32_0 = arith.constant 0 : i32
    %c0_i32_1 = arith.constant 0 : i32
    return %arg0, %c0_i32, %c0_i32_0 : i32, i32, i32
  }
  func.func @transform_2(%arg0: i32, %arg1: i32, %arg2: memref<2xi32, #tpu.memory_space<smem>>) -> (i32, i32, i32) {
    %c0_i32 = arith.constant 0 : i32
    %c0_i32_0 = arith.constant 0 : i32
    return %arg0, %arg1, %c0_i32 : i32, i32, i32
  }
}

module attributes {stable_mosaic.version = 11 : i64} {
  func.func @_matmul_residual_kernel(%arg0: i32, %arg1: memref<8x64xbf16, #tpu.memory_space<vmem>>, %arg2: memref<64x32xbf16, #tpu.memory_space<vmem>>, %arg3: memref<1x32xf32, #tpu.memory_space<vmem>>, %arg4: memref<8x32xf32, #tpu.memory_space<vmem>>, %arg5: memref<8x32xf32, #tpu.memory_space<vmem>>) attributes {dimension_semantics = [#tpu.dimension_semantics<parallel>], iteration_bounds = array<i64: 2>, scalar_prefetch = 0 : i64, scratch_operands = 0 : i64, tpu.core_type = #tpu.core_type<tc>, window_params = [{transform_indices = @transform_0, window_bounds = array<i64: 8, 64>}, {pipeline_mode = #tpu.pipeline_mode<synchronous>, transform_indices = @transform_1, window_bounds = array<i64: 64, 32>}, {pipeline_mode = #tpu.pipeline_mode<synchronous>, transform_indices = @transform_2, window_bounds = array<i64: 1, 32>}, {transform_indices = @transform_3, window_bounds = array<i64: 8, 32>}, {transform_indices = @transform_4, window_bounds = array<i64: 8, 32>}]} {
    %c0 = arith.constant 0 : index
    %c0_0 = arith.constant 0 : index
    %0 = vector.load %arg1[%c0, %c0_0] : memref<8x64xbf16, #tpu.memory_space<vmem>>, vector<8x64xbf16>
    %c0_1 = arith.constant 0 : index
    %c0_2 = arith.constant 0 : index
    %1 = vector.load %arg2[%c0_1, %c0_2] : memref<64x32xbf16, #tpu.memory_space<vmem>>, vector<64x32xbf16>
    %cst = arith.constant dense<0.000000e+00> : vector<8x32xf32>
    %2 = tpu.matmul %0, %1, %cst {dimension_numbers = #tpu.dot_dimension_numbers<[1], [0], [0], [1], [0, 0, 1, 1], [], []>} : vector<8x64xbf16>, vector<64x32xbf16>, vector<8x32xf32> -> vector<8x32xf32>
    %c0_3 = arith.constant 0 : index
    %c0_4 = arith.constant 0 : index
    %3 = vector.load %arg3[%c0_3, %c0_4] : memref<1x32xf32, #tpu.memory_space<vmem>>, vector<1x32xf32>
    %4 = vector.broadcast %3 : vector<1x32xf32> to vector<8x32xf32>
    %5 = arith.addf %2, %4 : vector<8x32xf32>
    %c0_5 = arith.constant 0 : index
    %c0_6 = arith.constant 0 : index
    %6 = vector.load %arg4[%c0_5, %c0_6] : memref<8x32xf32, #tpu.memory_space<vmem>>, vector<8x32xf32>
    %7 = arith.addf %5, %6 : vector<8x32xf32>
    %c0_7 = arith.constant 0 : index
    %c0_8 = arith.constant 0 : index
    %8 = vector.load %arg5[%c0_7, %c0_8] : memref<8x32xf32, #tpu.memory_space<vmem>>, vector<8x32xf32>
    tpu.vector_store %arg5[%c0_7, %c0_8], %7 {strides = array<i32>} : memref<8x32xf32, #tpu.memory_space<vmem>>, vector<8x32xf32>,
    return
  }
  func.func @transform_0(%arg0: i32) -> (i32, i32) {
    %c0_i32 = arith.constant 0 : i32
    %c0_i32_0 = arith.constant 0 : i32
    return %arg0, %c0_i32 : i32, i32
  }
  func.func @transform_1(%arg0: i32) -> (i32, i32) {
    %c0_i32 = arith.constant 0 : i32
    %c0_i32_0 = arith.constant 0 : i32
    %c0_i32_1 = arith.constant 0 : i32
    return %c0_i32, %c0_i32_0 : i32, i32
  }
  func.func @transform_2(%arg0: i32) -> (i32, i32) {
    %c0_i32 = arith.constant 0 : i32
    %c0_i32_0 = arith.constant 0 : i32
    %c0_i32_1 = arith.constant 0 : i32
    return %c0_i32, %c0_i32_0 : i32, i32
  }
  func.func @transform_3(%arg0: i32) -> (i32, i32) {
    %c0_i32 = arith.constant 0 : i32
    %c0_i32_0 = arith.constant 0 : i32
    return %arg0, %c0_i32 : i32, i32
  }
  func.func @transform_4(%arg0: i32) -> (i32, i32) {
    %c0_i32 = arith.constant 0 : i32
    %c0_i32_0 = arith.constant 0 : i32
    return %arg0, %c0_i32 : i32, i32
  }
}

module attributes {stable_mosaic.version = 11 : i64} {
  func.func @_ln_matmul_kernel(%arg0: i32, %arg1: memref<8x32xf32, #tpu.memory_space<vmem>>, %arg2: memref<1x32xf32, #tpu.memory_space<vmem>>, %arg3: memref<1x32xf32, #tpu.memory_space<vmem>>, %arg4: memref<32x128xbf16, #tpu.memory_space<vmem>>, %arg5: memref<1x128xf32, #tpu.memory_space<vmem>>, %arg6: memref<8x128xf32, #tpu.memory_space<vmem>>) attributes {dimension_semantics = [#tpu.dimension_semantics<parallel>], iteration_bounds = array<i64: 2>, scalar_prefetch = 0 : i64, scratch_operands = 0 : i64, tpu.core_type = #tpu.core_type<tc>, window_params = [{transform_indices = @transform_0, window_bounds = array<i64: 8, 32>}, {pipeline_mode = #tpu.pipeline_mode<synchronous>, transform_indices = @transform_1, window_bounds = array<i64: 1, 32>}, {pipeline_mode = #tpu.pipeline_mode<synchronous>, transform_indices = @transform_2, window_bounds = array<i64: 1, 32>}, {pipeline_mode = #tpu.pipeline_mode<synchronous>, transform_indices = @transform_3, window_bounds = array<i64: 32, 128>}, {pipeline_mode = #tpu.pipeline_mode<synchronous>, transform_indices = @transform_4, window_bounds = array<i64: 1, 128>}, {transform_indices = @transform_5, window_bounds = array<i64: 8, 128>}]} {
    %c0 = arith.constant 0 : index
    %c0_0 = arith.constant 0 : index
    %0 = vector.load %arg1[%c0, %c0_0] : memref<8x32xf32, #tpu.memory_space<vmem>>, vector<8x32xf32>
    %c0_1 = arith.constant 0 : index
    %c0_2 = arith.constant 0 : index
    %1 = vector.load %arg2[%c0_1, %c0_2] : memref<1x32xf32, #tpu.memory_space<vmem>>, vector<1x32xf32>
    %c0_3 = arith.constant 0 : index
    %c0_4 = arith.constant 0 : index
    %2 = vector.load %arg3[%c0_3, %c0_4] : memref<1x32xf32, #tpu.memory_space<vmem>>, vector<1x32xf32>
    %cst = arith.constant dense<0.000000e+00> : vector<8xf32>
    %3 = vector.multi_reduction <add>, %0, %cst [1] : vector<8x32xf32> to vector<8xf32>
    %4 = vector.shape_cast %3 : vector<8xf32> to vector<8x1xf32>
    %cst_5 = arith.constant 3.200000e+01 : f32
    %5 = vector.broadcast %cst_5 : f32 to vector<8x1xf32>
    %6 = arith.divf %4, %5 : vector<8x1xf32>
    %7 = vector.broadcast %6 : vector<8x1xf32> to vector<8x32xf32>
    %8 = arith.subf %0, %7 : vector<8x32xf32>
    %9 = arith.mulf %8, %8 : vector<8x32xf32>
    %cst_6 = arith.constant dense<0.000000e+00> : vector<8xf32>
    %10 = vector.multi_reduction <add>, %9, %cst_6 [1] : vector<8x32xf32> to vector<8xf32>
    %11 = vector.shape_cast %10 : vector<8xf32> to vector<8x1xf32>
    %cst_7 = arith.constant 3.200000e+01 : f32
    %12 = vector.broadcast %cst_7 : f32 to vector<8x1xf32>
    %13 = arith.divf %11, %12 : vector<8x1xf32>
    %14 = vector.broadcast %6 : vector<8x1xf32> to vector<8x32xf32>
    %15 = arith.subf %0, %14 : vector<8x32xf32>
    %cst_8 = arith.constant 9.99999997E-7 : f32
    %16 = vector.broadcast %cst_8 : f32 to vector<8x1xf32>
    %17 = arith.addf %13, %16 : vector<8x1xf32>
    %18 = math.rsqrt %17 : vector<8x1xf32>
    %19 = vector.broadcast %18 : vector<8x1xf32> to vector<8x32xf32>
    %20 = arith.mulf %15, %19 : vector<8x32xf32>
    %21 = vector.broadcast %1 : vector<1x32xf32> to vector<8x32xf32>
    %22 = arith.mulf %20, %21 : vector<8x32xf32>
    %23 = vector.broadcast %2 : vector<1x32xf32> to vector<8x32xf32>
    %24 = arith.addf %22, %23 : vector<8x32xf32>
    %25 = arith.truncf %24 : vector<8x32xf32> to vector<8x32xbf16>
    %c0_9 = arith.constant 0 : index
    %c0_10 = arith.constant 0 : index
    %26 = vector.load %arg4[%c0_9, %c0_10] : memref<32x128xbf16, #tpu.memory_space<vmem>>, vector<32x128xbf16>
    %cst_11 = arith.constant dense<0.000000e+00> : vector<8x128xf32>
    %27 = tpu.matmul %25, %26, %cst_11 {dimension_numbers = #tpu.dot_dimension_numbers<[1], [0], [0], [1], [0, 0, 1, 1], [], []>} : vector<8x32xbf16>, vector<32x128xbf16>, vector<8x128xf32> -> vector<8x128xf32>
    %c0_12 = arith.constant 0 : index
    %c0_13 = arith.constant 0 : index
    %28 = vector.load %arg5[%c0_12, %c0_13] : memref<1x128xf32, #tpu.memory_space<vmem>>, vector<1x128xf32>
    %29 = vector.broadcast %28 : vector<1x128xf32> to vector<8x128xf32>
    %30 = arith.addf %27, %29 : vector<8x128xf32>
    %c0_14 = arith.constant 0 : index
    %c0_15 = arith.constant 0 : index
    %31 = vector.load %arg6[%c0_14, %c0_15] : memref<8x128xf32, #tpu.memory_space<vmem>>, vector<8x128xf32>
    tpu.vector_store %arg6[%c0_14, %c0_15], %30 {strides = array<i32>} : memref<8x128xf32, #tpu.memory_space<vmem>>, vector<8x128xf32>,
    return
  }
  func.func @transform_0(%arg0: i32) -> (i32, i32) {
    %c0_i32 = arith.constant 0 : i32
    %c0_i32_0 = arith.constant 0 : i32
    return %arg0, %c0_i32 : i32, i32
  }
  func.func @transform_1(%arg0: i32) -> (i32, i32) {
    %c0_i32 = arith.constant 0 : i32
    %c0_i32_0 = arith.constant 0 : i32
    %c0_i32_1 = arith.constant 0 : i32
    return %c0_i32, %c0_i32_0 : i32, i32
  }
  func.func @transform_2(%arg0: i32) -> (i32, i32) {
    %c0_i32 = arith.constant 0 : i32
    %c0_i32_0 = arith.constant 0 : i32
    %c0_i32_1 = arith.constant 0 : i32
    return %c0_i32, %c0_i32_0 : i32, i32
  }
  func.func @transform_3(%arg0: i32) -> (i32, i32) {
    %c0_i32 = arith.constant 0 : i32
    %c0_i32_0 = arith.constant 0 : i32
    %c0_i32_1 = arith.constant 0 : i32
    return %c0_i32, %c0_i32_0 : i32, i32
  }
  func.func @transform_4(%arg0: i32) -> (i32, i32) {
    %c0_i32 = arith.constant 0 : i32
    %c0_i32_0 = arith.constant 0 : i32
    %c0_i32_1 = arith.constant 0 : i32
    return %c0_i32, %c0_i32_0 : i32, i32
  }
  func.func @transform_5(%arg0: i32) -> (i32, i32) {
    %c0_i32 = arith.constant 0 : i32
    %c0_i32_0 = arith.constant 0 : i32
    return %arg0, %c0_i32 : i32, i32
  }
}

</mosaic_0001>

<llo_original>
// kernel: decoder_tx_forward.23
$region0: #{decoder_tx_forward.23}
  #allocation0 [shape = 'u32[]', space=smem, size = 0x4, offset = 0x4, fixed_abs, tag = 'smem constant byte address 0x4 - core index']
  #allocation1 [shape = 'u32[144,128]{1,0:T(1,128)}', space=vmem, size = 0x12000, scoped, tag = 'internal scratch']
  %s0 = inlined_call_operand.vmem [shape: bf16[16,32], index: 0, kind: input, shape index: {}]
  %s1 = inlined_call_operand.vmem [shape: bf16[32,32], index: 1, kind: input, shape index: {}]
  %s2 = inlined_call_operand.vmem [shape: f32[1,32], index: 2, kind: input, shape index: {}]
  %s3 = inlined_call_operand.vmem [shape: f32[16,32], index: 3, kind: input, shape index: {}]
  %s4 = inlined_call_operand.vmem [shape: f32[16,32], index: 4, kind: output, shape index: {}]
  %s5 = sld [smem:[#allocation0]]
  $region49: #{decoder_tx_forward.23} parent=0
    _
  %s7 = ssub.s32 1, %s5
  %s8 = scalar_select 0, %s7, %s5
  loop: start=0, step=1, limit=4
  $region2: #{decoder_tx_forward.23} parent=0 // loop_pre_header
    _
  $region3: #{decoder_tx_forward.23} parent=0 // loop_header
    %s10 = sphi 0, %s14
    %p11 = scmp.ge.s32.totalorder %s10, 4
    %s20 = sphi 0, %s22
    %s23 = sphi 0, %s20
    %s24 = sphi 0, %s23
    %s40 = sphi 0, %s24
    %s44 = sphi 0, %s44
    %s46 = sphi 0, %s44
    %s47 = sphi 0, %s46
    %s61 = sphi 0, %s47
    %s65 = sphi 0, %s65
    %s67 = sphi 0, %s65
    %s68 = sphi 0, %s67
    %s82 = sphi 0, %s68
    %s88 = sphi 0, %s90
    %s91 = sphi 0, %s88
    %s92 = sphi 0, %s91
    %s108 = sphi 0, %s92
    %s114 = sphi 0, %s116
    %s117 = sphi 0, %s114
    %s118 = sphi 0, %s117
    %s134 = sphi 0, %s118
  $region4: #{decoder_tx_forward.23} parent=0 // loop_header_branch
    %13 = sbr.rel (%p11) target = $region8
  $region5: #{decoder_tx_forward.23} parent=0 // loop_body
    %s15 = ssub.s32 %s10, 1
    %s16 = ssub.s32 %s10, 2
    %s17 = sadd.s32 %s10, 1
    %s18 = ssub.s32 %s10, %s17
    %p19 = scmp.eq.s32.totalorder %s18, 0
    %s21 = sadd.s32 %s20, 1
    %s22 = scalar_select %p19, %s20, %s21
    %p25 = pneg %p19
    %p26 = scmp.eq.s32.totalorder %s10, 1
    %p27 = por %p25, %p26
    %p28 = scmp.ne.s32.totalorder %s20, %s23
    %p29 = scmp.eq.s32.totalorder %s10, 0
    %p30 = por %p28, %p29
    %p31 = scmp.ne.s32.totalorder %s20, %s23
    %p32 = scmp.eq.s32.totalorder %s15, 1
    %p33 = por %p31, %p32
    %p34 = scmp.ne.s32.totalorder %s23, %s24
    %p35 = scmp.eq.s32.totalorder %s15, 0
    %p36 = por %p34, %p35
    %p37 = scmp.ne.s32.totalorder %s23, %s24
    %p38 = scmp.eq.s32.totalorder %s16, 1
    %p39 = por %p37, %p38
    %p41 = scmp.ne.s32.totalorder %s24, %s40
    %p42 = scmp.eq.s32.totalorder %s16, 0
    %p43 = por %p41, %p42
    %s45 = sadd.s32 %s44, 1
    %p48 = scmp.eq.s32.totalorder %s10, 1
    %p49 = scmp.ne.s32.totalorder %s44, %s46
    %p50 = scmp.eq.s32.totalorder %s10, 0
    %p51 = por %p49, %p50
    %p52 = scmp.ne.s32.totalorder %s44, %s46
    %p53 = scmp.eq.s32.totalorder %s15, 1
    %p54 = por %p52, %p53
    %p55 = scmp.ne.s32.totalorder %s46, %s47
    %p56 = scmp.eq.s32.totalorder %s15, 0
    %p57 = por %p55, %p56
    %p58 = scmp.ne.s32.totalorder %s46, %s47
    %p59 = scmp.eq.s32.totalorder %s16, 1
    %p60 = por %p58, %p59
    %p62 = scmp.ne.s32.totalorder %s47, %s61
    %p63 = scmp.eq.s32.totalorder %s16, 0
    %p64 = por %p62, %p63
    %s66 = sadd.s32 %s65, 1
    %p69 = scmp.eq.s32.totalorder %s10, 1
    %p70 = scmp.ne.s32.totalorder %s65, %s67
    %p71 = scmp.eq.s32.totalorder %s10, 0
    %p72 = por %p70, %p71
    %p73 = scmp.ne.s32.totalorder %s65, %s67
    %p74 = scmp.eq.s32.totalorder %s15, 1
    %p75 = por %p73, %p74
    %p76 = scmp.ne.s32.totalorder %s67, %s68
    %p77 = scmp.eq.s32.totalorder %s15, 0
    %p78 = por %p76, %p77
    %p79 = scmp.ne.s32.totalorder %s67, %s68
    %p80 = scmp.eq.s32.totalorder %s16, 1
    %p81 = por %p79, %p80
    %p83 = scmp.ne.s32.totalorder %s68, %s82
    %p84 = scmp.eq.s32.totalorder %s16, 0
    %p85 = por %p83, %p84
    %s86 = ssub.s32 %s10, %s17
    %p87 = scmp.eq.s32.totalorder %s86, 0
    %s89 = sadd.s32 %s88, 1
    %s90 = scalar_select %p87, %s88, %s89
    %p93 = pneg %p87
    %p94 = scmp.eq.s32.totalorder %s10, 1
    %p95 = por %p93, %p94
    %p96 = scmp.ne.s32.totalorder %s88, %s91
    %p97 = scmp.eq.s32.totalorder %s10, 0
    %p98 = por %p96, %p97
    %p99 = scmp.ne.s32.totalorder %s88, %s91
    %p100 = scmp.eq.s32.totalorder %s15, 1
    %p101 = por %p99, %p100
    %p102 = scmp.ne.s32.totalorder %s91, %s92
    %p103 = scmp.eq.s32.totalorder %s15, 0
    %p104 = por %p102, %p103
    %p105 = scmp.ne.s32.totalorder %s91, %s92
    %p106 = scmp.eq.s32.totalorder %s16, 1
    %p107 = por %p105, %p106
    %p109 = scmp.ne.s32.totalorder %s92, %s108
    %p110 = scmp.eq.s32.totalorder %s16, 0
    %p111 = por %p109, %p110
    %s112 = ssub.s32 %s10, %s17
    %p113 = scmp.eq.s32.totalorder %s112, 0
    %s115 = sadd.s32 %s114, 1
    %s116 = scalar_select %p113, %s114, %s115
    %p119 = pneg %p113
    %p120 = scmp.eq.s32.totalorder %s10, 1
    %p121 = por %p119, %p120
    %p122 = scmp.ne.s32.totalorder %s114, %s117
    %p123 = scmp.eq.s32.totalorder %s10, 0
    %p124 = por %p122, %p123
    %p125 = scmp.ne.s32.totalorder %s114, %s117
    %p126 = scmp.eq.s32.totalorder %s15, 1
    %p127 = por %p125, %p126
    %p128 = scmp.ne.s32.totalorder %s117, %s118
    %p129 = scmp.eq.s32.totalorder %s15, 0
    %p130 = por %p128, %p129
    %p131 = scmp.ne.s32.totalorder %s117, %s118
    %p132 = scmp.eq.s32.totalorder %s16, 1
    %p133 = por %p131, %p132
    %p135 = scmp.ne.s32.totalorder %s118, %s134
    %p136 = scmp.eq.s32.totalorder %s16, 0
    %p137 = por %p135, %p136
    %p138 = scmp.le.s32.totalorder 1, %s10
    %p139 = scmp.lt.s32.totalorder %s10, 3
    %p140 = pnand %p138, %p139
    %p141 = pneg %p140
    // Predicated region
    $region9: #{decoder_tx_forward.23} parent=5 // pred_check
      _
    $region10: #{decoder_tx_forward.23} parent=5 // pred_check_branch
      %143 = sbr.rel (%p140) target = $region12
    $region11: #{decoder_tx_forward.23} parent=5 // pred_region
      %s144 = ssub.s32 %s10, 1
      // Predicated region
      $region13: #{decoder_tx_forward.23} parent=11 // pred_check
        %p145 = pneg %p57
      $region14: #{decoder_tx_forward.23} parent=11 // pred_check_branch
        %147 = sbr.rel (%p145) target = $region16
      $region15: #{decoder_tx_forward.23} parent=11 // pred_region
        _
      $region16: #{decoder_tx_forward.23} parent=11 // pred_fallthru
        _
      // Predicated region
      $region17: #{decoder_tx_forward.23} parent=11 // pred_check
        %p148 = pneg %p78
      $region18: #{decoder_tx_forward.23} parent=11 // pred_check_branch
        %150 = sbr.rel (%p148) target = $region20
      $region19: #{decoder_tx_forward.23} parent=11 // pred_region
        _
      $region20: #{decoder_tx_forward.23} parent=11 // pred_fallthru
        _
    $region12: #{decoder_tx_forward.23} parent=5 // pred_fallthru
      _
    %p151 = scmp.lt.s32.totalorder %s10, 2
    // Predicated region
    $region21: #{decoder_tx_forward.23} parent=5 // pred_check
      %p152 = pneg %p151
    $region22: #{decoder_tx_forward.23} parent=5 // pred_check_branch
      %154 = sbr.rel (%p152) target = $region24
    $region23: #{decoder_tx_forward.23} parent=5 // pred_region
      // Predicated region
      $region25: #{decoder_tx_forward.23} parent=23 // pred_check
        %p155 = pneg %p30
      $region26: #{decoder_tx_forward.23} parent=23 // pred_check_branch
        %157 = sbr.rel (%p155) target = $region28
      $region27: #{decoder_tx_forward.23} parent=23 // pred_region
        %p158 = scmp.lt.s32.totalorder %s10, 1
        %s159 = scalar_select %p158, %s10, 1
        %s160 = smul.addr %s159, 4
        %s161 = scalar_lea.vmem %s0, %s160
      $region28: #{decoder_tx_forward.23} parent=23 // pred_fallthru
        _
      // Predicated region
      $region29: #{decoder_tx_forward.23} parent=23 // pred_check
        %p162 = pneg %p98
      $region30: #{decoder_tx_forward.23} parent=23 // pred_check_branch
        %164 = sbr.rel (%p162) target = $region32
      $region31: #{decoder_tx_forward.23} parent=23 // pred_region
        %p165 = scmp.lt.s32.totalorder %s10, 1
        %s166 = scalar_select %p165, %s10, 1
        %s167 = smul.addr %s166, 8
        %s168 = scalar_lea.vmem %s3, %s167
      $region32: #{decoder_tx_forward.23} parent=23 // pred_fallthru
        _
    $region24: #{decoder_tx_forward.23} parent=5 // pred_fallthru
      _
    %p169 = scmp.le.s32.totalorder 1, %s10
    %p170 = scmp.lt.s32.totalorder %s10, 3
    %p171 = pnand %p169, %p170
    %p172 = pneg %p171
    // Predicated region
    $region33: #{decoder_tx_forward.23} parent=5 // pred_check
      _
    $region34: #{decoder_tx_forward.23} parent=5 // pred_check_branch
      %174 = sbr.rel (%p171) target = $region36
    $region35: #{decoder_tx_forward.23} parent=5 // pred_region
      %s175 = ssub.s32 %s10, 1
      %p176 = scmp.lt.s32.totalorder %s15, 1
      %s177 = scalar_select %p176, %s15, 1
      %s178 = smul.addr %s177, 4
      %s179 = scalar_lea.vmem %s0, %s178
      %p180 = pneg %p36
      %p181 = pneg %p33
      %p182 = pneg %p57
      %p183 = pneg %p54
      %p184 = pneg %p78
      %p185 = pneg %p75
      %p186 = scmp.lt.s32.totalorder %s15, 1
      %s187 = scalar_select %p186, %s15, 1
      %s188 = smul.addr %s187, 8
      %s189 = scalar_lea.vmem %s3, %s188
      %p190 = pneg %p104
      %p191 = pneg %p101
      %p192 = pneg %p130
      %p193 = pneg %p127
      %p194 = scmp.lt.s32.totalorder %s15, 1
      %s195 = scalar_select %p194, %s15, 1
      %s196 = smul.addr %s195, 8
      %s197 = scalar_lea.vmem %s4, %s196
      %p198 = scmp.lt.s32.totalorder %s15, 1
      %s199 = scalar_select %p198, %s15, 1
      %s200 = smul.addr %s199, 4
      %s201 = scalar_lea.vmem %s0, %s200
      %p202 = scmp.lt.s32.totalorder %s15, 1
      %s203 = scalar_select %p202, %s15, 1
      %s204 = smul.addr %s203, 8
      %s205 = scalar_lea.vmem %s3, %s204
      %p206 = scmp.lt.s32.totalorder %s15, 1
      %s207 = scalar_select %p206, %s15, 1
      %s208 = smul.addr %s207, 8
      %s209 = scalar_lea.vmem %s4, %s208
      %v211 = vld [vmem:[%s201] sm:$0xf]
      %v212 = vld [vmem:[%s1] sm:$0xf]
      %v213 = vld [vmem:[%s1 + $0x4] sm:$0xf]
      %v214 = vld [vmem:[%s1 + $0x8] sm:$0xf]
      %v215 = vld [vmem:[%s1 + $0xc] sm:$0xf]
      %v216 = vld [vmem:[%s2] sm:$0x1]
      %v218 = vlaneseq
      %v219 = vshrl.u32 %v218, 7
      %v220 = vsub.s32 0, %v219
      %v221 = vrot.slane %v216, %v220
      %v227 = vunpack.c.l.b16 %v212
      %v228 = vunpack.c.l.b16 %v213
      %v229 = vunpack.c.l.b16 %v214
      %v230 = vunpack.c.l.b16 %v215
      %v231 = vpack.c.b16 %v228, %v227
      %v232 = vpack.c.b16 %v230, %v229
      %vm235 = vcmask 261120
      %v237 = vsel %vm235, %v211, 0
      %239 = vmatprep.subr.bf16.mxu0 0
      %240 = vmatpush1.bf16.msra.mxu0 0
      %241 = vmatprep.subr.bf16.mxu0 0
      %242 = vmatpush1.bf16.msra.mxu0 0
      %243 = vmatprep.subr.bf16.mxu0 0
      %244 = vmatpush1.bf16.msra.mxu0 0
      %245 = vmatprep.subr.bf16.mxu0 0
      %246 = vmatpush1.bf16.msra.mxu0 0
      %247 = vmatprep.subr.bf16.mxu0 0
      %248 = vmatpush1.bf16.msra.mxu0 0
      %249 = vmatprep.subr.bf16.mxu0 0
      %250 = vmatpush1.bf16.msra.mxu0 0
      %251 = vmatprep.subr.bf16.mxu0 0
      %252 = vmatpush1.bf16.msra.mxu0 %v232
      %253 = vmatprep.subr.bf16.mxu0 0
      %254 = vmatpush1.bf16.msra.mxu0 %v231
      %255 = vmatprep.subr.bf16.mxu0 0
      %256 = vmatpush2.bf16.msra.mxu0 0
      %257 = vmatprep.subr.bf16.mxu0 0
      %258 = vmatpush2.bf16.msra.mxu0 0
      %259 = vmatprep.subr.bf16.mxu0 0
      %260 = vmatpush2.bf16.msra.mxu0 0
      %261 = vmatprep.subr.bf16.mxu0 0
      %262 = vmatpush2.bf16.msra.mxu0 0
      %263 = vmatprep.subr.bf16.mxu0 0
      %264 = vmatpush2.bf16.msra.mxu0 0
      %265 = vmatprep.subr.bf16.mxu0 0
      %266 = vmatpush2.bf16.msra.mxu0 0
      %267 = vmatprep.subr.bf16.mxu0 0
      %268 = vmatpush2.bf16.msra.mxu0 0
      %269 = vmatprep.subr.bf16.mxu0 0
      %270 = vmatpush2.bf16.msra.mxu0 0
      %271 = vmatprep.mubr.bf16.mxu0 0
      %272 = vmatmul.mubr.bf16.gmra.mxu0 %v237
      %v273 = vpop.f32.mrf.mxu0
      %v274 = vadd.f32 %v221, %v273
      %v275 = vpop.f32.mrf.mxu0
      %v276 = vpop.f32.mrf.mxu0
      %v277 = vpop.f32.mrf.mxu0
      %278 = vdwg.mxu0
      %v279 = vld [vmem:[%s205] sm:$0xff]
      %v280 = vadd.f32 %v274, %v279
      %281 = vst.msk [vmem:[%s209] sm:$0xff] %vm235, %v280
      %p282 = scmp.lt.s32.totalorder %s15, 1
      %s283 = scalar_select %p282, %s15, 1
      %s284 = smul.addr %s283, 8
      %s285 = scalar_lea.vmem %s4, %s284
      // Predicated region
      $region37: #{decoder_tx_forward.23} parent=35 // pred_check
        %p286 = pneg %p127
      $region38: #{decoder_tx_forward.23} parent=35 // pred_check_branch
        %288 = sbr.rel (%p286) target = $region40
      $region39: #{decoder_tx_forward.23} parent=35 // pred_region
        _
      $region40: #{decoder_tx_forward.23} parent=35 // pred_fallthru
        _
    $region36: #{decoder_tx_forward.23} parent=5 // pred_fallthru
      _
    %p289 = scmp.le.s32.totalorder 2, %s10
    // Predicated region
    $region41: #{decoder_tx_forward.23} parent=5 // pred_check
      %p290 = pneg %p289
    $region42: #{decoder_tx_forward.23} parent=5 // pred_check_branch
      %292 = sbr.rel (%p290) target = $region44
    $region43: #{decoder_tx_forward.23} parent=5 // pred_region
      %s293 = ssub.s32 %s10, 2
      // Predicated region
      $region45: #{decoder_tx_forward.23} parent=43 // pred_check
        %p294 = pneg %p133
      $region46: #{decoder_tx_forward.23} parent=43 // pred_check_branch
        %296 = sbr.rel (%p294) target = $region48
      $region47: #{decoder_tx_forward.23} parent=43 // pred_region
        %p297 = scmp.lt.s32.totalorder %s16, 1
        %s298 = scalar_select %p297, %s16, 1
        %s299 = smul.addr %s298, 8
        %s300 = scalar_lea.vmem %s4, %s299
      $region48: #{decoder_tx_forward.23} parent=43 // pred_fallthru
        _
    $region44: #{decoder_tx_forward.23} parent=5 // pred_fallthru
      _
  $region6: #{decoder_tx_forward.23} parent=0 // loop_footer
    %s14 = sadd.s32 1, %s10
  $region7: #{decoder_tx_forward.23} parent=0 // loop_footer_branch
    %9 = sbr.rel target = $region3
  $region8: #{decoder_tx_forward.23} parent=0 // loop_exit
    _

// kernel: decoder_tx_forward.20
$region0: #{decoder_tx_forward.20}
  #allocation0 [shape = 'u32[]', space=smem, size = 0x4, offset = 0x4, fixed_abs, tag = 'smem constant byte address 0x4 - core index']
  #allocation1 [shape = 'u32[144,128]{1,0:T(1,128)}', space=vmem, size = 0x12000, scoped, tag = 'internal scratch']
  %s0 = inlined_call_operand.vmem [shape: f32[2,8,16], index: 0, kind: input, shape index: {}]
  %s1 = inlined_call_operand.vmem [shape: bf16[16,32], index: 1, kind: input, shape index: {}]
  %s2 = inlined_call_operand.vmem [shape: f32[1,32], index: 2, kind: input, shape index: {}]
  %s3 = inlined_call_operand.vmem [shape: f32[8,32], index: 3, kind: input, shape index: {}]
  %s4 = inlined_call_operand.vmem [shape: f32[2,8,32], index: 4, kind: output, shape index: {}]
  %s5 = sld [smem:[#allocation0]]
  $region49: #{decoder_tx_forward.20} parent=0
    _
  %s7 = ssub.s32 1, %s5
  %s8 = scalar_select 0, %s7, %s5
  loop: start=0, step=1, limit=4
  $region2: #{decoder_tx_forward.20} parent=0 // loop_pre_header
    _
  $region3: #{decoder_tx_forward.20} parent=0 // loop_header
    %s10 = sphi 0, %s14
    %p11 = scmp.ge.s32.totalorder %s10, 4
    %s20 = sphi 0, %s22
    %s23 = sphi 0, %s20
    %s24 = sphi 0, %s23
    %s40 = sphi 0, %s24
    %s44 = sphi 0, %s44
    %s46 = sphi 0, %s44
    %s47 = sphi 0, %s46
    %s61 = sphi 0, %s47
    %s65 = sphi 0, %s65
    %s67 = sphi 0, %s65
    %s68 = sphi 0, %s67
    %s82 = sphi 0, %s68
    %s86 = sphi 0, %s86
    %s88 = sphi 0, %s86
    %s89 = sphi 0, %s88
    %s103 = sphi 0, %s89
    %s109 = sphi 0, %s111
    %s112 = sphi 0, %s109
    %s113 = sphi 0, %s112
    %s129 = sphi 0, %s113
  $region4: #{decoder_tx_forward.20} parent=0 // loop_header_branch
    %13 = sbr.rel (%p11) target = $region8
  $region5: #{decoder_tx_forward.20} parent=0 // loop_body
    %s15 = ssub.s32 %s10, 1
    %s16 = ssub.s32 %s10, 2
    %s17 = sadd.s32 %s10, 1
    %s18 = ssub.s32 %s10, %s17
    %p19 = scmp.eq.s32.totalorder %s18, 0
    %s21 = sadd.s32 %s20, 1
    %s22 = scalar_select %p19, %s20, %s21
    %p25 = pneg %p19
    %p26 = scmp.eq.s32.totalorder %s10, 1
    %p27 = por %p25, %p26
    %p28 = scmp.ne.s32.totalorder %s20, %s23
    %p29 = scmp.eq.s32.totalorder %s10, 0
    %p30 = por %p28, %p29
    %p31 = scmp.ne.s32.totalorder %s20, %s23
    %p32 = scmp.eq.s32.totalorder %s15, 1
    %p33 = por %p31, %p32
    %p34 = scmp.ne.s32.totalorder %s23, %s24
    %p35 = scmp.eq.s32.totalorder %s15, 0
    %p36 = por %p34, %p35
    %p37 = scmp.ne.s32.totalorder %s23, %s24
    %p38 = scmp.eq.s32.totalorder %s16, 1
    %p39 = por %p37, %p38
    %p41 = scmp.ne.s32.totalorder %s24, %s40
    %p42 = scmp.eq.s32.totalorder %s16, 0
    %p43 = por %p41, %p42
    %s45 = sadd.s32 %s44, 1
    %p48 = scmp.eq.s32.totalorder %s10, 1
    %p49 = scmp.ne.s32.totalorder %s44, %s46
    %p50 = scmp.eq.s32.totalorder %s10, 0
    %p51 = por %p49, %p50
    %p52 = scmp.ne.s32.totalorder %s44, %s46
    %p53 = scmp.eq.s32.totalorder %s15, 1
    %p54 = por %p52, %p53
    %p55 = scmp.ne.s32.totalorder %s46, %s47
    %p56 = scmp.eq.s32.totalorder %s15, 0
    %p57 = por %p55, %p56
    %p58 = scmp.ne.s32.totalorder %s46, %s47
    %p59 = scmp.eq.s32.totalorder %s16, 1
    %p60 = por %p58, %p59
    %p62 = scmp.ne.s32.totalorder %s47, %s61
    %p63 = scmp.eq.s32.totalorder %s16, 0
    %p64 = por %p62, %p63
    %s66 = sadd.s32 %s65, 1
    %p69 = scmp.eq.s32.totalorder %s10, 1
    %p70 = scmp.ne.s32.totalorder %s65, %s67
    %p71 = scmp.eq.s32.totalorder %s10, 0
    %p72 = por %p70, %p71
    %p73 = scmp.ne.s32.totalorder %s65, %s67
    %p74 = scmp.eq.s32.totalorder %s15, 1
    %p75 = por %p73, %p74
    %p76 = scmp.ne.s32.totalorder %s67, %s68
    %p77 = scmp.eq.s32.totalorder %s15, 0
    %p78 = por %p76, %p77
    %p79 = scmp.ne.s32.totalorder %s67, %s68
    %p80 = scmp.eq.s32.totalorder %s16, 1
    %p81 = por %p79, %p80
    %p83 = scmp.ne.s32.totalorder %s68, %s82
    %p84 = scmp.eq.s32.totalorder %s16, 0
    %p85 = por %p83, %p84
    %s87 = sadd.s32 %s86, 1
    %p90 = scmp.eq.s32.totalorder %s10, 1
    %p91 = scmp.ne.s32.totalorder %s86, %s88
    %p92 = scmp.eq.s32.totalorder %s10, 0
    %p93 = por %p91, %p92
    %p94 = scmp.ne.s32.totalorder %s86, %s88
    %p95 = scmp.eq.s32.totalorder %s15, 1
    %p96 = por %p94, %p95
    %p97 = scmp.ne.s32.totalorder %s88, %s89
    %p98 = scmp.eq.s32.totalorder %s15, 0
    %p99 = por %p97, %p98
    %p100 = scmp.ne.s32.totalorder %s88, %s89
    %p101 = scmp.eq.s32.totalorder %s16, 1
    %p102 = por %p100, %p101
    %p104 = scmp.ne.s32.totalorder %s89, %s103
    %p105 = scmp.eq.s32.totalorder %s16, 0
    %p106 = por %p104, %p105
    %s107 = ssub.s32 %s10, %s17
    %p108 = scmp.eq.s32.totalorder %s107, 0
    %s110 = sadd.s32 %s109, 1
    %s111 = scalar_select %p108, %s109, %s110
    %p114 = pneg %p108
    %p115 = scmp.eq.s32.totalorder %s10, 1
    %p116 = por %p114, %p115
    %p117 = scmp.ne.s32.totalorder %s109, %s112
    %p118 = scmp.eq.s32.totalorder %s10, 0
    %p119 = por %p117, %p118
    %p120 = scmp.ne.s32.totalorder %s109, %s112
    %p121 = scmp.eq.s32.totalorder %s15, 1
    %p122 = por %p120, %p121
    %p123 = scmp.ne.s32.totalorder %s112, %s113
    %p124 = scmp.eq.s32.totalorder %s15, 0
    %p125 = por %p123, %p124
    %p126 = scmp.ne.s32.totalorder %s112, %s113
    %p127 = scmp.eq.s32.totalorder %s16, 1
    %p128 = por %p126, %p127
    %p130 = scmp.ne.s32.totalorder %s113, %s129
    %p131 = scmp.eq.s32.totalorder %s16, 0
    %p132 = por %p130, %p131
    %p133 = scmp.le.s32.totalorder 1, %s10
    %p134 = scmp.lt.s32.totalorder %s10, 3
    %p135 = pnand %p133, %p134
    %p136 = pneg %p135
    // Predicated region
    $region9: #{decoder_tx_forward.20} parent=5 // pred_check
      _
    $region10: #{decoder_tx_forward.20} parent=5 // pred_check_branch
      %138 = sbr.rel (%p135) target = $region12
    $region11: #{decoder_tx_forward.20} parent=5 // pred_region
      %s139 = ssub.s32 %s10, 1
      // Predicated region
      $region13: #{decoder_tx_forward.20} parent=11 // pred_check
        %p140 = pneg %p57
      $region14: #{decoder_tx_forward.20} parent=11 // pred_check_branch
        %142 = sbr.rel (%p140) target = $region16
      $region15: #{decoder_tx_forward.20} parent=11 // pred_region
        _
      $region16: #{decoder_tx_forward.20} parent=11 // pred_fallthru
        _
      // Predicated region
      $region17: #{decoder_tx_forward.20} parent=11 // pred_check
        %p143 = pneg %p78
      $region18: #{decoder_tx_forward.20} parent=11 // pred_check_branch
        %145 = sbr.rel (%p143) target = $region20
      $region19: #{decoder_tx_forward.20} parent=11 // pred_region
        _
      $region20: #{decoder_tx_forward.20} parent=11 // pred_fallthru
        _
      // Predicated region
      $region21: #{decoder_tx_forward.20} parent=11 // pred_check
        %p146 = pneg %p99
      $region22: #{decoder_tx_forward.20} parent=11 // pred_check_branch
        %148 = sbr.rel (%p146) target = $region24
      $region23: #{decoder_tx_forward.20} parent=11 // pred_region
        _
      $region24: #{decoder_tx_forward.20} parent=11 // pred_fallthru
        _
    $region12: #{decoder_tx_forward.20} parent=5 // pred_fallthru
      _
    %p149 = scmp.lt.s32.totalorder %s10, 2
    // Predicated region
    $region25: #{decoder_tx_forward.20} parent=5 // pred_check
      %p150 = pneg %p149
    $region26: #{decoder_tx_forward.20} parent=5 // pred_check_branch
      %152 = sbr.rel (%p150) target = $region28
    $region27: #{decoder_tx_forward.20} parent=5 // pred_region
      // Predicated region
      $region29: #{decoder_tx_forward.20} parent=27 // pred_check
        %p153 = pneg %p30
      $region30: #{decoder_tx_forward.20} parent=27 // pred_check_branch
        %155 = sbr.rel (%p153) target = $region32
      $region31: #{decoder_tx_forward.20} parent=27 // pred_region
        %p156 = scmp.lt.s32.totalorder %s10, 1
        %s157 = scalar_select %p156, %s10, 1
        %s158 = smul.addr %s157, 8
        %s159 = scalar_lea.vmem %s0, %s158
      $region32: #{decoder_tx_forward.20} parent=27 // pred_fallthru
        _
    $region28: #{decoder_tx_forward.20} parent=5 // pred_fallthru
      _
    %p160 = scmp.le.s32.totalorder 1, %s10
    %p161 = scmp.lt.s32.totalorder %s10, 3
    %p162 = pnand %p160, %p161
    %p163 = pneg %p162
    // Predicated region
    $region33: #{decoder_tx_forward.20} parent=5 // pred_check
      _
    $region34: #{decoder_tx_forward.20} parent=5 // pred_check_branch
      %165 = sbr.rel (%p162) target = $region36
    $region35: #{decoder_tx_forward.20} parent=5 // pred_region
      %s166 = ssub.s32 %s10, 1
      %p167 = scmp.lt.s32.totalorder %s15, 1
      %s168 = scalar_select %p167, %s15, 1
      %s169 = smul.addr %s168, 8
      %s170 = scalar_lea.vmem %s0, %s169
      %p171 = pneg %p36
      %p172 = pneg %p33
      %p173 = pneg %p57
      %p174 = pneg %p54
      %p175 = pneg %p78
      %p176 = pneg %p75
      %p177 = pneg %p99
      %p178 = pneg %p96
      %p179 = pneg %p125
      %p180 = pneg %p122
      %p181 = scmp.lt.s32.totalorder %s15, 1
      %s182 = scalar_select %p181, %s15, 1
      %s183 = smul.addr %s182, 8
      %s184 = scalar_lea.vmem %s4, %s183
      %p185 = scmp.lt.s32.totalorder %s15, 1
      %s186 = scalar_select %p185, %s15, 1
      %s187 = smul.addr %s186, 8
      %s188 = scalar_lea.vmem %s0, %s187
      %p189 = scmp.lt.s32.totalorder %s15, 1
      %s190 = scalar_select %p189, %s15, 1
      %s191 = smul.addr %s190, 8
      %s192 = scalar_lea.vmem %s4, %s191
      %v194 = vld [vmem:[%s188] sm:$0xff]
      %v195 = vpack.c.bf16 %v194, %v194
      %v196 = vld [vmem:[%s1] sm:$0xf]
      %v197 = vld [vmem:[%s1 + $0x4] sm:$0xf]
      %v198 = vld [vmem:[%s2] sm:$0x1]
      %v200 = vlaneseq
      %v201 = vshrl.u32 %v200, 7
      %v202 = vsub.s32 0, %v201
      %v203 = vrot.slane %v198, %v202
      %v207 = vunpack.c.l.b16 %v196
      %v208 = vunpack.c.l.b16 %v197
      %v209 = vpack.c.b16 %v208, %v207
      %vm211 = vcmask 130048
      %v213 = vsel %vm211, %v195, 0
      %215 = vmatprep.subr.bf16.mxu0 0
      %216 = vmatpush1.bf16.msra.mxu0 0
      %217 = vmatprep.subr.bf16.mxu0 0
      %218 = vmatpush1.bf16.msra.mxu0 0
      %219 = vmatprep.subr.bf16.mxu0 0
      %220 = vmatpush1.bf16.msra.mxu0 0
      %221 = vmatprep.subr.bf16.mxu0 0
      %222 = vmatpush1.bf16.msra.mxu0 0
      %223 = vmatprep.subr.bf16.mxu0 0
      %224 = vmatpush1.bf16.msra.mxu0 0
      %225 = vmatprep.subr.bf16.mxu0 0
      %226 = vmatpush1.bf16.msra.mxu0 0
      %227 = vmatprep.subr.bf16.mxu0 0
      %228 = vmatpush1.bf16.msra.mxu0 0
      %229 = vmatprep.subr.bf16.mxu0 0
      %230 = vmatpush1.bf16.msra.mxu0 %v209
      %231 = vmatprep.subr.bf16.mxu0 0
      %232 = vmatpush2.bf16.msra.mxu0 0
      %233 = vmatprep.subr.bf16.mxu0 0
      %234 = vmatpush2.bf16.msra.mxu0 0
      %235 = vmatprep.subr.bf16.mxu0 0
      %236 = vmatpush2.bf16.msra.mxu0 0
      %237 = vmatprep.subr.bf16.mxu0 0
      %238 = vmatpush2.bf16.msra.mxu0 0
      %239 = vmatprep.subr.bf16.mxu0 0
      %240 = vmatpush2.bf16.msra.mxu0 0
      %241 = vmatprep.subr.bf16.mxu0 0
      %242 = vmatpush2.bf16.msra.mxu0 0
      %243 = vmatprep.subr.bf16.mxu0 0
      %244 = vmatpush2.bf16.msra.mxu0 0
      %245 = vmatprep.subr.bf16.mxu0 0
      %246 = vmatpush2.bf16.msra.mxu0 0
      %247 = vmatprep.mubr.bf16.mxu0 0
      %248 = vmatmul.mubr.bf16.gmra.mxu0 %v213
      %v249 = vpop.f32.mrf.mxu0
      %v250 = vadd.f32 %v203, %v249
      %v251 = vpop.f32.mrf.mxu0
      %v252 = vpop.f32.mrf.mxu0
      %v253 = vpop.f32.mrf.mxu0
      %254 = vdwg.mxu0
      %v255 = vld [vmem:[%s3] sm:$0xff]
      %v256 = vadd.f32 %v250, %v255
      %vm257 = vcmask 261120
      %258 = vst.msk [vmem:[%s192] sm:$0xff] %vm257, %v256
      %p259 = scmp.lt.s32.totalorder %s15, 1
      %s260 = scalar_select %p259, %s15, 1
      %s261 = smul.addr %s260, 8
      %s262 = scalar_lea.vmem %s4, %s261
      // Predicated region
      $region37: #{decoder_tx_forward.20} parent=35 // pred_check
        %p263 = pneg %p122
      $region38: #{decoder_tx_forward.20} parent=35 // pred_check_branch
        %265 = sbr.rel (%p263) target = $region40
      $region39: #{decoder_tx_forward.20} parent=35 // pred_region
        _
      $region40: #{decoder_tx_forward.20} parent=35 // pred_fallthru
        _
    $region36: #{decoder_tx_forward.20} parent=5 // pred_fallthru
      _
    %p266 = scmp.le.s32.totalorder 2, %s10
    // Predicated region
    $region41: #{decoder_tx_forward.20} parent=5 // pred_check
      %p267 = pneg %p266
    $region42: #{decoder_tx_forward.20} parent=5 // pred_check_branch
      %269 = sbr.rel (%p267) target = $region44
    $region43: #{decoder_tx_forward.20} parent=5 // pred_region
      %s270 = ssub.s32 %s10, 2
      // Predicated region
      $region45: #{decoder_tx_forward.20} parent=43 // pred_check
        %p271 = pneg %p128
      $region46: #{decoder_tx_forward.20} parent=43 // pred_check_branch
        %273 = sbr.rel (%p271) target = $region48
      $region47: #{decoder_tx_forward.20} parent=43 // pred_region
        %p274 = scmp.lt.s32.totalorder %s16, 1
        %s275 = scalar_select %p274, %s16, 1
        %s276 = smul.addr %s275, 8
        %s277 = scalar_lea.vmem %s4, %s276
      $region48: #{decoder_tx_forward.20} parent=43 // pred_fallthru
        _
    $region44: #{decoder_tx_forward.20} parent=5 // pred_fallthru
      _
  $region6: #{decoder_tx_forward.20} parent=0 // loop_footer
    %s14 = sadd.s32 1, %s10
  $region7: #{decoder_tx_forward.20} parent=0 // loop_footer_branch
    %9 = sbr.rel target = $region3
  $region8: #{decoder_tx_forward.20} parent=0 // loop_exit
    _

// kernel: decoder_tx_forward.21
$region0: #{decoder_tx_forward.21}
  #allocation0 [shape = 'u32[]', space=smem, size = 0x4, offset = 0x4, fixed_abs, tag = 'smem constant byte address 0x4 - core index']
  #allocation1 [shape = 'u32[144,128]{1,0:T(1,128)}', space=vmem, size = 0x12000, scoped, tag = 'internal scratch']
  %s0 = inlined_call_operand.vmem [shape: f32[16,32], index: 0, kind: input, shape index: {}]
  %s1 = inlined_call_operand.vmem [shape: f32[1,32], index: 1, kind: input, shape index: {}]
  %s2 = inlined_call_operand.vmem [shape: f32[1,32], index: 2, kind: input, shape index: {}]
  %s3 = inlined_call_operand.vmem [shape: bf16[32,96], index: 3, kind: input, shape index: {}]
  %s4 = inlined_call_operand.vmem [shape: f32[1,96], index: 4, kind: input, shape index: {}]
  %s5 = inlined_call_operand.vmem [shape: bf16[16,32], index: 5, kind: output, shape index: {0}]
  %s6 = inlined_call_operand.vmem [shape: bf16[16,64], index: 6, kind: output, shape index: {1}]
  %7 = xla_tuple %s5, %s6
  %s8 = sld [smem:[#allocation0]]
  $region61: #{decoder_tx_forward.21} parent=0
    _
  %s10 = ssub.s32 1, %s8
  %s11 = scalar_select 0, %s10, %s8
  loop: start=0, step=1, limit=4
  $region2: #{decoder_tx_forward.21} parent=0 // loop_pre_header
    _
  $region3: #{decoder_tx_forward.21} parent=0 // loop_header
    %s13 = sphi 0, %s17
    %p14 = scmp.ge.s32.totalorder %s13, 4
    %s23 = sphi 0, %s25
    %s26 = sphi 0, %s23
    %s27 = sphi 0, %s26
    %s43 = sphi 0, %s27
    %s47 = sphi 0, %s47
    %s49 = sphi 0, %s47
    %s50 = sphi 0, %s49
    %s64 = sphi 0, %s50
    %s68 = sphi 0, %s68
    %s70 = sphi 0, %s68
    %s71 = sphi 0, %s70
    %s85 = sphi 0, %s71
    %s89 = sphi 0, %s89
    %s91 = sphi 0, %s89
    %s92 = sphi 0, %s91
    %s106 = sphi 0, %s92
    %s110 = sphi 0, %s110
    %s112 = sphi 0, %s110
    %s113 = sphi 0, %s112
    %s127 = sphi 0, %s113
    %s133 = sphi 0, %s135
    %s136 = sphi 0, %s133
    %s137 = sphi 0, %s136
    %s153 = sphi 0, %s137
    %s159 = sphi 0, %s161
    %s162 = sphi 0, %s159
    %s163 = sphi 0, %s162
    %s179 = sphi 0, %s163
  $region4: #{decoder_tx_forward.21} parent=0 // loop_header_branch
    %16 = sbr.rel (%p14) target = $region8
  $region5: #{decoder_tx_forward.21} parent=0 // loop_body
    %s18 = ssub.s32 %s13, 1
    %s19 = ssub.s32 %s13, 2
    %s20 = sadd.s32 %s13, 1
    %s21 = ssub.s32 %s13, %s20
    %p22 = scmp.eq.s32.totalorder %s21, 0
    %s24 = sadd.s32 %s23, 1
    %s25 = scalar_select %p22, %s23, %s24
    %p28 = pneg %p22
    %p29 = scmp.eq.s32.totalorder %s13, 1
    %p30 = por %p28, %p29
    %p31 = scmp.ne.s32.totalorder %s23, %s26
    %p32 = scmp.eq.s32.totalorder %s13, 0
    %p33 = por %p31, %p32
    %p34 = scmp.ne.s32.totalorder %s23, %s26
    %p35 = scmp.eq.s32.totalorder %s18, 1
    %p36 = por %p34, %p35
    %p37 = scmp.ne.s32.totalorder %s26, %s27
    %p38 = scmp.eq.s32.totalorder %s18, 0
    %p39 = por %p37, %p38
    %p40 = scmp.ne.s32.totalorder %s26, %s27
    %p41 = scmp.eq.s32.totalorder %s19, 1
    %p42 = por %p40, %p41
    %p44 = scmp.ne.s32.totalorder %s27, %s43
    %p45 = scmp.eq.s32.totalorder %s19, 0
    %p46 = por %p44, %p45
    %s48 = sadd.s32 %s47, 1
    %p51 = scmp.eq.s32.totalorder %s13, 1
    %p52 = scmp.ne.s32.totalorder %s47, %s49
    %p53 = scmp.eq.s32.totalorder %s13, 0
    %p54 = por %p52, %p53
    %p55 = scmp.ne.s32.totalorder %s47, %s49
    %p56 = scmp.eq.s32.totalorder %s18, 1
    %p57 = por %p55, %p56
    %p58 = scmp.ne.s32.totalorder %s49, %s50
    %p59 = scmp.eq.s32.totalorder %s18, 0
    %p60 = por %p58, %p59
    %p61 = scmp.ne.s32.totalorder %s49, %s50
    %p62 = scmp.eq.s32.totalorder %s19, 1
    %p63 = por %p61, %p62
    %p65 = scmp.ne.s32.totalorder %s50, %s64
    %p66 = scmp.eq.s32.totalorder %s19, 0
    %p67 = por %p65, %p66
    %s69 = sadd.s32 %s68, 1
    %p72 = scmp.eq.s32.totalorder %s13, 1
    %p73 = scmp.ne.s32.totalorder %s68, %s70
    %p74 = scmp.eq.s32.totalorder %s13, 0
    %p75 = por %p73, %p74
    %p76 = scmp.ne.s32.totalorder %s68, %s70
    %p77 = scmp.eq.s32.totalorder %s18, 1
    %p78 = por %p76, %p77
    %p79 = scmp.ne.s32.totalorder %s70, %s71
    %p80 = scmp.eq.s32.totalorder %s18, 0
    %p81 = por %p79, %p80
    %p82 = scmp.ne.s32.totalorder %s70, %s71
    %p83 = scmp.eq.s32.totalorder %s19, 1
    %p84 = por %p82, %p83
    %p86 = scmp.ne.s32.totalorder %s71, %s85
    %p87 = scmp.eq.s32.totalorder %s19, 0
    %p88 = por %p86, %p87
    %s90 = sadd.s32 %s89, 1
    %p93 = scmp.eq.s32.totalorder %s13, 1
    %p94 = scmp.ne.s32.totalorder %s89, %s91
    %p95 = scmp.eq.s32.totalorder %s13, 0
    %p96 = por %p94, %p95
    %p97 = scmp.ne.s32.totalorder %s89, %s91
    %p98 = scmp.eq.s32.totalorder %s18, 1
    %p99 = por %p97, %p98
    %p100 = scmp.ne.s32.totalorder %s91, %s92
    %p101 = scmp.eq.s32.totalorder %s18, 0
    %p102 = por %p100, %p101
    %p103 = scmp.ne.s32.totalorder %s91, %s92
    %p104 = scmp.eq.s32.totalorder %s19, 1
    %p105 = por %p103, %p104
    %p107 = scmp.ne.s32.totalorder %s92, %s106
    %p108 = scmp.eq.s32.totalorder %s19, 0
    %p109 = por %p107, %p108
    %s111 = sadd.s32 %s110, 1
    %p114 = scmp.eq.s32.totalorder %s13, 1
    %p115 = scmp.ne.s32.totalorder %s110, %s112
    %p116 = scmp.eq.s32.totalorder %s13, 0
    %p117 = por %p115, %p116
    %p118 = scmp.ne.s32.totalorder %s110, %s112
    %p119 = scmp.eq.s32.totalorder %s18, 1
    %p120 = por %p118, %p119
    %p121 = scmp.ne.s32.totalorder %s112, %s113
    %p122 = scmp.eq.s32.totalorder %s18, 0
    %p123 = por %p121, %p122
    %p124 = scmp.ne.s32.totalorder %s112, %s113
    %p125 = scmp.eq.s32.totalorder %s19, 1
    %p126 = por %p124, %p125
    %p128 = scmp.ne.s32.totalorder %s113, %s127
    %p129 = scmp.eq.s32.totalorder %s19, 0
    %p130 = por %p128, %p129
    %s131 = ssub.s32 %s13, %s20
    %p132 = scmp.eq.s32.totalorder %s131, 0
    %s134 = sadd.s32 %s133, 1
    %s135 = scalar_select %p132, %s133, %s134
    %p138 = pneg %p132
    %p139 = scmp.eq.s32.totalorder %s13, 1
    %p140 = por %p138, %p139
    %p141 = scmp.ne.s32.totalorder %s133, %s136
    %p142 = scmp.eq.s32.totalorder %s13, 0
    %p143 = por %p141, %p142
    %p144 = scmp.ne.s32.totalorder %s133, %s136
    %p145 = scmp.eq.s32.totalorder %s18, 1
    %p146 = por %p144, %p145
    %p147 = scmp.ne.s32.totalorder %s136, %s137
    %p148 = scmp.eq.s32.totalorder %s18, 0
    %p149 = por %p147, %p148
    %p150 = scmp.ne.s32.totalorder %s136, %s137
    %p151 = scmp.eq.s32.totalorder %s19, 1
    %p152 = por %p150, %p151
    %p154 = scmp.ne.s32.totalorder %s137, %s153
    %p155 = scmp.eq.s32.totalorder %s19, 0
    %p156 = por %p154, %p155
    %s157 = ssub.s32 %s13, %s20
    %p158 = scmp.eq.s32.totalorder %s157, 0
    %s160 = sadd.s32 %s159, 1
    %s161 = scalar_select %p158, %s159, %s160
    %p164 = pneg %p158
    %p165 = scmp.eq.s32.totalorder %s13, 1
    %p166 = por %p164, %p165
    %p167 = scmp.ne.s32.totalorder %s159, %s162
    %p168 = scmp.eq.s32.totalorder %s13, 0
    %p169 = por %p167, %p168
    %p170 = scmp.ne.s32.totalorder %s159, %s162
    %p171 = scmp.eq.s32.totalorder %s18, 1
    %p172 = por %p170, %p171
    %p173 = scmp.ne.s32.totalorder %s162, %s163
    %p174 = scmp.eq.s32.totalorder %s18, 0
    %p175 = por %p173, %p174
    %p176 = scmp.ne.s32.totalorder %s162, %s163
    %p177 = scmp.eq.s32.totalorder %s19, 1
    %p178 = por %p176, %p177
    %p180 = scmp.ne.s32.totalorder %s163, %s179
    %p181 = scmp.eq.s32.totalorder %s19, 0
    %p182 = por %p180, %p181
    %p183 = scmp.le.s32.totalorder 1, %s13
    %p184 = scmp.lt.s32.totalorder %s13, 3
    %p185 = pnand %p183, %p184
    %p186 = pneg %p185
    // Predicated region
    $region9: #{decoder_tx_forward.21} parent=5 // pred_check
      _
    $region10: #{decoder_tx_forward.21} parent=5 // pred_check_branch
      %188 = sbr.rel (%p185) target = $region12
    $region11: #{decoder_tx_forward.21} parent=5 // pred_region
      %s189 = ssub.s32 %s13, 1
      // Predicated region
      $region13: #{decoder_tx_forward.21} parent=11 // pred_check
        %p190 = pneg %p60
      $region14: #{decoder_tx_forward.21} parent=11 // pred_check_branch
        %192 = sbr.rel (%p190) target = $region16
      $region15: #{decoder_tx_forward.21} parent=11 // pred_region
        _
      $region16: #{decoder_tx_forward.21} parent=11 // pred_fallthru
        _
      // Predicated region
      $region17: #{decoder_tx_forward.21} parent=11 // pred_check
        %p193 = pneg %p81
      $region18: #{decoder_tx_forward.21} parent=11 // pred_check_branch
        %195 = sbr.rel (%p193) target = $region20
      $region19: #{decoder_tx_forward.21} parent=11 // pred_region
        _
      $region20: #{decoder_tx_forward.21} parent=11 // pred_fallthru
        _
      // Predicated region
      $region21: #{decoder_tx_forward.21} parent=11 // pred_check
        %p196 = pneg %p102
      $region22: #{decoder_tx_forward.21} parent=11 // pred_check_branch
        %198 = sbr.rel (%p196) target = $region24
      $region23: #{decoder_tx_forward.21} parent=11 // pred_region
        _
      $region24: #{decoder_tx_forward.21} parent=11 // pred_fallthru
        _
      // Predicated region
      $region25: #{decoder_tx_forward.21} parent=11 // pred_check
        %p199 = pneg %p123
      $region26: #{decoder_tx_forward.21} parent=11 // pred_check_branch
        %201 = sbr.rel (%p199) target = $region28
      $region27: #{decoder_tx_forward.21} parent=11 // pred_region
        _
      $region28: #{decoder_tx_forward.21} parent=11 // pred_fallthru
        _
    $region12: #{decoder_tx_forward.21} parent=5 // pred_fallthru
      _
    %p202 = scmp.lt.s32.totalorder %s13, 2
    // Predicated region
    $region29: #{decoder_tx_forward.21} parent=5 // pred_check
      %p203 = pneg %p202
    $region30: #{decoder_tx_forward.21} parent=5 // pred_check_branch
      %205 = sbr.rel (%p203) target = $region32
    $region31: #{decoder_tx_forward.21} parent=5 // pred_region
      // Predicated region
      $region33: #{decoder_tx_forward.21} parent=31 // pred_check
        %p206 = pneg %p33
      $region34: #{decoder_tx_forward.21} parent=31 // pred_check_branch
        %208 = sbr.rel (%p206) target = $region36
      $region35: #{decoder_tx_forward.21} parent=31 // pred_region
        %p209 = scmp.lt.s32.totalorder %s13, 1
        %s210 = scalar_select %p209, %s13, 1
        %s211 = smul.addr %s210, 8
        %s212 = scalar_lea.vmem %s0, %s211
      $region36: #{decoder_tx_forward.21} parent=31 // pred_fallthru
        _
    $region32: #{decoder_tx_forward.21} parent=5 // pred_fallthru
      _
    %p213 = scmp.le.s32.totalorder 1, %s13
    %p214 = scmp.lt.s32.totalorder %s13, 3
    %p215 = pnand %p213, %p214
    %p216 = pneg %p215
    // Predicated region
    $region37: #{decoder_tx_forward.21} parent=5 // pred_check
      _
    $region38: #{decoder_tx_forward.21} parent=5 // pred_check_branch
      %218 = sbr.rel (%p215) target = $region40
    $region39: #{decoder_tx_forward.21} parent=5 // pred_region
      %s219 = ssub.s32 %s13, 1
      %p220 = scmp.lt.s32.totalorder %s18, 1
      %s221 = scalar_select %p220, %s18, 1
      %s222 = smul.addr %s221, 8
      %s223 = scalar_lea.vmem %s0, %s222
      %p224 = pneg %p39
      %p225 = pneg %p36
      %p226 = pneg %p60
      %p227 = pneg %p57
      %p228 = pneg %p81
      %p229 = pneg %p78
      %p230 = pneg %p102
      %p231 = pneg %p99
      %p232 = pneg %p123
      %p233 = pneg %p120
      %p234 = pneg %p149
      %p235 = pneg %p146
      %p236 = scmp.lt.s32.totalorder %s18, 1
      %s237 = scalar_select %p236, %s18, 1
      %s238 = smul.addr %s237, 4
      %s239 = scalar_lea.vmem %s5, %s238
      %p240 = pneg %p175
      %p241 = pneg %p172
      %p242 = scmp.lt.s32.totalorder %s18, 1
      %s243 = scalar_select %p242, %s18, 1
      %s244 = smul.addr %s243, 4
      %s245 = scalar_lea.vmem %s6, %s244
      %p246 = scmp.lt.s32.totalorder %s18, 1
      %s247 = scalar_select %p246, %s18, 1
      %s248 = smul.addr %s247, 8
      %s249 = scalar_lea.vmem %s0, %s248
      %p250 = scmp.lt.s32.totalorder %s18, 1
      %s251 = scalar_select %p250, %s18, 1
      %s252 = smul.addr %s251, 4
      %s253 = scalar_lea.vmem %s5, %s252
      %p254 = scmp.lt.s32.totalorder %s18, 1
      %s255 = scalar_select %p254, %s18, 1
      %s256 = smul.addr %s255, 4
      %s257 = scalar_lea.vmem %s6, %s256
      %v259 = vld [vmem:[%s249] sm:$0xff]
      %v260 = vld [vmem:[%s1] sm:$0x1]
      %v261 = vld [vmem:[%s2] sm:$0x1]
      %vm262 = vcmask 261120
      %v263 = vsel %vm262, %v259, 0.0
      %264 = vadd.xlane.f32.xlu0 %v263
      %v265 = vpop.xlane.xlu0 %264
      %v266 = vrcp.pop 32.0
      %v267 = vmul.f32 %v265, %v266
      %v268 = vsub.f32 %v259, %v267
      %v269 = vmul.f32 %v268, %v268
      %v270 = vsel %vm262, %v269, 0.0
      %271 = vadd.xlane.f32.xlu0 %v270
      %v272 = vpop.xlane.xlu0 %271
      %v273 = vmul.f32 %v272, %v266
      %v274 = vadd.f32 %v273, 1e-06
      %v275 = vrsqrt.pop %v274
      %v276 = vmul.f32 %v268, %v275
      %v278 = vlaneseq
      %v279 = vshrl.u32 %v278, 7
      %v280 = vsub.s32 0, %v279
      %v281 = vrot.slane %v260, %v280
      %v283 = vmul.f32 %v276, %v281
      %v285 = vlaneseq
      %v286 = vshrl.u32 %v285, 7
      %v287 = vsub.s32 0, %v286
      %v288 = vrot.slane %v261, %v287
      %v290 = vadd.f32 %v283, %v288
      %v291 = vpack.c.bf16 %v290, %v290
      %v292 = vld [vmem:[%s3] sm:$0xf]
      %v293 = vld [vmem:[%s3 + $0x4] sm:$0xf]
      %v294 = vld [vmem:[%s3 + $0x8] sm:$0xf]
      %v295 = vld [vmem:[%s3 + $0xc] sm:$0xf]
      %v296 = vld [vmem:[%s4] sm:$0x1]
      %v298 = vlaneseq
      %v299 = vshrl.u32 %v298, 7
      %v300 = vsub.s32 0, %v299
      %v301 = vrot.slane %v296, %v300
      %v307 = vunpack.c.l.b16 %v292
      %v308 = vunpack.c.l.b16 %v293
      %v309 = vunpack.c.l.b16 %v294
      %v310 = vunpack.c.l.b16 %v295
      %v311 = vpack.c.b16 %v308, %v307
      %v312 = vpack.c.b16 %v310, %v309
      %v316 = vsel %vm262, %v291, 0
      %318 = vmatprep.subr.bf16.mxu0 0
      %319 = vmatpush1.bf16.msra.mxu0 0
      %320 = vmatprep.subr.bf16.mxu0 0
      %321 = vmatpush1.bf16.msra.mxu0 0
      %322 = vmatprep.subr.bf16.mxu0 0
      %323 = vmatpush1.bf16.msra.mxu0 0
      %324 = vmatprep.subr.bf16.mxu0 0
      %325 = vmatpush1.bf16.msra.mxu0 0
      %326 = vmatprep.subr.bf16.mxu0 0
      %327 = vmatpush1.bf16.msra.mxu0 0
      %328 = vmatprep.subr.bf16.mxu0 0
      %329 = vmatpush1.bf16.msra.mxu0 0
      %330 = vmatprep.subr.bf16.mxu0 0
      %331 = vmatpush1.bf16.msra.mxu0 %v312
      %332 = vmatprep.subr.bf16.mxu0 0
      %333 = vmatpush1.bf16.msra.mxu0 %v311
      %334 = vmatprep.subr.bf16.mxu0 0
      %335 = vmatpush2.bf16.msra.mxu0 0
      %336 = vmatprep.subr.bf16.mxu0 0
      %337 = vmatpush2.bf16.msra.mxu0 0
      %338 = vmatprep.subr.bf16.mxu0 0
      %339 = vmatpush2.bf16.msra.mxu0 0
      %340 = vmatprep.subr.bf16.mxu0 0
      %341 = vmatpush2.bf16.msra.mxu0 0
      %342 = vmatprep.subr.bf16.mxu0 0
      %343 = vmatpush2.bf16.msra.mxu0 0
      %344 = vmatprep.subr.bf16.mxu0 0
      %345 = vmatpush2.bf16.msra.mxu0 0
      %346 = vmatprep.subr.bf16.mxu0 0
      %347 = vmatpush2.bf16.msra.mxu0 0
      %348 = vmatprep.subr.bf16.mxu0 0
      %349 = vmatpush2.bf16.msra.mxu0 0
      %350 = vmatprep.mubr.bf16.mxu0 0
      %351 = vmatmul.mubr.bf16.gmra.mxu0 %v316
      %v352 = vpop.f32.mrf.mxu0
      %v353 = vadd.f32 %v301, %v352
      %v354 = vpop.f32.mrf.mxu0
      %v355 = vpop.f32.mrf.mxu0
      %v356 = vpop.f32.mrf.mxu0
      %357 = vdwg.mxu0
      %v358 = vpack.c.bf16 %v353, %v353
      %vm359 = vcmask 257024
      %360 = vst.msk [vmem:[%s253] sm:$0xf] %vm359, %v358
      %v362 = vunpack.c.l.b16 %v358
      %v363 = vpack.c.b16 %v362, %v362
      %364 = vrot.lane.b32.xlu0 %v363, 96
      %v365 = vpop.permute.xlu0 %364
      %vm367 = vcmask 519168
      %368 = vst.msk [vmem:[%s257] sm:$0xf] %vm367, %v365
      %p369 = scmp.lt.s32.totalorder %s18, 1
      %s370 = scalar_select %p369, %s18, 1
      %s371 = smul.addr %s370, 4
      %s372 = scalar_lea.vmem %s5, %s371
      %p373 = scmp.lt.s32.totalorder %s18, 1
      %s374 = scalar_select %p373, %s18, 1
      %s375 = smul.addr %s374, 4
      %s376 = scalar_lea.vmem %s6, %s375
      // Predicated region
      $region41: #{decoder_tx_forward.21} parent=39 // pred_check
        %p377 = pneg %p146
      $region42: #{decoder_tx_forward.21} parent=39 // pred_check_branch
        %379 = sbr.rel (%p377) target = $region44
      $region43: #{decoder_tx_forward.21} parent=39 // pred_region
        _
      $region44: #{decoder_tx_forward.21} parent=39 // pred_fallthru
        _
      // Predicated region
      $region45: #{decoder_tx_forward.21} parent=39 // pred_check
        %p380 = pneg %p172
      $region46: #{decoder_tx_forward.21} parent=39 // pred_check_branch
        %382 = sbr.rel (%p380) target = $region48
      $region47: #{decoder_tx_forward.21} parent=39 // pred_region
        _
      $region48: #{decoder_tx_forward.21} parent=39 // pred_fallthru
        _
    $region40: #{decoder_tx_forward.21} parent=5 // pred_fallthru
      _
    %p383 = scmp.le.s32.totalorder 2, %s13
    // Predicated region
    $region49: #{decoder_tx_forward.21} parent=5 // pred_check
      %p384 = pneg %p383
    $region50: #{decoder_tx_forward.21} parent=5 // pred_check_branch
      %386 = sbr.rel (%p384) target = $region52
    $region51: #{decoder_tx_forward.21} parent=5 // pred_region
      %s387 = ssub.s32 %s13, 2
      // Predicated region
      $region53: #{decoder_tx_forward.21} parent=51 // pred_check
        %p388 = pneg %p152
      $region54: #{decoder_tx_forward.21} parent=51 // pred_check_branch
        %390 = sbr.rel (%p388) target = $region56
      $region55: #{decoder_tx_forward.21} parent=51 // pred_region
        %p391 = scmp.lt.s32.totalorder %s19, 1
        %s392 = scalar_select %p391, %s19, 1
        %s393 = smul.addr %s392, 4
        %s394 = scalar_lea.vmem %s5, %s393
      $region56: #{decoder_tx_forward.21} parent=51 // pred_fallthru
        _
      // Predicated region
      $region57: #{decoder_tx_forward.21} parent=51 // pred_check
        %p395 = pneg %p178
      $region58: #{decoder_tx_forward.21} parent=51 // pred_check_branch
        %397 = sbr.rel (%p395) target = $region60
      $region59: #{decoder_tx_forward.21} parent=51 // pred_region
        %p398 = scmp.lt.s32.totalorder %s19, 1
        %s399 = scalar_select %p398, %s19, 1
        %s400 = smul.addr %s399, 4
        %s401 = scalar_lea.vmem %s6, %s400
      $region60: #{decoder_tx_forward.21} parent=51 // pred_fallthru
        _
    $region52: #{decoder_tx_forward.21} parent=5 // pred_fallthru
      _
  $region6: #{decoder_tx_forward.21} parent=0 // loop_footer
    %s17 = sadd.s32 1, %s13
  $region7: #{decoder_tx_forward.21} parent=0 // loop_footer_branch
    %12 = sbr.rel target = $region3
  $region8: #{decoder_tx_forward.21} parent=0 // loop_exit
    _

// kernel: decoder_tx_forward.22
$region0: #{decoder_tx_forward.22}
  #allocation0 [shape = 'u32[]', space=smem, size = 0x4, offset = 0x4, fixed_abs, tag = 'smem constant byte address 0x4 - core index']
  #allocation1 [shape = 'u32[144,128]{1,0:T(1,128)}', space=vmem, size = 0x12000, scoped, tag = 'internal scratch']
  #allocation2 [shape = 's32[1]{0}', space=sflag, size = 0x4, scoped, tag = 'scoped memory for decoder_tx_forward.22']
  #allocation3 [shape = 'u8[512]{0}', space=smem, size = 0x200, scoped, tag = 'prefetched SMEM operand 0']
  %s0 = inlined_call_operand.vmem [shape: s32[2], index: 0, kind: input, shape index: {}]
  %s1 = inlined_call_operand.vmem [shape: bf16[2,8,32], index: 1, kind: input, shape index: {}]
  %s2 = inlined_call_operand.vmem [shape: bf16[2,8,64], index: 2, kind: input, shape index: {}]
  %s3 = inlined_call_operand.vmem [shape: bf16[2,8,32], index: 3, kind: output, shape index: {}]
  %s4 = sld [smem:[#allocation0]]
  $region41: #{decoder_tx_forward.22} parent=0
    _
  %s6 = ssub.s32 1, %s4
  %s7 = scalar_select 0, %s6, %s4
  %s8 = sshll.u32 %s0, 4
  %s9 = int_to_ptr.vmem [resolvable:$true] %s8
  %11 = dma.vmem_to_smem %s9, 16, [#allocation3], [#allocation2]
  %12 = dma.done [#allocation2], 16
  %13 = sfence
  loop: start=0, step=1, limit=4
  $region2: #{decoder_tx_forward.22} parent=0 // loop_pre_header
    _
  $region3: #{decoder_tx_forward.22} parent=0 // loop_header
    %s15 = sphi 0, %s19
    %p16 = scmp.ge.s32.totalorder %s15, 4
    %s22 = sphi 0, %s34
    %s23 = sphi 0, %s30
    %s24 = sphi 0, %s22
    %s25 = sphi 0, %s23
    %s26 = sphi 0, %s24
    %s27 = sphi 0, %s25
    %s39 = sphi 0, %s41
    %s42 = sphi 0, %s39
    %s43 = sphi 0, %s42
    %s59 = sphi 0, %s43
    %s65 = sphi 0, %s67
    %s68 = sphi 0, %s65
    %s69 = sphi 0, %s68
    %s85 = sphi 0, %s69
    %s93 = sphi 0, %s95
    %s96 = sphi 0, %s93
    %s97 = sphi 0, %s96
    %s113 = sphi 0, %s97
  $region4: #{decoder_tx_forward.22} parent=0 // loop_header_branch
    %18 = sbr.rel (%p16) target = $region8
  $region5: #{decoder_tx_forward.22} parent=0 // loop_body
    %s20 = ssub.s32 %s15, 1
    %s21 = ssub.s32 %s15, 2
    %s28 = sadd.s32 1, %s23
    %p29 = scmp.ge.s32.totalorder %s28, 1
    %s30 = scalar_select %p29, 0, %s28
    %s31 = sadd.s32 1, %s22
    %s32 = scalar_select %p29, %s31, %s22
    %p33 = scmp.ge.s32.totalorder %s32, 2
    %s34 = scalar_select %p33, 0, %s32
    %s35 = ssub.s32 %s22, %s34
    %s36 = ssub.s32 %s23, %s30
    %s37 = sor.u32 %s35, %s36
    %p38 = scmp.eq.s32.totalorder %s37, 0
    %s40 = sadd.s32 %s39, 1
    %s41 = scalar_select %p38, %s39, %s40
    %p44 = pneg %p38
    %p45 = scmp.eq.s32.totalorder %s15, 1
    %p46 = por %p44, %p45
    %p47 = scmp.ne.s32.totalorder %s39, %s42
    %p48 = scmp.eq.s32.totalorder %s15, 0
    %p49 = por %p47, %p48
    %p50 = scmp.ne.s32.totalorder %s39, %s42
    %p51 = scmp.eq.s32.totalorder %s20, 1
    %p52 = por %p50, %p51
    %p53 = scmp.ne.s32.totalorder %s42, %s43
    %p54 = scmp.eq.s32.totalorder %s20, 0
    %p55 = por %p53, %p54
    %p56 = scmp.ne.s32.totalorder %s42, %s43
    %p57 = scmp.eq.s32.totalorder %s21, 1
    %p58 = por %p56, %p57
    %p60 = scmp.ne.s32.totalorder %s43, %s59
    %p61 = scmp.eq.s32.totalorder %s21, 0
    %p62 = por %p60, %p61
    %s63 = ssub.s32 %s22, %s34
    %p64 = scmp.eq.s32.totalorder %s63, 0
    %s66 = sadd.s32 %s65, 1
    %s67 = scalar_select %p64, %s65, %s66
    %p70 = pneg %p64
    %p71 = scmp.eq.s32.totalorder %s15, 1
    %p72 = por %p70, %p71
    %p73 = scmp.ne.s32.totalorder %s65, %s68
    %p74 = scmp.eq.s32.totalorder %s15, 0
    %p75 = por %p73, %p74
    %p76 = scmp.ne.s32.totalorder %s65, %s68
    %p77 = scmp.eq.s32.totalorder %s20, 1
    %p78 = por %p76, %p77
    %p79 = scmp.ne.s32.totalorder %s68, %s69
    %p80 = scmp.eq.s32.totalorder %s20, 0
    %p81 = por %p79, %p80
    %p82 = scmp.ne.s32.totalorder %s68, %s69
    %p83 = scmp.eq.s32.totalorder %s21, 1
    %p84 = por %p82, %p83
    %p86 = scmp.ne.s32.totalorder %s69, %s85
    %p87 = scmp.eq.s32.totalorder %s21, 0
    %p88 = por %p86, %p87
    %s89 = ssub.s32 %s22, %s34
    %s90 = ssub.s32 %s23, %s30
    %s91 = sor.u32 %s89, %s90
    %p92 = scmp.eq.s32.totalorder %s91, 0
    %s94 = sadd.s32 %s93, 1
    %s95 = scalar_select %p92, %s93, %s94
    %p98 = pneg %p92
    %p99 = scmp.eq.s32.totalorder %s15, 1
    %p100 = por %p98, %p99
    %p101 = scmp.ne.s32.totalorder %s93, %s96
    %p102 = scmp.eq.s32.totalorder %s15, 0
    %p103 = por %p101, %p102
    %p104 = scmp.ne.s32.totalorder %s93, %s96
    %p105 = scmp.eq.s32.totalorder %s20, 1
    %p106 = por %p104, %p105
    %p107 = scmp.ne.s32.totalorder %s96, %s97
    %p108 = scmp.eq.s32.totalorder %s20, 0
    %p109 = por %p107, %p108
    %p110 = scmp.ne.s32.totalorder %s96, %s97
    %p111 = scmp.eq.s32.totalorder %s21, 1
    %p112 = por %p110, %p111
    %p114 = scmp.ne.s32.totalorder %s97, %s113
    %p115 = scmp.eq.s32.totalorder %s21, 0
    %p116 = por %p114, %p115
    %p117 = scmp.le.s32.totalorder 1, %s15
    %p118 = scmp.lt.s32.totalorder %s15, 3
    %p119 = pnand %p117, %p118
    %p120 = pneg %p119
    // Predicated region
    $region9: #{decoder_tx_forward.22} parent=5 // pred_check
      _
    $region10: #{decoder_tx_forward.22} parent=5 // pred_check_branch
      %122 = sbr.rel (%p119) target = $region12
    $region11: #{decoder_tx_forward.22} parent=5 // pred_region
      %s123 = ssub.s32 %s15, 1
    $region12: #{decoder_tx_forward.22} parent=5 // pred_fallthru
      _
    %p124 = scmp.lt.s32.totalorder %s15, 2
    // Predicated region
    $region13: #{decoder_tx_forward.22} parent=5 // pred_check
      %p125 = pneg %p124
    $region14: #{decoder_tx_forward.22} parent=5 // pred_check_branch
      %127 = sbr.rel (%p125) target = $region16
    $region15: #{decoder_tx_forward.22} parent=5 // pred_region
      // Predicated region
      $region17: #{decoder_tx_forward.22} parent=15 // pred_check
        %p128 = pneg %p49
      $region18: #{decoder_tx_forward.22} parent=15 // pred_check_branch
        %130 = sbr.rel (%p128) target = $region20
      $region19: #{decoder_tx_forward.22} parent=15 // pred_region
        %p131 = scmp.lt.s32.totalorder %s22, 1
        %s132 = scalar_select %p131, %s22, 1
        %p133 = scmp.lt.s32.totalorder %s23, 0
        %s134 = scalar_select %p133, %s23, 0
        %s135 = sadd.s32 %s134, %s132
        %s136 = smul.addr %s135, 4
        %s137 = scalar_lea.vmem %s1, %s136
      $region20: #{decoder_tx_forward.22} parent=15 // pred_fallthru
        _
      // Predicated region
      $region21: #{decoder_tx_forward.22} parent=15 // pred_check
        %p138 = pneg %p75
      $region22: #{decoder_tx_forward.22} parent=15 // pred_check_branch
        %140 = sbr.rel (%p138) target = $region24
      $region23: #{decoder_tx_forward.22} parent=15 // pred_region
        %p141 = scmp.lt.s32.totalorder %s22, 1
        %s142 = scalar_select %p141, %s22, 1
        %s143 = smul.addr %s142, 4
        %s144 = scalar_lea.vmem %s2, %s143
      $region24: #{decoder_tx_forward.22} parent=15 // pred_fallthru
        _
    $region16: #{decoder_tx_forward.22} parent=5 // pred_fallthru
      _
    %p145 = scmp.le.s32.totalorder 1, %s15
    %p146 = scmp.lt.s32.totalorder %s15, 3
    %p147 = pnand %p145, %p146
    %p148 = pneg %p147
    // Predicated region
    $region25: #{decoder_tx_forward.22} parent=5 // pred_check
      _
    $region26: #{decoder_tx_forward.22} parent=5 // pred_check_branch
      %150 = sbr.rel (%p147) target = $region28
    $region27: #{decoder_tx_forward.22} parent=5 // pred_region
      %s151 = ssub.s32 %s15, 1
      %p152 = scmp.lt.s32.totalorder %s24, 1
      %s153 = scalar_select %p152, %s24, 1
      %p154 = scmp.lt.s32.totalorder %s25, 0
      %s155 = scalar_select %p154, %s25, 0
      %s156 = sadd.s32 %s155, %s153
      %s157 = smul.addr %s156, 4
      %s158 = scalar_lea.vmem %s1, %s157
      %p159 = pneg %p55
      %p160 = pneg %p52
      %p161 = scmp.lt.s32.totalorder %s24, 1
      %s162 = scalar_select %p161, %s24, 1
      %s163 = smul.addr %s162, 4
      %s164 = scalar_lea.vmem %s2, %s163
      %p165 = pneg %p81
      %p166 = pneg %p78
      %p167 = pneg %p109
      %p168 = pneg %p106
      %p169 = scmp.lt.s32.totalorder %s24, 1
      %s170 = scalar_select %p169, %s24, 1
      %p171 = scmp.lt.s32.totalorder %s25, 0
      %s172 = scalar_select %p171, %s25, 0
      %s173 = sadd.s32 %s172, %s170
      %s174 = smul.addr %s173, 4
      %s175 = scalar_lea.vmem %s3, %s174
      %p176 = scmp.lt.s32.totalorder %s24, 1
      %s177 = scalar_select %p176, %s24, 1
      %p178 = scmp.lt.s32.totalorder %s25, 0
      %s179 = scalar_select %p178, %s25, 0
      %s180 = sadd.s32 %s179, %s177
      %s181 = smul.addr %s180, 4
      %s182 = scalar_lea.vmem %s1, %s181
      %p183 = scmp.lt.s32.totalorder %s24, 1
      %s184 = scalar_select %p183, %s24, 1
      %s185 = smul.addr %s184, 4
      %s186 = scalar_lea.vmem %s2, %s185
      %p187 = scmp.lt.s32.totalorder %s24, 1
      %s188 = scalar_select %p187, %s24, 1
      %p189 = scmp.lt.s32.totalorder %s25, 0
      %s190 = scalar_select %p189, %s25, 0
      %s191 = sadd.s32 %s190, %s188
      %s192 = smul.addr %s191, 4
      %s193 = scalar_lea.vmem %s3, %s192
      %s195 = sld [smem:[#allocation3 + %s24]]
      %v196 = vld [vmem:[%s182] sm:$0xf]
      %v197 = vld [vmem:[%s186] sm:$0xf]
      %v198 = vlaneseq
      %v199 = vand.u32 %v198, 127
      %v200 = vstv %s195
      %vm201 = vcmp.ge.s32.totalorder %v199, %v200
      %s202 = smul.u32 %s25, 8
      %v203 = vlaneseq
      %v204 = vshrl.u32 %v203, 7
      %v205 = vstv %s202
      %v206 = vadd.s32 %v205, %v204
      %vm207 = vcmp.gt.s32.totalorder %v199, %v206
      %vm208 = vmor %vm201, %vm207
      %v209 = vsel %vm208, -1e+09, 0.0
      %vm210 = vcmask 64512
      %v212 = vsel %vm210, %v196, 0
      %v215 = vsel %vm210, %v197, 0
      %217 = vmatprep.subr.bf16.mxu0 0
      %218 = vmatpush1.bf16.xpose.msra.mxu0 0
      %219 = vmatprep.subr.bf16.mxu0 0
      %220 = vmatpush1.bf16.xpose.msra.mxu0 0
      %221 = vmatprep.subr.bf16.mxu0 0
      %222 = vmatpush1.bf16.xpose.msra.mxu0 0
      %223 = vmatprep.subr.bf16.mxu0 0
      %224 = vmatpush1.bf16.xpose.msra.mxu0 0
      %225 = vmatprep.subr.bf16.mxu0 0
      %226 = vmatpush1.bf16.xpose.msra.mxu0 0
      %227 = vmatprep.subr.bf16.mxu0 0
      %228 = vmatpush1.bf16.xpose.msra.mxu0 0
      %229 = vmatprep.subr.bf16.mxu0 0
      %230 = vmatpush1.bf16.xpose.msra.mxu0 0
      %231 = vmatprep.subr.bf16.mxu0 0
      %232 = vmatpush1.bf16.xpose.msra.mxu0 %v215
      %233 = vmatprep.subr.bf16.mxu0 0
      %234 = vmatpush2.bf16.xpose.msra.mxu0 0
      %235 = vmatprep.subr.bf16.mxu0 0
      %236 = vmatpush2.bf16.xpose.msra.mxu0 0
      %237 = vmatprep.subr.bf16.mxu0 0
      %238 = vmatpush2.bf16.xpose.msra.mxu0 0
      %239 = vmatprep.subr.bf16.mxu0 0
      %240 = vmatpush2.bf16.xpose.msra.mxu0 0
      %241 = vmatprep.subr.bf16.mxu0 0
      %242 = vmatpush2.bf16.xpose.msra.mxu0 0
      %243 = vmatprep.subr.bf16.mxu0 0
      %244 = vmatpush2.bf16.xpose.msra.mxu0 0
      %245 = vmatprep.subr.bf16.mxu0 0
      %246 = vmatpush2.bf16.xpose.msra.mxu0 0
      %247 = vmatprep.subr.bf16.mxu0 0
      %248 = vmatpush2.bf16.xpose.msra.mxu0 0
      %249 = vmatprep.mubr.bf16.mxu0 0
      %250 = vmatmul.mubr.bf16.gmra.mxu0 %v212
      %v251 = vpop.f32.mrf.mxu0
      %v252 = vadd.f32 0.0, %v251
      %v253 = vpop.f32.mrf.mxu0
      %v254 = vpop.f32.mrf.mxu0
      %v255 = vpop.f32.mrf.mxu0
      %256 = vdwg.mxu0
      %v257 = vmul.f32 %v252, 0.35355338
      %v258 = vadd.f32 %v257, %v209
      %v259 = vsel %vm210, %v258, -inf
      %260 = vmax.xlane.f32.xlu0 %v259
      %v261 = vpop.xlane.xlu0 %260
      %v262 = vsub.f32 %v258, %v261
      %v263 = vmul.f32 %v262, 1.442695
      %v264 = vpow.pop %v263
      %v265 = vsel %vm210, %v264, 0.0
      %266 = vadd.xlane.f32.xlu0 %v265
      %v267 = vpop.xlane.xlu0 %266
      %v268 = vrcp.pop %v267
      %v269 = vmul.f32 %v264, %v268
      %v270 = vpack.c.bf16 %v269, %v269
      %v272 = vunpack.c.l.b16 %v197
      %v273 = vpack.c.b16 %v272, %v272
      %274 = vrot.lane.b32.xlu0 %v273, 96
      %v275 = vpop.permute.xlu0 %274
      %v277 = vsel %vm210, %v270, 0
      %vm279 = vcmask 1043456
      %v281 = vsel %vm279, %v275, 0
      %283 = vmatprep.subr.bf16.mxu0 0
      %284 = vmatpush1.bf16.msra.mxu0 0
      %285 = vmatprep.subr.bf16.mxu0 0
      %286 = vmatpush1.bf16.msra.mxu0 0
      %287 = vmatprep.subr.bf16.mxu0 0
      %288 = vmatpush1.bf16.msra.mxu0 0
      %289 = vmatprep.subr.bf16.mxu0 0
      %290 = vmatpush1.bf16.msra.mxu0 0
      %291 = vmatprep.subr.bf16.mxu0 0
      %292 = vmatpush1.bf16.msra.mxu0 0
      %293 = vmatprep.subr.bf16.mxu0 0
      %294 = vmatpush1.bf16.msra.mxu0 0
      %295 = vmatprep.subr.bf16.mxu0 0
      %296 = vmatpush1.bf16.msra.mxu0 0
      %297 = vmatprep.subr.bf16.mxu0 0
      %298 = vmatpush1.bf16.msra.mxu0 %v281
      %299 = vmatprep.subr.bf16.mxu0 0
      %300 = vmatpush2.bf16.msra.mxu0 0
      %301 = vmatprep.subr.bf16.mxu0 0
      %302 = vmatpush2.bf16.msra.mxu0 0
      %303 = vmatprep.subr.bf16.mxu0 0
      %304 = vmatpush2.bf16.msra.mxu0 0
      %305 = vmatprep.subr.bf16.mxu0 0
      %306 = vmatpush2.bf16.msra.mxu0 0
      %307 = vmatprep.subr.bf16.mxu0 0
      %308 = vmatpush2.bf16.msra.mxu0 0
      %309 = vmatprep.subr.bf16.mxu0 0
      %310 = vmatpush2.bf16.msra.mxu0 0
      %311 = vmatprep.subr.bf16.mxu0 0
      %312 = vmatpush2.bf16.msra.mxu0 0
      %313 = vmatprep.subr.bf16.mxu0 0
      %314 = vmatpush2.bf16.msra.mxu0 0
      %315 = vmatprep.mubr.bf16.mxu0 0
      %316 = vmatmul.mubr.bf16.gmra.mxu0 %v277
      %v317 = vpop.f32.mrf.mxu0
      %v318 = vadd.f32 0.0, %v317
      %v319 = vpop.f32.mrf.mxu0
      %v320 = vpop.f32.mrf.mxu0
      %v321 = vpop.f32.mrf.mxu0
      %322 = vdwg.mxu0
      %v324 = vunpack.c.l.b16 %v196
      %v325 = vpack.c.b16 %v324, %v324
      %326 = vrot.lane.b32.xlu0 %v325, 120
      %v327 = vpop.permute.xlu0 %326
      %328 = vrot.lane.b32.xlu0 %v273, 120
      %v329 = vpop.permute.xlu0 %328
      %v331 = vsel %vm210, %v327, 0
      %v334 = vsel %vm210, %v329, 0
      %336 = vmatprep.subr.bf16.mxu0 0
      %337 = vmatpush1.bf16.xpose.msra.mxu0 0
      %338 = vmatprep.subr.bf16.mxu0 0
      %339 = vmatpush1.bf16.xpose.msra.mxu0 0
      %340 = vmatprep.subr.bf16.mxu0 0
      %341 = vmatpush1.bf16.xpose.msra.mxu0 0
      %342 = vmatprep.subr.bf16.mxu0 0
      %343 = vmatpush1.bf16.xpose.msra.mxu0 0
      %344 = vmatprep.subr.bf16.mxu0 0
      %345 = vmatpush1.bf16.xpose.msra.mxu0 0
      %346 = vmatprep.subr.bf16.mxu0 0
      %347 = vmatpush1.bf16.xpose.msra.mxu0 0
      %348 = vmatprep.subr.bf16.mxu0 0
      %349 = vmatpush1.bf16.xpose.msra.mxu0 0
      %350 = vmatprep.subr.bf16.mxu0 0
      %351 = vmatpush1.bf16.xpose.msra.mxu0 %v334
      %352 = vmatprep.subr.bf16.mxu0 0
      %353 = vmatpush2.bf16.xpose.msra.mxu0 0
      %354 = vmatprep.subr.bf16.mxu0 0
      %355 = vmatpush2.bf16.xpose.msra.mxu0 0
      %356 = vmatprep.subr.bf16.mxu0 0
      %357 = vmatpush2.bf16.xpose.msra.mxu0 0
      %358 = vmatprep.subr.bf16.mxu0 0
      %359 = vmatpush2.bf16.xpose.msra.mxu0 0
      %360 = vmatprep.subr.bf16.mxu0 0
      %361 = vmatpush2.bf16.xpose.msra.mxu0 0
      %362 = vmatprep.subr.bf16.mxu0 0
      %363 = vmatpush2.bf16.xpose.msra.mxu0 0
      %364 = vmatprep.subr.bf16.mxu0 0
      %365 = vmatpush2.bf16.xpose.msra.mxu0 0
      %366 = vmatprep.subr.bf16.mxu0 0
      %367 = vmatpush2.bf16.xpose.msra.mxu0 0
      %368 = vmatprep.mubr.bf16.mxu0 0
      %369 = vmatmul.mubr.bf16.gmra.mxu0 %v331
      %v370 = vpop.f32.mrf.mxu0
      %v371 = vadd.f32 0.0, %v370
      %v372 = vpop.f32.mrf.mxu0
      %v373 = vpop.f32.mrf.mxu0
      %v374 = vpop.f32.mrf.mxu0
      %375 = vdwg.mxu0
      %v376 = vmul.f32 %v371, 0.35355338
      %v377 = vadd.f32 %v376, %v209
      %v378 = vsel %vm210, %v377, -inf
      %379 = vmax.xlane.f32.xlu0 %v378
      %v380 = vpop.xlane.xlu0 %379
      %v381 = vsub.f32 %v377, %v380
      %v382 = vmul.f32 %v381, 1.442695
      %v383 = vpow.pop %v382
      %v384 = vsel %vm210, %v383, 0.0
      %385 = vadd.xlane.f32.xlu0 %v384
      %v386 = vpop.xlane.xlu0 %385
      %v387 = vrcp.pop %v386
      %v388 = vmul.f32 %v383, %v387
      %v389 = vpack.c.bf16 %v388, %v388
      %390 = vrot.lane.b32.xlu0 %v273, 88
      %v391 = vpop.permute.xlu0 %390
      %v393 = vsel %vm210, %v389, 0
      %v396 = vsel %vm279, %v391, 0
      %398 = vmatprep.subr.bf16.mxu0 0
      %399 = vmatpush1.bf16.msra.mxu0 0
      %400 = vmatprep.subr.bf16.mxu0 0
      %401 = vmatpush1.bf16.msra.mxu0 0
      %402 = vmatprep.subr.bf16.mxu0 0
      %403 = vmatpush1.bf16.msra.mxu0 0
      %404 = vmatprep.subr.bf16.mxu0 0
      %405 = vmatpush1.bf16.msra.mxu0 0
      %406 = vmatprep.subr.bf16.mxu0 0
      %407 = vmatpush1.bf16.msra.mxu0 0
      %408 = vmatprep.subr.bf16.mxu0 0
      %409 = vmatpush1.bf16.msra.mxu0 0
      %410 = vmatprep.subr.bf16.mxu0 0
      %411 = vmatpush1.bf16.msra.mxu0 0
      %412 = vmatprep.subr.bf16.mxu0 0
      %413 = vmatpush1.bf16.msra.mxu0 %v396
      %414 = vmatprep.subr.bf16.mxu0 0
      %415 = vmatpush2.bf16.msra.mxu0 0
      %416 = vmatprep.subr.bf16.mxu0 0
      %417 = vmatpush2.bf16.msra.mxu0 0
      %418 = vmatprep.subr.bf16.mxu0 0
      %419 = vmatpush2.bf16.msra.mxu0 0
      %420 = vmatprep.subr.bf16.mxu0 0
      %421 = vmatpush2.bf16.msra.mxu0 0
      %422 = vmatprep.subr.bf16.mxu0 0
      %423 = vmatpush2.bf16.msra.mxu0 0
      %424 = vmatprep.subr.bf16.mxu0 0
      %425 = vmatpush2.bf16.msra.mxu0 0
      %426 = vmatprep.subr.bf16.mxu0 0
      %427 = vmatpush2.bf16.msra.mxu0 0
      %428 = vmatprep.subr.bf16.mxu0 0
      %429 = vmatpush2.bf16.msra.mxu0 0
      %430 = vmatprep.mubr.bf16.mxu0 0
      %431 = vmatmul.mubr.bf16.gmra.mxu0 %v393
      %v432 = vpop.f32.mrf.mxu0
      %v433 = vadd.f32 0.0, %v432
      %v434 = vpop.f32.mrf.mxu0
      %v435 = vpop.f32.mrf.mxu0
      %v436 = vpop.f32.mrf.mxu0
      %437 = vdwg.mxu0
      %438 = vrot.lane.b32.xlu0 %v325, 112
      %v439 = vpop.permute.xlu0 %438
      %440 = vrot.lane.b32.xlu0 %v273, 112
      %v441 = vpop.permute.xlu0 %440
      %v443 = vsel %vm210, %v439, 0
      %v446 = vsel %vm210, %v441, 0
      %448 = vmatprep.subr.bf16.mxu0 0
      %449 = vmatpush1.bf16.xpose.msra.mxu0 0
      %450 = vmatprep.subr.bf16.mxu0 0
      %451 = vmatpush1.bf16.xpose.msra.mxu0 0
      %452 = vmatprep.subr.bf16.mxu0 0
      %453 = vmatpush1.bf16.xpose.msra.mxu0 0
      %454 = vmatprep.subr.bf16.mxu0 0
      %455 = vmatpush1.bf16.xpose.msra.mxu0 0
      %456 = vmatprep.subr.bf16.mxu0 0
      %457 = vmatpush1.bf16.xpose.msra.mxu0 0
      %458 = vmatprep.subr.bf16.mxu0 0
      %459 = vmatpush1.bf16.xpose.msra.mxu0 0
      %460 = vmatprep.subr.bf16.mxu0 0
      %461 = vmatpush1.bf16.xpose.msra.mxu0 0
      %462 = vmatprep.subr.bf16.mxu0 0
      %463 = vmatpush1.bf16.xpose.msra.mxu0 %v446
      %464 = vmatprep.subr.bf16.mxu0 0
      %465 = vmatpush2.bf16.xpose.msra.mxu0 0
      %466 = vmatprep.subr.bf16.mxu0 0
      %467 = vmatpush2.bf16.xpose.msra.mxu0 0
      %468 = vmatprep.subr.bf16.mxu0 0
      %469 = vmatpush2.bf16.xpose.msra.mxu0 0
      %470 = vmatprep.subr.bf16.mxu0 0
      %471 = vmatpush2.bf16.xpose.msra.mxu0 0
      %472 = vmatprep.subr.bf16.mxu0 0
      %473 = vmatpush2.bf16.xpose.msra.mxu0 0
      %474 = vmatprep.subr.bf16.mxu0 0
      %475 = vmatpush2.bf16.xpose.msra.mxu0 0
      %476 = vmatprep.subr.bf16.mxu0 0
      %477 = vmatpush2.bf16.xpose.msra.mxu0 0
      %478 = vmatprep.subr.bf16.mxu0 0
      %479 = vmatpush2.bf16.xpose.msra.mxu0 0
      %480 = vmatprep.mubr.bf16.mxu0 0
      %481 = vmatmul.mubr.bf16.gmra.mxu0 %v443
      %v482 = vpop.f32.mrf.mxu0
      %v483 = vadd.f32 0.0, %v482
      %v484 = vpop.f32.mrf.mxu0
      %v485 = vpop.f32.mrf.mxu0
      %v486 = vpop.f32.mrf.mxu0
      %487 = vdwg.mxu0
      %v488 = vmul.f32 %v483, 0.35355338
      %v489 = vadd.f32 %v488, %v209
      %v490 = vsel %vm210, %v489, -inf
      %491 = vmax.xlane.f32.xlu0 %v490
      %v492 = vpop.xlane.xlu0 %491
      %v493 = vsub.f32 %v489, %v492
      %v494 = vmul.f32 %v493, 1.442695
      %v495 = vpow.pop %v494
      %v496 = vsel %vm210, %v495, 0.0
      %497 = vadd.xlane.f32.xlu0 %v496
      %v498 = vpop.xlane.xlu0 %497
      %v499 = vrcp.pop %v498
      %v500 = vmul.f32 %v495, %v499
      %v501 = vpack.c.bf16 %v500, %v500
      %502 = vrot.lane.b32.xlu0 %v273, 80
      %v503 = vpop.permute.xlu0 %502
      %v505 = vsel %vm210, %v501, 0
      %v508 = vsel %vm279, %v503, 0
      %510 = vmatprep.subr.bf16.mxu0 0
      %511 = vmatpush1.bf16.msra.mxu0 0
      %512 = vmatprep.subr.bf16.mxu0 0
      %513 = vmatpush1.bf16.msra.mxu0 0
      %514 = vmatprep.subr.bf16.mxu0 0
      %515 = vmatpush1.bf16.msra.mxu0 0
      %516 = vmatprep.subr.bf16.mxu0 0
      %517 = vmatpush1.bf16.msra.mxu0 0
      %518 = vmatprep.subr.bf16.mxu0 0
      %519 = vmatpush1.bf16.msra.mxu0 0
      %520 = vmatprep.subr.bf16.mxu0 0
      %521 = vmatpush1.bf16.msra.mxu0 0
      %522 = vmatprep.subr.bf16.mxu0 0
      %523 = vmatpush1.bf16.msra.mxu0 0
      %524 = vmatprep.subr.bf16.mxu0 0
      %525 = vmatpush1.bf16.msra.mxu0 %v508
      %526 = vmatprep.subr.bf16.mxu0 0
      %527 = vmatpush2.bf16.msra.mxu0 0
      %528 = vmatprep.subr.bf16.mxu0 0
      %529 = vmatpush2.bf16.msra.mxu0 0
      %530 = vmatprep.subr.bf16.mxu0 0
      %531 = vmatpush2.bf16.msra.mxu0 0
      %532 = vmatprep.subr.bf16.mxu0 0
      %533 = vmatpush2.bf16.msra.mxu0 0
      %534 = vmatprep.subr.bf16.mxu0 0
      %535 = vmatpush2.bf16.msra.mxu0 0
      %536 = vmatprep.subr.bf16.mxu0 0
      %537 = vmatpush2.bf16.msra.mxu0 0
      %538 = vmatprep.subr.bf16.mxu0 0
      %539 = vmatpush2.bf16.msra.mxu0 0
      %540 = vmatprep.subr.bf16.mxu0 0
      %541 = vmatpush2.bf16.msra.mxu0 0
      %542 = vmatprep.mubr.bf16.mxu0 0
      %543 = vmatmul.mubr.bf16.gmra.mxu0 %v505
      %v544 = vpop.f32.mrf.mxu0
      %v545 = vadd.f32 0.0, %v544
      %v546 = vpop.f32.mrf.mxu0
      %v547 = vpop.f32.mrf.mxu0
      %v548 = vpop.f32.mrf.mxu0
      %549 = vdwg.mxu0
      %550 = vrot.lane.b32.xlu0 %v325, 104
      %v551 = vpop.permute.xlu0 %550
      %552 = vrot.lane.b32.xlu0 %v273, 104
      %v553 = vpop.permute.xlu0 %552
      %v555 = vsel %vm210, %v551, 0
      %v558 = vsel %vm210, %v553, 0
      %560 = vmatprep.subr.bf16.mxu0 0
      %561 = vmatpush1.bf16.xpose.msra.mxu0 0
      %562 = vmatprep.subr.bf16.mxu0 0
      %563 = vmatpush1.bf16.xpose.msra.mxu0 0
      %564 = vmatprep.subr.bf16.mxu0 0
      %565 = vmatpush1.bf16.xpose.msra.mxu0 0
      %566 = vmatprep.subr.bf16.mxu0 0
      %567 = vmatpush1.bf16.xpose.msra.mxu0 0
      %568 = vmatprep.subr.bf16.mxu0 0
      %569 = vmatpush1.bf16.xpose.msra.mxu0 0
      %570 = vmatprep.subr.bf16.mxu0 0
      %571 = vmatpush1.bf16.xpose.msra.mxu0 0
      %572 = vmatprep.subr.bf16.mxu0 0
      %573 = vmatpush1.bf16.xpose.msra.mxu0 0
      %574 = vmatprep.subr.bf16.mxu0 0
      %575 = vmatpush1.bf16.xpose.msra.mxu0 %v558
      %576 = vmatprep.subr.bf16.mxu0 0
      %577 = vmatpush2.bf16.xpose.msra.mxu0 0
      %578 = vmatprep.subr.bf16.mxu0 0
      %579 = vmatpush2.bf16.xpose.msra.mxu0 0
      %580 = vmatprep.subr.bf16.mxu0 0
      %581 = vmatpush2.bf16.xpose.msra.mxu0 0
      %582 = vmatprep.subr.bf16.mxu0 0
      %583 = vmatpush2.bf16.xpose.msra.mxu0 0
      %584 = vmatprep.subr.bf16.mxu0 0
      %585 = vmatpush2.bf16.xpose.msra.mxu0 0
      %586 = vmatprep.subr.bf16.mxu0 0
      %587 = vmatpush2.bf16.xpose.msra.mxu0 0
      %588 = vmatprep.subr.bf16.mxu0 0
      %589 = vmatpush2.bf16.xpose.msra.mxu0 0
      %590 = vmatprep.subr.bf16.mxu0 0
      %591 = vmatpush2.bf16.xpose.msra.mxu0 0
      %592 = vmatprep.mubr.bf16.mxu0 0
      %593 = vmatmul.mubr.bf16.gmra.mxu0 %v555
      %v594 = vpop.f32.mrf.mxu0
      %v595 = vadd.f32 0.0, %v594
      %v596 = vpop.f32.mrf.mxu0
      %v597 = vpop.f32.mrf.mxu0
      %v598 = vpop.f32.mrf.mxu0
      %599 = vdwg.mxu0
      %v600 = vmul.f32 %v595, 0.35355338
      %v601 = vadd.f32 %v600, %v209
      %v602 = vsel %vm210, %v601, -inf
      %603 = vmax.xlane.f32.xlu0 %v602
      %v604 = vpop.xlane.xlu0 %603
      %v605 = vsub.f32 %v601, %v604
      %v606 = vmul.f32 %v605, 1.442695
      %v607 = vpow.pop %v606
      %v608 = vsel %vm210, %v607, 0.0
      %609 = vadd.xlane.f32.xlu0 %v608
      %v610 = vpop.xlane.xlu0 %609
      %v611 = vrcp.pop %v610
      %v612 = vmul.f32 %v607, %v611
      %v613 = vpack.c.bf16 %v612, %v612
      %614 = vrot.lane.b32.xlu0 %v273, 72
      %v615 = vpop.permute.xlu0 %614
      %v617 = vsel %vm210, %v613, 0
      %v620 = vsel %vm279, %v615, 0
      %622 = vmatprep.subr.bf16.mxu0 0
      %623 = vmatpush1.bf16.msra.mxu0 0
      %624 = vmatprep.subr.bf16.mxu0 0
      %625 = vmatpush1.bf16.msra.mxu0 0
      %626 = vmatprep.subr.bf16.mxu0 0
      %627 = vmatpush1.bf16.msra.mxu0 0
      %628 = vmatprep.subr.bf16.mxu0 0
      %629 = vmatpush1.bf16.msra.mxu0 0
      %630 = vmatprep.subr.bf16.mxu0 0
      %631 = vmatpush1.bf16.msra.mxu0 0
      %632 = vmatprep.subr.bf16.mxu0 0
      %633 = vmatpush1.bf16.msra.mxu0 0
      %634 = vmatprep.subr.bf16.mxu0 0
      %635 = vmatpush1.bf16.msra.mxu0 0
      %636 = vmatprep.subr.bf16.mxu0 0
      %637 = vmatpush1.bf16.msra.mxu0 %v620
      %638 = vmatprep.subr.bf16.mxu0 0
      %639 = vmatpush2.bf16.msra.mxu0 0
      %640 = vmatprep.subr.bf16.mxu0 0
      %641 = vmatpush2.bf16.msra.mxu0 0
      %642 = vmatprep.subr.bf16.mxu0 0
      %643 = vmatpush2.bf16.msra.mxu0 0
      %644 = vmatprep.subr.bf16.mxu0 0
      %645 = vmatpush2.bf16.msra.mxu0 0
      %646 = vmatprep.subr.bf16.mxu0 0
      %647 = vmatpush2.bf16.msra.mxu0 0
      %648 = vmatprep.subr.bf16.mxu0 0
      %649 = vmatpush2.bf16.msra.mxu0 0
      %650 = vmatprep.subr.bf16.mxu0 0
      %651 = vmatpush2.bf16.msra.mxu0 0
      %652 = vmatprep.subr.bf16.mxu0 0
      %653 = vmatpush2.bf16.msra.mxu0 0
      %654 = vmatprep.mubr.bf16.mxu0 0
      %655 = vmatmul.mubr.bf16.gmra.mxu0 %v617
      %v656 = vpop.f32.mrf.mxu0
      %v657 = vadd.f32 0.0, %v656
      %v658 = vpop.f32.mrf.mxu0
      %v659 = vpop.f32.mrf.mxu0
      %v660 = vpop.f32.mrf.mxu0
      %661 = vdwg.mxu0
      %663 = vrot.lane.b32.xlu0 %v433, 8
      %v664 = vpop.permute.xlu0 %663
      %667 = vrot.lane.b32.xlu0 %v545, 16
      %v668 = vpop.permute.xlu0 %667
      %671 = vrot.lane.b32.xlu0 %v657, 24
      %v672 = vpop.permute.xlu0 %671
      %v674 = vsel %vm210, %v318, %v664
      %vm675 = vcmask 130048
      %v676 = vsel %vm675, %v674, %v668
      %vm677 = vcmask 195584
      %v678 = vsel %vm677, %v676, %v672
      %v679 = vpack.c.bf16 %v678, %v678
      %vm680 = vcmask 257024
      %681 = vst.msk [vmem:[%s193] sm:$0xf] %vm680, %v679
      %p682 = scmp.lt.s32.totalorder %s24, 1
      %s683 = scalar_select %p682, %s24, 1
      %p684 = scmp.lt.s32.totalorder %s25, 0
      %s685 = scalar_select %p684, %s25, 0
      %s686 = sadd.s32 %s685, %s683
      %s687 = smul.addr %s686, 4
      %s688 = scalar_lea.vmem %s3, %s687
      // Predicated region
      $region29: #{decoder_tx_forward.22} parent=27 // pred_check
        %p689 = pneg %p106
      $region30: #{decoder_tx_forward.22} parent=27 // pred_check_branch
        %691 = sbr.rel (%p689) target = $region32
      $region31: #{decoder_tx_forward.22} parent=27 // pred_region
        _
      $region32: #{decoder_tx_forward.22} parent=27 // pred_fallthru
        _
    $region28: #{decoder_tx_forward.22} parent=5 // pred_fallthru
      _
    %p692 = scmp.le.s32.totalorder 2, %s15
    // Predicated region
    $region33: #{decoder_tx_forward.22} parent=5 // pred_check
      %p693 = pneg %p692
    $region34: #{decoder_tx_forward.22} parent=5 // pred_check_branch
      %695 = sbr.rel (%p693) target = $region36
    $region35: #{decoder_tx_forward.22} parent=5 // pred_region
      %s696 = ssub.s32 %s15, 2
      // Predicated region
      $region37: #{decoder_tx_forward.22} parent=35 // pred_check
        %p697 = pneg %p112
      $region38: #{decoder_tx_forward.22} parent=35 // pred_check_branch
        %699 = sbr.rel (%p697) target = $region40
      $region39: #{decoder_tx_forward.22} parent=35 // pred_region
        %p700 = scmp.lt.s32.totalorder %s26, 1
        %s701 = scalar_select %p700, %s26, 1
        %p702 = scmp.lt.s32.totalorder %s27, 0
        %s703 = scalar_select %p702, %s27, 0
        %s704 = sadd.s32 %s703, %s701
        %s705 = smul.addr %s704, 4
        %s706 = scalar_lea.vmem %s3, %s705
      $region40: #{decoder_tx_forward.22} parent=35 // pred_fallthru
        _
    $region36: #{decoder_tx_forward.22} parent=5 // pred_fallthru
      _
  $region6: #{decoder_tx_forward.22} parent=0 // loop_footer
    %s19 = sadd.s32 1, %s15
  $region7: #{decoder_tx_forward.22} parent=0 // loop_footer_branch
    %14 = sbr.rel target = $region3
  $region8: #{decoder_tx_forward.22} parent=0 // loop_exit
    _

// kernel: decoder_tx_forward.25
$region0: #{decoder_tx_forward.25}
  #allocation0 [shape = 'u32[]', space=smem, size = 0x4, offset = 0x4, fixed_abs, tag = 'smem constant byte address 0x4 - core index']
  #allocation1 [shape = 'u32[144,128]{1,0:T(1,128)}', space=vmem, size = 0x12000, scoped, tag = 'internal scratch']
  %s0 = inlined_call_operand.vmem [shape: bf16[32,32], index: 0, kind: input, shape index: {}]
  %s1 = inlined_call_operand.vmem [shape: bf16[32,64], index: 1, kind: input, shape index: {}]
  %s2 = inlined_call_operand.vmem [shape: f32[1,64], index: 2, kind: input, shape index: {}]
  %s3 = inlined_call_operand.vmem [shape: bf16[32,64], index: 3, kind: output, shape index: {}]
  %s4 = sld [smem:[#allocation0]]
  $region45: #{decoder_tx_forward.25} parent=0
    _
  %s6 = ssub.s32 1, %s4
  %s7 = scalar_select 0, %s6, %s4
  loop: start=0, step=1, limit=4
  $region2: #{decoder_tx_forward.25} parent=0 // loop_pre_header
    _
  $region3: #{decoder_tx_forward.25} parent=0 // loop_header
    %s9 = sphi 0, %s13
    %p10 = scmp.ge.s32.totalorder %s9, 4
    %s19 = sphi 0, %s21
    %s22 = sphi 0, %s19
    %s23 = sphi 0, %s22
    %s39 = sphi 0, %s23
    %s43 = sphi 0, %s43
    %s45 = sphi 0, %s43
    %s46 = sphi 0, %s45
    %s60 = sphi 0, %s46
    %s64 = sphi 0, %s64
    %s66 = sphi 0, %s64
    %s67 = sphi 0, %s66
    %s81 = sphi 0, %s67
    %s87 = sphi 0, %s89
    %s90 = sphi 0, %s87
    %s91 = sphi 0, %s90
    %s107 = sphi 0, %s91
  $region4: #{decoder_tx_forward.25} parent=0 // loop_header_branch
    %12 = sbr.rel (%p10) target = $region8
  $region5: #{decoder_tx_forward.25} parent=0 // loop_body
    %s14 = ssub.s32 %s9, 1
    %s15 = ssub.s32 %s9, 2
    %s16 = sadd.s32 %s9, 1
    %s17 = ssub.s32 %s9, %s16
    %p18 = scmp.eq.s32.totalorder %s17, 0
    %s20 = sadd.s32 %s19, 1
    %s21 = scalar_select %p18, %s19, %s20
    %p24 = pneg %p18
    %p25 = scmp.eq.s32.totalorder %s9, 1
    %p26 = por %p24, %p25
    %p27 = scmp.ne.s32.totalorder %s19, %s22
    %p28 = scmp.eq.s32.totalorder %s9, 0
    %p29 = por %p27, %p28
    %p30 = scmp.ne.s32.totalorder %s19, %s22
    %p31 = scmp.eq.s32.totalorder %s14, 1
    %p32 = por %p30, %p31
    %p33 = scmp.ne.s32.totalorder %s22, %s23
    %p34 = scmp.eq.s32.totalorder %s14, 0
    %p35 = por %p33, %p34
    %p36 = scmp.ne.s32.totalorder %s22, %s23
    %p37 = scmp.eq.s32.totalorder %s15, 1
    %p38 = por %p36, %p37
    %p40 = scmp.ne.s32.totalorder %s23, %s39
    %p41 = scmp.eq.s32.totalorder %s15, 0
    %p42 = por %p40, %p41
    %s44 = sadd.s32 %s43, 1
    %p47 = scmp.eq.s32.totalorder %s9, 1
    %p48 = scmp.ne.s32.totalorder %s43, %s45
    %p49 = scmp.eq.s32.totalorder %s9, 0
    %p50 = por %p48, %p49
    %p51 = scmp.ne.s32.totalorder %s43, %s45
    %p52 = scmp.eq.s32.totalorder %s14, 1
    %p53 = por %p51, %p52
    %p54 = scmp.ne.s32.totalorder %s45, %s46
    %p55 = scmp.eq.s32.totalorder %s14, 0
    %p56 = por %p54, %p55
    %p57 = scmp.ne.s32.totalorder %s45, %s46
    %p58 = scmp.eq.s32.totalorder %s15, 1
    %p59 = por %p57, %p58
    %p61 = scmp.ne.s32.totalorder %s46, %s60
    %p62 = scmp.eq.s32.totalorder %s15, 0
    %p63 = por %p61, %p62
    %s65 = sadd.s32 %s64, 1
    %p68 = scmp.eq.s32.totalorder %s9, 1
    %p69 = scmp.ne.s32.totalorder %s64, %s66
    %p70 = scmp.eq.s32.totalorder %s9, 0
    %p71 = por %p69, %p70
    %p72 = scmp.ne.s32.totalorder %s64, %s66
    %p73 = scmp.eq.s32.totalorder %s14, 1
    %p74 = por %p72, %p73
    %p75 = scmp.ne.s32.totalorder %s66, %s67
    %p76 = scmp.eq.s32.totalorder %s14, 0
    %p77 = por %p75, %p76
    %p78 = scmp.ne.s32.totalorder %s66, %s67
    %p79 = scmp.eq.s32.totalorder %s15, 1
    %p80 = por %p78, %p79
    %p82 = scmp.ne.s32.totalorder %s67, %s81
    %p83 = scmp.eq.s32.totalorder %s15, 0
    %p84 = por %p82, %p83
    %s85 = ssub.s32 %s9, %s16
    %p86 = scmp.eq.s32.totalorder %s85, 0
    %s88 = sadd.s32 %s87, 1
    %s89 = scalar_select %p86, %s87, %s88
    %p92 = pneg %p86
    %p93 = scmp.eq.s32.totalorder %s9, 1
    %p94 = por %p92, %p93
    %p95 = scmp.ne.s32.totalorder %s87, %s90
    %p96 = scmp.eq.s32.totalorder %s9, 0
    %p97 = por %p95, %p96
    %p98 = scmp.ne.s32.totalorder %s87, %s90
    %p99 = scmp.eq.s32.totalorder %s14, 1
    %p100 = por %p98, %p99
    %p101 = scmp.ne.s32.totalorder %s90, %s91
    %p102 = scmp.eq.s32.totalorder %s14, 0
    %p103 = por %p101, %p102
    %p104 = scmp.ne.s32.totalorder %s90, %s91
    %p105 = scmp.eq.s32.totalorder %s15, 1
    %p106 = por %p104, %p105
    %p108 = scmp.ne.s32.totalorder %s91, %s107
    %p109 = scmp.eq.s32.totalorder %s15, 0
    %p110 = por %p108, %p109
    %p111 = scmp.le.s32.totalorder 1, %s9
    %p112 = scmp.lt.s32.totalorder %s9, 3
    %p113 = pnand %p111, %p112
    %p114 = pneg %p113
    // Predicated region
    $region9: #{decoder_tx_forward.25} parent=5 // pred_check
      _
    $region10: #{decoder_tx_forward.25} parent=5 // pred_check_branch
      %116 = sbr.rel (%p113) target = $region12
    $region11: #{decoder_tx_forward.25} parent=5 // pred_region
      %s117 = ssub.s32 %s9, 1
      // Predicated region
      $region13: #{decoder_tx_forward.25} parent=11 // pred_check
        %p118 = pneg %p56
      $region14: #{decoder_tx_forward.25} parent=11 // pred_check_branch
        %120 = sbr.rel (%p118) target = $region16
      $region15: #{decoder_tx_forward.25} parent=11 // pred_region
        _
      $region16: #{decoder_tx_forward.25} parent=11 // pred_fallthru
        _
      // Predicated region
      $region17: #{decoder_tx_forward.25} parent=11 // pred_check
        %p121 = pneg %p77
      $region18: #{decoder_tx_forward.25} parent=11 // pred_check_branch
        %123 = sbr.rel (%p121) target = $region20
      $region19: #{decoder_tx_forward.25} parent=11 // pred_region
        _
      $region20: #{decoder_tx_forward.25} parent=11 // pred_fallthru
        _
    $region12: #{decoder_tx_forward.25} parent=5 // pred_fallthru
      _
    %p124 = scmp.lt.s32.totalorder %s9, 2
    // Predicated region
    $region21: #{decoder_tx_forward.25} parent=5 // pred_check
      %p125 = pneg %p124
    $region22: #{decoder_tx_forward.25} parent=5 // pred_check_branch
      %127 = sbr.rel (%p125) target = $region24
    $region23: #{decoder_tx_forward.25} parent=5 // pred_region
      // Predicated region
      $region25: #{decoder_tx_forward.25} parent=23 // pred_check
        %p128 = pneg %p29
      $region26: #{decoder_tx_forward.25} parent=23 // pred_check_branch
        %130 = sbr.rel (%p128) target = $region28
      $region27: #{decoder_tx_forward.25} parent=23 // pred_region
        %s131 = smul.u32 2, %s9
        %p132 = scmp.lt.s32.totalorder %s131, 3
        %s133 = scalar_select %p132, %s131, 3
        %s134 = smul.addr %s133, 4
        %s135 = scalar_lea.vmem %s0, %s134
        %s136 = smul.u32 2, %s9
      $region28: #{decoder_tx_forward.25} parent=23 // pred_fallthru
        _
    $region24: #{decoder_tx_forward.25} parent=5 // pred_fallthru
      _
    %p137 = scmp.le.s32.totalorder 1, %s9
    %p138 = scmp.lt.s32.totalorder %s9, 3
    %p139 = pnand %p137, %p138
    %p140 = pneg %p139
    // Predicated region
    $region29: #{decoder_tx_forward.25} parent=5 // pred_check
      _
    $region30: #{decoder_tx_forward.25} parent=5 // pred_check_branch
      %142 = sbr.rel (%p139) target = $region32
    $region31: #{decoder_tx_forward.25} parent=5 // pred_region
      %s143 = ssub.s32 %s9, 1
      %s144 = smul.u32 2, %s14
      %p145 = scmp.lt.s32.totalorder %s144, 3
      %s146 = scalar_select %p145, %s144, 3
      %s147 = smul.addr %s146, 4
      %s148 = scalar_lea.vmem %s0, %s147
      %p149 = pneg %p35
      %p150 = pneg %p32
      %p151 = pneg %p56
      %p152 = pneg %p53
      %p153 = pneg %p77
      %p154 = pneg %p74
      %p155 = pneg %p103
      %p156 = pneg %p100
      %s157 = smul.u32 2, %s14
      %p158 = scmp.lt.s32.totalorder %s157, 3
      %s159 = scalar_select %p158, %s157, 3
      %s160 = smul.addr %s159, 4
      %s161 = scalar_lea.vmem %s3, %s160
      %s162 = smul.u32 2, %s14
      %p163 = scmp.lt.s32.totalorder %s162, 3
      %s164 = scalar_select %p163, %s162, 3
      %s165 = smul.addr %s164, 4
      %s166 = scalar_lea.vmem %s0, %s165
      %s167 = smul.u32 2, %s14
      %s168 = smul.u32 2, %s14
      %p169 = scmp.lt.s32.totalorder %s168, 3
      %s170 = scalar_select %p169, %s168, 3
      %s171 = smul.addr %s170, 4
      %s172 = scalar_lea.vmem %s3, %s171
      %s173 = smul.u32 2, %s14
      %v175 = vld [vmem:[%s166] sm:$0xf]
      %v176 = vld [vmem:[%s166 + $0x4] sm:$0xf]
      %v177 = vld [vmem:[%s1] sm:$0xf]
      %v178 = vld [vmem:[%s1 + $0x4] sm:$0xf]
      %v179 = vld [vmem:[%s1 + $0x8] sm:$0xf]
      %v180 = vld [vmem:[%s1 + $0xc] sm:$0xf]
      %v181 = vld [vmem:[%s2] sm:$0x1]
      %v183 = vlaneseq
      %v184 = vshrl.u32 %v183, 7
      %v185 = vsub.s32 0, %v184
      %v186 = vrot.slane %v181, %v185
      %v190 = vunpack.c.l.b16 %v175
      %v191 = vunpack.c.l.b16 %v176
      %v192 = vpack.c.b16 %v191, %v190
      %v197 = vunpack.c.l.b16 %v177
      %v198 = vunpack.c.l.b16 %v178
      %v199 = vunpack.c.l.b16 %v179
      %v200 = vunpack.c.l.b16 %v180
      %v201 = vpack.c.b16 %v198, %v197
      %v202 = vpack.c.b16 %v200, %v199
      %vm205 = vcmask 261120
      %v207 = vsel %vm205, %v192, 0
      %209 = vmatprep.subr.bf16.mxu0 0
      %210 = vmatpush1.bf16.msra.mxu0 0
      %211 = vmatprep.subr.bf16.mxu0 0
      %212 = vmatpush1.bf16.msra.mxu0 0
      %213 = vmatprep.subr.bf16.mxu0 0
      %214 = vmatpush1.bf16.msra.mxu0 0
      %215 = vmatprep.subr.bf16.mxu0 0
      %216 = vmatpush1.bf16.msra.mxu0 0
      %217 = vmatprep.subr.bf16.mxu0 0
      %218 = vmatpush1.bf16.msra.mxu0 0
      %219 = vmatprep.subr.bf16.mxu0 0
      %220 = vmatpush1.bf16.msra.mxu0 0
      %221 = vmatprep.subr.bf16.mxu0 0
      %222 = vmatpush1.bf16.msra.mxu0 %v202
      %223 = vmatprep.subr.bf16.mxu0 0
      %224 = vmatpush1.bf16.msra.mxu0 %v201
      %225 = vmatprep.subr.bf16.mxu0 0
      %226 = vmatpush2.bf16.msra.mxu0 0
      %227 = vmatprep.subr.bf16.mxu0 0
      %228 = vmatpush2.bf16.msra.mxu0 0
      %229 = vmatprep.subr.bf16.mxu0 0
      %230 = vmatpush2.bf16.msra.mxu0 0
      %231 = vmatprep.subr.bf16.mxu0 0
      %232 = vmatpush2.bf16.msra.mxu0 0
      %233 = vmatprep.subr.bf16.mxu0 0
      %234 = vmatpush2.bf16.msra.mxu0 0
      %235 = vmatprep.subr.bf16.mxu0 0
      %236 = vmatpush2.bf16.msra.mxu0 0
      %237 = vmatprep.subr.bf16.mxu0 0
      %238 = vmatpush2.bf16.msra.mxu0 0
      %239 = vmatprep.subr.bf16.mxu0 0
      %240 = vmatpush2.bf16.msra.mxu0 0
      %241 = vmatprep.mubr.bf16.mxu0 0
      %242 = vmatmul.mubr.bf16.gmra.mxu0 %v207
      %v243 = vpop.f32.mrf.mxu0
      %v244 = vadd.f32 %v186, %v243
      %v245 = vpop.f32.mrf.mxu0
      %v246 = vpop.f32.mrf.mxu0
      %v247 = vadd.f32 %v186, %v246
      %v248 = vpop.f32.mrf.mxu0
      %249 = vdwg.mxu0
      %v250 = vpack.c.bf16 %v247, %v244
      %v252 = vunpack.c.l.b16 %v250
      %v253 = vunpack.c.h.b16 %v250
      %v254 = vpack.c.b16 %v252, %v252
      %v255 = vpack.c.b16 %v253, %v253
      %vm258 = vcmask 519168
      %259 = vst.msk [vmem:[%s172] sm:$0xf] %vm258, %v254
      %260 = vst.msk [vmem:[%s172 + $0x4] sm:$0xf] %vm258, %v255
      %s261 = smul.u32 2, %s14
      %p262 = scmp.lt.s32.totalorder %s261, 3
      %s263 = scalar_select %p262, %s261, 3
      %s264 = smul.addr %s263, 4
      %s265 = scalar_lea.vmem %s3, %s264
      // Predicated region
      $region33: #{decoder_tx_forward.25} parent=31 // pred_check
        %p266 = pneg %p100
      $region34: #{decoder_tx_forward.25} parent=31 // pred_check_branch
        %268 = sbr.rel (%p266) target = $region36
      $region35: #{decoder_tx_forward.25} parent=31 // pred_region
        %s269 = smul.u32 2, %s14
      $region36: #{decoder_tx_forward.25} parent=31 // pred_fallthru
        _
    $region32: #{decoder_tx_forward.25} parent=5 // pred_fallthru
      _
    %p270 = scmp.le.s32.totalorder 2, %s9
    // Predicated region
    $region37: #{decoder_tx_forward.25} parent=5 // pred_check
      %p271 = pneg %p270
    $region38: #{decoder_tx_forward.25} parent=5 // pred_check_branch
      %273 = sbr.rel (%p271) target = $region40
    $region39: #{decoder_tx_forward.25} parent=5 // pred_region
      %s274 = ssub.s32 %s9, 2
      // Predicated region
      $region41: #{decoder_tx_forward.25} parent=39 // pred_check
        %p275 = pneg %p106
      $region42: #{decoder_tx_forward.25} parent=39 // pred_check_branch
        %277 = sbr.rel (%p275) target = $region44
      $region43: #{decoder_tx_forward.25} parent=39 // pred_region
        %s278 = smul.u32 2, %s15
        %p279 = scmp.lt.s32.totalorder %s278, 3
        %s280 = scalar_select %p279, %s278, 3
        %s281 = smul.addr %s280, 4
        %s282 = scalar_lea.vmem %s3, %s281
      $region44: #{decoder_tx_forward.25} parent=39 // pred_fallthru
        _
    $region40: #{decoder_tx_forward.25} parent=5 // pred_fallthru
      _
  $region6: #{decoder_tx_forward.25} parent=0 // loop_footer
    %s13 = sadd.s32 1, %s9
  $region7: #{decoder_tx_forward.25} parent=0 // loop_footer_branch
    %8 = sbr.rel target = $region3
  $region8: #{decoder_tx_forward.25} parent=0 // loop_exit
    _

// kernel: decoder_tx_forward.24
$region0: #{decoder_tx_forward.24}
  #allocation0 [shape = 'u32[]', space=smem, size = 0x4, offset = 0x4, fixed_abs, tag = 'smem constant byte address 0x4 - core index']
  #allocation1 [shape = 'u32[144,128]{1,0:T(1,128)}', space=vmem, size = 0x12000, scoped, tag = 'internal scratch']
  %s0 = inlined_call_operand.vmem [shape: f32[16,32], index: 0, kind: input, shape index: {}]
  %s1 = inlined_call_operand.vmem [shape: f32[1,32], index: 1, kind: input, shape index: {}]
  %s2 = inlined_call_operand.vmem [shape: f32[1,32], index: 2, kind: input, shape index: {}]
  %s3 = inlined_call_operand.vmem [shape: bf16[32,32], index: 3, kind: input, shape index: {}]
  %s4 = inlined_call_operand.vmem [shape: f32[1,32], index: 4, kind: input, shape index: {}]
  %s5 = inlined_call_operand.vmem [shape: bf16[16,32], index: 5, kind: output, shape index: {}]
  %s6 = sld [smem:[#allocation0]]
  $region53: #{decoder_tx_forward.24} parent=0
    _
  %s8 = ssub.s32 1, %s6
  %s9 = scalar_select 0, %s8, %s6
  loop: start=0, step=1, limit=4
  $region2: #{decoder_tx_forward.24} parent=0 // loop_pre_header
    _
  $region3: #{decoder_tx_forward.24} parent=0 // loop_header
    %s11 = sphi 0, %s15
    %p12 = scmp.ge.s32.totalorder %s11, 4
    %s21 = sphi 0, %s23
    %s24 = sphi 0, %s21
    %s25 = sphi 0, %s24
    %s41 = sphi 0, %s25
    %s45 = sphi 0, %s45
    %s47 = sphi 0, %s45
    %s48 = sphi 0, %s47
    %s62 = sphi 0, %s48
    %s66 = sphi 0, %s66
    %s68 = sphi 0, %s66
    %s69 = sphi 0, %s68
    %s83 = sphi 0, %s69
    %s87 = sphi 0, %s87
    %s89 = sphi 0, %s87
    %s90 = sphi 0, %s89
    %s104 = sphi 0, %s90
    %s108 = sphi 0, %s108
    %s110 = sphi 0, %s108
    %s111 = sphi 0, %s110
    %s125 = sphi 0, %s111
    %s131 = sphi 0, %s133
    %s134 = sphi 0, %s131
    %s135 = sphi 0, %s134
    %s151 = sphi 0, %s135
  $region4: #{decoder_tx_forward.24} parent=0 // loop_header_branch
    %14 = sbr.rel (%p12) target = $region8
  $region5: #{decoder_tx_forward.24} parent=0 // loop_body
    %s16 = ssub.s32 %s11, 1
    %s17 = ssub.s32 %s11, 2
    %s18 = sadd.s32 %s11, 1
    %s19 = ssub.s32 %s11, %s18
    %p20 = scmp.eq.s32.totalorder %s19, 0
    %s22 = sadd.s32 %s21, 1
    %s23 = scalar_select %p20, %s21, %s22
    %p26 = pneg %p20
    %p27 = scmp.eq.s32.totalorder %s11, 1
    %p28 = por %p26, %p27
    %p29 = scmp.ne.s32.totalorder %s21, %s24
    %p30 = scmp.eq.s32.totalorder %s11, 0
    %p31 = por %p29, %p30
    %p32 = scmp.ne.s32.totalorder %s21, %s24
    %p33 = scmp.eq.s32.totalorder %s16, 1
    %p34 = por %p32, %p33
    %p35 = scmp.ne.s32.totalorder %s24, %s25
    %p36 = scmp.eq.s32.totalorder %s16, 0
    %p37 = por %p35, %p36
    %p38 = scmp.ne.s32.totalorder %s24, %s25
    %p39 = scmp.eq.s32.totalorder %s17, 1
    %p40 = por %p38, %p39
    %p42 = scmp.ne.s32.totalorder %s25, %s41
    %p43 = scmp.eq.s32.totalorder %s17, 0
    %p44 = por %p42, %p43
    %s46 = sadd.s32 %s45, 1
    %p49 = scmp.eq.s32.totalorder %s11, 1
    %p50 = scmp.ne.s32.totalorder %s45, %s47
    %p51 = scmp.eq.s32.totalorder %s11, 0
    %p52 = por %p50, %p51
    %p53 = scmp.ne.s32.totalorder %s45, %s47
    %p54 = scmp.eq.s32.totalorder %s16, 1
    %p55 = por %p53, %p54
    %p56 = scmp.ne.s32.totalorder %s47, %s48
    %p57 = scmp.eq.s32.totalorder %s16, 0
    %p58 = por %p56, %p57
    %p59 = scmp.ne.s32.totalorder %s47, %s48
    %p60 = scmp.eq.s32.totalorder %s17, 1
    %p61 = por %p59, %p60
    %p63 = scmp.ne.s32.totalorder %s48, %s62
    %p64 = scmp.eq.s32.totalorder %s17, 0
    %p65 = por %p63, %p64
    %s67 = sadd.s32 %s66, 1
    %p70 = scmp.eq.s32.totalorder %s11, 1
    %p71 = scmp.ne.s32.totalorder %s66, %s68
    %p72 = scmp.eq.s32.totalorder %s11, 0
    %p73 = por %p71, %p72
    %p74 = scmp.ne.s32.totalorder %s66, %s68
    %p75 = scmp.eq.s32.totalorder %s16, 1
    %p76 = por %p74, %p75
    %p77 = scmp.ne.s32.totalorder %s68, %s69
    %p78 = scmp.eq.s32.totalorder %s16, 0
    %p79 = por %p77, %p78
    %p80 = scmp.ne.s32.totalorder %s68, %s69
    %p81 = scmp.eq.s32.totalorder %s17, 1
    %p82 = por %p80, %p81
    %p84 = scmp.ne.s32.totalorder %s69, %s83
    %p85 = scmp.eq.s32.totalorder %s17, 0
    %p86 = por %p84, %p85
    %s88 = sadd.s32 %s87, 1
    %p91 = scmp.eq.s32.totalorder %s11, 1
    %p92 = scmp.ne.s32.totalorder %s87, %s89
    %p93 = scmp.eq.s32.totalorder %s11, 0
    %p94 = por %p92, %p93
    %p95 = scmp.ne.s32.totalorder %s87, %s89
    %p96 = scmp.eq.s32.totalorder %s16, 1
    %p97 = por %p95, %p96
    %p98 = scmp.ne.s32.totalorder %s89, %s90
    %p99 = scmp.eq.s32.totalorder %s16, 0
    %p100 = por %p98, %p99
    %p101 = scmp.ne.s32.totalorder %s89, %s90
    %p102 = scmp.eq.s32.totalorder %s17, 1
    %p103 = por %p101, %p102
    %p105 = scmp.ne.s32.totalorder %s90, %s104
    %p106 = scmp.eq.s32.totalorder %s17, 0
    %p107 = por %p105, %p106
    %s109 = sadd.s32 %s108, 1
    %p112 = scmp.eq.s32.totalorder %s11, 1
    %p113 = scmp.ne.s32.totalorder %s108, %s110
    %p114 = scmp.eq.s32.totalorder %s11, 0
    %p115 = por %p113, %p114
    %p116 = scmp.ne.s32.totalorder %s108, %s110
    %p117 = scmp.eq.s32.totalorder %s16, 1
    %p118 = por %p116, %p117
    %p119 = scmp.ne.s32.totalorder %s110, %s111
    %p120 = scmp.eq.s32.totalorder %s16, 0
    %p121 = por %p119, %p120
    %p122 = scmp.ne.s32.totalorder %s110, %s111
    %p123 = scmp.eq.s32.totalorder %s17, 1
    %p124 = por %p122, %p123
    %p126 = scmp.ne.s32.totalorder %s111, %s125
    %p127 = scmp.eq.s32.totalorder %s17, 0
    %p128 = por %p126, %p127
    %s129 = ssub.s32 %s11, %s18
    %p130 = scmp.eq.s32.totalorder %s129, 0
    %s132 = sadd.s32 %s131, 1
    %s133 = scalar_select %p130, %s131, %s132
    %p136 = pneg %p130
    %p137 = scmp.eq.s32.totalorder %s11, 1
    %p138 = por %p136, %p137
    %p139 = scmp.ne.s32.totalorder %s131, %s134
    %p140 = scmp.eq.s32.totalorder %s11, 0
    %p141 = por %p139, %p140
    %p142 = scmp.ne.s32.totalorder %s131, %s134
    %p143 = scmp.eq.s32.totalorder %s16, 1
    %p144 = por %p142, %p143
    %p145 = scmp.ne.s32.totalorder %s134, %s135
    %p146 = scmp.eq.s32.totalorder %s16, 0
    %p147 = por %p145, %p146
    %p148 = scmp.ne.s32.totalorder %s134, %s135
    %p149 = scmp.eq.s32.totalorder %s17, 1
    %p150 = por %p148, %p149
    %p152 = scmp.ne.s32.totalorder %s135, %s151
    %p153 = scmp.eq.s32.totalorder %s17, 0
    %p154 = por %p152, %p153
    %p155 = scmp.le.s32.totalorder 1, %s11
    %p156 = scmp.lt.s32.totalorder %s11, 3
    %p157 = pnand %p155, %p156
    %p158 = pneg %p157
    // Predicated region
    $region9: #{decoder_tx_forward.24} parent=5 // pred_check
      _
    $region10: #{decoder_tx_forward.24} parent=5 // pred_check_branch
      %160 = sbr.rel (%p157) target = $region12
    $region11: #{decoder_tx_forward.24} parent=5 // pred_region
      %s161 = ssub.s32 %s11, 1
      // Predicated region
      $region13: #{decoder_tx_forward.24} parent=11 // pred_check
        %p162 = pneg %p58
      $region14: #{decoder_tx_forward.24} parent=11 // pred_check_branch
        %164 = sbr.rel (%p162) target = $region16
      $region15: #{decoder_tx_forward.24} parent=11 // pred_region
        _
      $region16: #{decoder_tx_forward.24} parent=11 // pred_fallthru
        _
      // Predicated region
      $region17: #{decoder_tx_forward.24} parent=11 // pred_check
        %p165 = pneg %p79
      $region18: #{decoder_tx_forward.24} parent=11 // pred_check_branch
        %167 = sbr.rel (%p165) target = $region20
      $region19: #{decoder_tx_forward.24} parent=11 // pred_region
        _
      $region20: #{decoder_tx_forward.24} parent=11 // pred_fallthru
        _
      // Predicated region
      $region21: #{decoder_tx_forward.24} parent=11 // pred_check
        %p168 = pneg %p100
      $region22: #{decoder_tx_forward.24} parent=11 // pred_check_branch
        %170 = sbr.rel (%p168) target = $region24
      $region23: #{decoder_tx_forward.24} parent=11 // pred_region
        _
      $region24: #{decoder_tx_forward.24} parent=11 // pred_fallthru
        _
      // Predicated region
      $region25: #{decoder_tx_forward.24} parent=11 // pred_check
        %p171 = pneg %p121
      $region26: #{decoder_tx_forward.24} parent=11 // pred_check_branch
        %173 = sbr.rel (%p171) target = $region28
      $region27: #{decoder_tx_forward.24} parent=11 // pred_region
        _
      $region28: #{decoder_tx_forward.24} parent=11 // pred_fallthru
        _
    $region12: #{decoder_tx_forward.24} parent=5 // pred_fallthru
      _
    %p174 = scmp.lt.s32.totalorder %s11, 2
    // Predicated region
    $region29: #{decoder_tx_forward.24} parent=5 // pred_check
      %p175 = pneg %p174
    $region30: #{decoder_tx_forward.24} parent=5 // pred_check_branch
      %177 = sbr.rel (%p175) target = $region32
    $region31: #{decoder_tx_forward.24} parent=5 // pred_region
      // Predicated region
      $region33: #{decoder_tx_forward.24} parent=31 // pred_check
        %p178 = pneg %p31
      $region34: #{decoder_tx_forward.24} parent=31 // pred_check_branch
        %180 = sbr.rel (%p178) target = $region36
      $region35: #{decoder_tx_forward.24} parent=31 // pred_region
        %p181 = scmp.lt.s32.totalorder %s11, 1
        %s182 = scalar_select %p181, %s11, 1
        %s183 = smul.addr %s182, 8
        %s184 = scalar_lea.vmem %s0, %s183
      $region36: #{decoder_tx_forward.24} parent=31 // pred_fallthru
        _
    $region32: #{decoder_tx_forward.24} parent=5 // pred_fallthru
      _
    %p185 = scmp.le.s32.totalorder 1, %s11
    %p186 = scmp.lt.s32.totalorder %s11, 3
    %p187 = pnand %p185, %p186
    %p188 = pneg %p187
    // Predicated region
    $region37: #{decoder_tx_forward.24} parent=5 // pred_check
      _
    $region38: #{decoder_tx_forward.24} parent=5 // pred_check_branch
      %190 = sbr.rel (%p187) target = $region40
    $region39: #{decoder_tx_forward.24} parent=5 // pred_region
      %s191 = ssub.s32 %s11, 1
      %p192 = scmp.lt.s32.totalorder %s16, 1
      %s193 = scalar_select %p192, %s16, 1
      %s194 = smul.addr %s193, 8
      %s195 = scalar_lea.vmem %s0, %s194
      %p196 = pneg %p37
      %p197 = pneg %p34
      %p198 = pneg %p58
      %p199 = pneg %p55
      %p200 = pneg %p79
      %p201 = pneg %p76
      %p202 = pneg %p100
      %p203 = pneg %p97
      %p204 = pneg %p121
      %p205 = pneg %p118
      %p206 = pneg %p147
      %p207 = pneg %p144
      %p208 = scmp.lt.s32.totalorder %s16, 1
      %s209 = scalar_select %p208, %s16, 1
      %s210 = smul.addr %s209, 4
      %s211 = scalar_lea.vmem %s5, %s210
      %p212 = scmp.lt.s32.totalorder %s16, 1
      %s213 = scalar_select %p212, %s16, 1
      %s214 = smul.addr %s213, 8
      %s215 = scalar_lea.vmem %s0, %s214
      %p216 = scmp.lt.s32.totalorder %s16, 1
      %s217 = scalar_select %p216, %s16, 1
      %s218 = smul.addr %s217, 4
      %s219 = scalar_lea.vmem %s5, %s218
      %v221 = vld [vmem:[%s215] sm:$0xff]
      %v222 = vld [vmem:[%s1] sm:$0x1]
      %v223 = vld [vmem:[%s2] sm:$0x1]
      %vm224 = vcmask 261120
      %v225 = vsel %vm224, %v221, 0.0
      %226 = vadd.xlane.f32.xlu0 %v225
      %v227 = vpop.xlane.xlu0 %226
      %v228 = vrcp.pop 32.0
      %v229 = vmul.f32 %v227, %v228
      %v230 = vsub.f32 %v221, %v229
      %v231 = vmul.f32 %v230, %v230
      %v232 = vsel %vm224, %v231, 0.0
      %233 = vadd.xlane.f32.xlu0 %v232
      %v234 = vpop.xlane.xlu0 %233
      %v235 = vmul.f32 %v234, %v228
      %v236 = vadd.f32 %v235, 1e-06
      %v237 = vrsqrt.pop %v236
      %v238 = vmul.f32 %v230, %v237
      %v240 = vlaneseq
      %v241 = vshrl.u32 %v240, 7
      %v242 = vsub.s32 0, %v241
      %v243 = vrot.slane %v222, %v242
      %v245 = vmul.f32 %v238, %v243
      %v247 = vlaneseq
      %v248 = vshrl.u32 %v247, 7
      %v249 = vsub.s32 0, %v248
      %v250 = vrot.slane %v223, %v249
      %v252 = vadd.f32 %v245, %v250
      %v253 = vpack.c.bf16 %v252, %v252
      %v254 = vld [vmem:[%s3] sm:$0xf]
      %v255 = vld [vmem:[%s3 + $0x4] sm:$0xf]
      %v256 = vld [vmem:[%s3 + $0x8] sm:$0xf]
      %v257 = vld [vmem:[%s3 + $0xc] sm:$0xf]
      %v258 = vld [vmem:[%s4] sm:$0x1]
      %v260 = vlaneseq
      %v261 = vshrl.u32 %v260, 7
      %v262 = vsub.s32 0, %v261
      %v263 = vrot.slane %v258, %v262
      %v269 = vunpack.c.l.b16 %v254
      %v270 = vunpack.c.l.b16 %v255
      %v271 = vunpack.c.l.b16 %v256
      %v272 = vunpack.c.l.b16 %v257
      %v273 = vpack.c.b16 %v270, %v269
      %v274 = vpack.c.b16 %v272, %v271
      %v278 = vsel %vm224, %v253, 0
      %280 = vmatprep.subr.bf16.mxu0 0
      %281 = vmatpush1.bf16.msra.mxu0 0
      %282 = vmatprep.subr.bf16.mxu0 0
      %283 = vmatpush1.bf16.msra.mxu0 0
      %284 = vmatprep.subr.bf16.mxu0 0
      %285 = vmatpush1.bf16.msra.mxu0 0
      %286 = vmatprep.subr.bf16.mxu0 0
      %287 = vmatpush1.bf16.msra.mxu0 0
      %288 = vmatprep.subr.bf16.mxu0 0
      %289 = vmatpush1.bf16.msra.mxu0 0
      %290 = vmatprep.subr.bf16.mxu0 0
      %291 = vmatpush1.bf16.msra.mxu0 0
      %292 = vmatprep.subr.bf16.mxu0 0
      %293 = vmatpush1.bf16.msra.mxu0 %v274
      %294 = vmatprep.subr.bf16.mxu0 0
      %295 = vmatpush1.bf16.msra.mxu0 %v273
      %296 = vmatprep.subr.bf16.mxu0 0
      %297 = vmatpush2.bf16.msra.mxu0 0
      %298 = vmatprep.subr.bf16.mxu0 0
      %299 = vmatpush2.bf16.msra.mxu0 0
      %300 = vmatprep.subr.bf16.mxu0 0
      %301 = vmatpush2.bf16.msra.mxu0 0
      %302 = vmatprep.subr.bf16.mxu0 0
      %303 = vmatpush2.bf16.msra.mxu0 0
      %304 = vmatprep.subr.bf16.mxu0 0
      %305 = vmatpush2.bf16.msra.mxu0 0
      %306 = vmatprep.subr.bf16.mxu0 0
      %307 = vmatpush2.bf16.msra.mxu0 0
      %308 = vmatprep.subr.bf16.mxu0 0
      %309 = vmatpush2.bf16.msra.mxu0 0
      %310 = vmatprep.subr.bf16.mxu0 0
      %311 = vmatpush2.bf16.msra.mxu0 0
      %312 = vmatprep.mubr.bf16.mxu0 0
      %313 = vmatmul.mubr.bf16.gmra.mxu0 %v278
      %v314 = vpop.f32.mrf.mxu0
      %v315 = vadd.f32 %v263, %v314
      %v316 = vpop.f32.mrf.mxu0
      %v317 = vpop.f32.mrf.mxu0
      %v318 = vpop.f32.mrf.mxu0
      %319 = vdwg.mxu0
      %v320 = vpack.c.bf16 %v315, %v315
      %vm321 = vcmask 257024
      %322 = vst.msk [vmem:[%s219] sm:$0xf] %vm321, %v320
      %p323 = scmp.lt.s32.totalorder %s16, 1
      %s324 = scalar_select %p323, %s16, 1
      %s325 = smul.addr %s324, 4
      %s326 = scalar_lea.vmem %s5, %s325
      // Predicated region
      $region41: #{decoder_tx_forward.24} parent=39 // pred_check
        %p327 = pneg %p144
      $region42: #{decoder_tx_forward.24} parent=39 // pred_check_branch
        %329 = sbr.rel (%p327) target = $region44
      $region43: #{decoder_tx_forward.24} parent=39 // pred_region
        _
      $region44: #{decoder_tx_forward.24} parent=39 // pred_fallthru
        _
    $region40: #{decoder_tx_forward.24} parent=5 // pred_fallthru
      _
    %p330 = scmp.le.s32.totalorder 2, %s11
    // Predicated region
    $region45: #{decoder_tx_forward.24} parent=5 // pred_check
      %p331 = pneg %p330
    $region46: #{decoder_tx_forward.24} parent=5 // pred_check_branch
      %333 = sbr.rel (%p331) target = $region48
    $region47: #{decoder_tx_forward.24} parent=5 // pred_region
      %s334 = ssub.s32 %s11, 2
      // Predicated region
      $region49: #{decoder_tx_forward.24} parent=47 // pred_check
        %p335 = pneg %p150
      $region50: #{decoder_tx_forward.24} parent=47 // pred_check_branch
        %337 = sbr.rel (%p335) target = $region52
      $region51: #{decoder_tx_forward.24} parent=47 // pred_region
        %p338 = scmp.lt.s32.totalorder %s17, 1
        %s339 = scalar_select %p338, %s17, 1
        %s340 = smul.addr %s339, 4
        %s341 = scalar_lea.vmem %s5, %s340
      $region52: #{decoder_tx_forward.24} parent=47 // pred_fallthru
        _
    $region48: #{decoder_tx_forward.24} parent=5 // pred_fallthru
      _
  $region6: #{decoder_tx_forward.24} parent=0 // loop_footer
    %s15 = sadd.s32 1, %s11
  $region7: #{decoder_tx_forward.24} parent=0 // loop_footer_branch
    %10 = sbr.rel target = $region3
  $region8: #{decoder_tx_forward.24} parent=0 // loop_exit
    _

// kernel: decoder_tx_forward.28
$region0: #{decoder_tx_forward.28}
  #allocation0 [shape = 'u32[]', space=smem, size = 0x4, offset = 0x4, fixed_abs, tag = 'smem constant byte address 0x4 - core index']
  #allocation1 [shape = 'u32[144,128]{1,0:T(1,128)}', space=vmem, size = 0x12000, scoped, tag = 'internal scratch']
  %s0 = inlined_call_operand.vmem [shape: f32[16,32], index: 0, kind: input, shape index: {}]
  %s1 = inlined_call_operand.vmem [shape: f32[1,32], index: 1, kind: input, shape index: {}]
  %s2 = inlined_call_operand.vmem [shape: f32[1,32], index: 2, kind: input, shape index: {}]
  %s3 = inlined_call_operand.vmem [shape: bf16[32,64], index: 3, kind: input, shape index: {}]
  %s4 = inlined_call_operand.vmem [shape: f32[1,64], index: 4, kind: input, shape index: {}]
  %s5 = inlined_call_operand.vmem [shape: bf16[16,64], index: 5, kind: output, shape index: {}]
  %s6 = sld [smem:[#allocation0]]
  $region53: #{decoder_tx_forward.28} parent=0
    _
  %s8 = ssub.s32 1, %s6
  %s9 = scalar_select 0, %s8, %s6
  loop: start=0, step=1, limit=4
  $region2: #{decoder_tx_forward.28} parent=0 // loop_pre_header
    _
  $region3: #{decoder_tx_forward.28} parent=0 // loop_header
    %s11 = sphi 0, %s15
    %p12 = scmp.ge.s32.totalorder %s11, 4
    %s21 = sphi 0, %s23
    %s24 = sphi 0, %s21
    %s25 = sphi 0, %s24
    %s41 = sphi 0, %s25
    %s45 = sphi 0, %s45
    %s47 = sphi 0, %s45
    %s48 = sphi 0, %s47
    %s62 = sphi 0, %s48
    %s66 = sphi 0, %s66
    %s68 = sphi 0, %s66
    %s69 = sphi 0, %s68
    %s83 = sphi 0, %s69
    %s87 = sphi 0, %s87
    %s89 = sphi 0, %s87
    %s90 = sphi 0, %s89
    %s104 = sphi 0, %s90
    %s108 = sphi 0, %s108
    %s110 = sphi 0, %s108
    %s111 = sphi 0, %s110
    %s125 = sphi 0, %s111
    %s131 = sphi 0, %s133
    %s134 = sphi 0, %s131
    %s135 = sphi 0, %s134
    %s151 = sphi 0, %s135
  $region4: #{decoder_tx_forward.28} parent=0 // loop_header_branch
    %14 = sbr.rel (%p12) target = $region8
  $region5: #{decoder_tx_forward.28} parent=0 // loop_body
    %s16 = ssub.s32 %s11, 1
    %s17 = ssub.s32 %s11, 2
    %s18 = sadd.s32 %s11, 1
    %s19 = ssub.s32 %s11, %s18
    %p20 = scmp.eq.s32.totalorder %s19, 0
    %s22 = sadd.s32 %s21, 1
    %s23 = scalar_select %p20, %s21, %s22
    %p26 = pneg %p20
    %p27 = scmp.eq.s32.totalorder %s11, 1
    %p28 = por %p26, %p27
    %p29 = scmp.ne.s32.totalorder %s21, %s24
    %p30 = scmp.eq.s32.totalorder %s11, 0
    %p31 = por %p29, %p30
    %p32 = scmp.ne.s32.totalorder %s21, %s24
    %p33 = scmp.eq.s32.totalorder %s16, 1
    %p34 = por %p32, %p33
    %p35 = scmp.ne.s32.totalorder %s24, %s25
    %p36 = scmp.eq.s32.totalorder %s16, 0
    %p37 = por %p35, %p36
    %p38 = scmp.ne.s32.totalorder %s24, %s25
    %p39 = scmp.eq.s32.totalorder %s17, 1
    %p40 = por %p38, %p39
    %p42 = scmp.ne.s32.totalorder %s25, %s41
    %p43 = scmp.eq.s32.totalorder %s17, 0
    %p44 = por %p42, %p43
    %s46 = sadd.s32 %s45, 1
    %p49 = scmp.eq.s32.totalorder %s11, 1
    %p50 = scmp.ne.s32.totalorder %s45, %s47
    %p51 = scmp.eq.s32.totalorder %s11, 0
    %p52 = por %p50, %p51
    %p53 = scmp.ne.s32.totalorder %s45, %s47
    %p54 = scmp.eq.s32.totalorder %s16, 1
    %p55 = por %p53, %p54
    %p56 = scmp.ne.s32.totalorder %s47, %s48
    %p57 = scmp.eq.s32.totalorder %s16, 0
    %p58 = por %p56, %p57
    %p59 = scmp.ne.s32.totalorder %s47, %s48
    %p60 = scmp.eq.s32.totalorder %s17, 1
    %p61 = por %p59, %p60
    %p63 = scmp.ne.s32.totalorder %s48, %s62
    %p64 = scmp.eq.s32.totalorder %s17, 0
    %p65 = por %p63, %p64
    %s67 = sadd.s32 %s66, 1
    %p70 = scmp.eq.s32.totalorder %s11, 1
    %p71 = scmp.ne.s32.totalorder %s66, %s68
    %p72 = scmp.eq.s32.totalorder %s11, 0
    %p73 = por %p71, %p72
    %p74 = scmp.ne.s32.totalorder %s66, %s68
    %p75 = scmp.eq.s32.totalorder %s16, 1
    %p76 = por %p74, %p75
    %p77 = scmp.ne.s32.totalorder %s68, %s69
    %p78 = scmp.eq.s32.totalorder %s16, 0
    %p79 = por %p77, %p78
    %p80 = scmp.ne.s32.totalorder %s68, %s69
    %p81 = scmp.eq.s32.totalorder %s17, 1
    %p82 = por %p80, %p81
    %p84 = scmp.ne.s32.totalorder %s69, %s83
    %p85 = scmp.eq.s32.totalorder %s17, 0
    %p86 = por %p84, %p85
    %s88 = sadd.s32 %s87, 1
    %p91 = scmp.eq.s32.totalorder %s11, 1
    %p92 = scmp.ne.s32.totalorder %s87, %s89
    %p93 = scmp.eq.s32.totalorder %s11, 0
    %p94 = por %p92, %p93
    %p95 = scmp.ne.s32.totalorder %s87, %s89
    %p96 = scmp.eq.s32.totalorder %s16, 1
    %p97 = por %p95, %p96
    %p98 = scmp.ne.s32.totalorder %s89, %s90
    %p99 = scmp.eq.s32.totalorder %s16, 0
    %p100 = por %p98, %p99
    %p101 = scmp.ne.s32.totalorder %s89, %s90
    %p102 = scmp.eq.s32.totalorder %s17, 1
    %p103 = por %p101, %p102
    %p105 = scmp.ne.s32.totalorder %s90, %s104
    %p106 = scmp.eq.s32.totalorder %s17, 0
    %p107 = por %p105, %p106
    %s109 = sadd.s32 %s108, 1
    %p112 = scmp.eq.s32.totalorder %s11, 1
    %p113 = scmp.ne.s32.totalorder %s108, %s110
    %p114 = scmp.eq.s32.totalorder %s11, 0
    %p115 = por %p113, %p114
    %p116 = scmp.ne.s32.totalorder %s108, %s110
    %p117 = scmp.eq.s32.totalorder %s16, 1
    %p118 = por %p116, %p117
    %p119 = scmp.ne.s32.totalorder %s110, %s111
    %p120 = scmp.eq.s32.totalorder %s16, 0
    %p121 = por %p119, %p120
    %p122 = scmp.ne.s32.totalorder %s110, %s111
    %p123 = scmp.eq.s32.totalorder %s17, 1
    %p124 = por %p122, %p123
    %p126 = scmp.ne.s32.totalorder %s111, %s125
    %p127 = scmp.eq.s32.totalorder %s17, 0
    %p128 = por %p126, %p127
    %s129 = ssub.s32 %s11, %s18
    %p130 = scmp.eq.s32.totalorder %s129, 0
    %s132 = sadd.s32 %s131, 1
    %s133 = scalar_select %p130, %s131, %s132
    %p136 = pneg %p130
    %p137 = scmp.eq.s32.totalorder %s11, 1
    %p138 = por %p136, %p137
    %p139 = scmp.ne.s32.totalorder %s131, %s134
    %p140 = scmp.eq.s32.totalorder %s11, 0
    %p141 = por %p139, %p140
    %p142 = scmp.ne.s32.totalorder %s131, %s134
    %p143 = scmp.eq.s32.totalorder %s16, 1
    %p144 = por %p142, %p143
    %p145 = scmp.ne.s32.totalorder %s134, %s135
    %p146 = scmp.eq.s32.totalorder %s16, 0
    %p147 = por %p145, %p146
    %p148 = scmp.ne.s32.totalorder %s134, %s135
    %p149 = scmp.eq.s32.totalorder %s17, 1
    %p150 = por %p148, %p149
    %p152 = scmp.ne.s32.totalorder %s135, %s151
    %p153 = scmp.eq.s32.totalorder %s17, 0
    %p154 = por %p152, %p153
    %p155 = scmp.le.s32.totalorder 1, %s11
    %p156 = scmp.lt.s32.totalorder %s11, 3
    %p157 = pnand %p155, %p156
    %p158 = pneg %p157
    // Predicated region
    $region9: #{decoder_tx_forward.28} parent=5 // pred_check
      _
    $region10: #{decoder_tx_forward.28} parent=5 // pred_check_branch
      %160 = sbr.rel (%p157) target = $region12
    $region11: #{decoder_tx_forward.28} parent=5 // pred_region
      %s161 = ssub.s32 %s11, 1
      // Predicated region
      $region13: #{decoder_tx_forward.28} parent=11 // pred_check
        %p162 = pneg %p58
      $region14: #{decoder_tx_forward.28} parent=11 // pred_check_branch
        %164 = sbr.rel (%p162) target = $region16
      $region15: #{decoder_tx_forward.28} parent=11 // pred_region
        _
      $region16: #{decoder_tx_forward.28} parent=11 // pred_fallthru
        _
      // Predicated region
      $region17: #{decoder_tx_forward.28} parent=11 // pred_check
        %p165 = pneg %p79
      $region18: #{decoder_tx_forward.28} parent=11 // pred_check_branch
        %167 = sbr.rel (%p165) target = $region20
      $region19: #{decoder_tx_forward.28} parent=11 // pred_region
        _
      $region20: #{decoder_tx_forward.28} parent=11 // pred_fallthru
        _
      // Predicated region
      $region21: #{decoder_tx_forward.28} parent=11 // pred_check
        %p168 = pneg %p100
      $region22: #{decoder_tx_forward.28} parent=11 // pred_check_branch
        %170 = sbr.rel (%p168) target = $region24
      $region23: #{decoder_tx_forward.28} parent=11 // pred_region
        _
      $region24: #{decoder_tx_forward.28} parent=11 // pred_fallthru
        _
      // Predicated region
      $region25: #{decoder_tx_forward.28} parent=11 // pred_check
        %p171 = pneg %p121
      $region26: #{decoder_tx_forward.28} parent=11 // pred_check_branch
        %173 = sbr.rel (%p171) target = $region28
      $region27: #{decoder_tx_forward.28} parent=11 // pred_region
        _
      $region28: #{decoder_tx_forward.28} parent=11 // pred_fallthru
        _
    $region12: #{decoder_tx_forward.28} parent=5 // pred_fallthru
      _
    %p174 = scmp.lt.s32.totalorder %s11, 2
    // Predicated region
    $region29: #{decoder_tx_forward.28} parent=5 // pred_check
      %p175 = pneg %p174
    $region30: #{decoder_tx_forward.28} parent=5 // pred_check_branch
      %177 = sbr.rel (%p175) target = $region32
    $region31: #{decoder_tx_forward.28} parent=5 // pred_region
      // Predicated region
      $region33: #{decoder_tx_forward.28} parent=31 // pred_check
        %p178 = pneg %p31
      $region34: #{decoder_tx_forward.28} parent=31 // pred_check_branch
        %180 = sbr.rel (%p178) target = $region36
      $region35: #{decoder_tx_forward.28} parent=31 // pred_region
        %p181 = scmp.lt.s32.totalorder %s11, 1
        %s182 = scalar_select %p181, %s11, 1
        %s183 = smul.addr %s182, 8
        %s184 = scalar_lea.vmem %s0, %s183
      $region36: #{decoder_tx_forward.28} parent=31 // pred_fallthru
        _
    $region32: #{decoder_tx_forward.28} parent=5 // pred_fallthru
      _
    %p185 = scmp.le.s32.totalorder 1, %s11
    %p186 = scmp.lt.s32.totalorder %s11, 3
    %p187 = pnand %p185, %p186
    %p188 = pneg %p187
    // Predicated region
    $region37: #{decoder_tx_forward.28} parent=5 // pred_check
      _
    $region38: #{decoder_tx_forward.28} parent=5 // pred_check_branch
      %190 = sbr.rel (%p187) target = $region40
    $region39: #{decoder_tx_forward.28} parent=5 // pred_region
      %s191 = ssub.s32 %s11, 1
      %p192 = scmp.lt.s32.totalorder %s16, 1
      %s193 = scalar_select %p192, %s16, 1
      %s194 = smul.addr %s193, 8
      %s195 = scalar_lea.vmem %s0, %s194
      %p196 = pneg %p37
      %p197 = pneg %p34
      %p198 = pneg %p58
      %p199 = pneg %p55
      %p200 = pneg %p79
      %p201 = pneg %p76
      %p202 = pneg %p100
      %p203 = pneg %p97
      %p204 = pneg %p121
      %p205 = pneg %p118
      %p206 = pneg %p147
      %p207 = pneg %p144
      %p208 = scmp.lt.s32.totalorder %s16, 1
      %s209 = scalar_select %p208, %s16, 1
      %s210 = smul.addr %s209, 4
      %s211 = scalar_lea.vmem %s5, %s210
      %p212 = scmp.lt.s32.totalorder %s16, 1
      %s213 = scalar_select %p212, %s16, 1
      %s214 = smul.addr %s213, 8
      %s215 = scalar_lea.vmem %s0, %s214
      %p216 = scmp.lt.s32.totalorder %s16, 1
      %s217 = scalar_select %p216, %s16, 1
      %s218 = smul.addr %s217, 4
      %s219 = scalar_lea.vmem %s5, %s218
      %v221 = vld [vmem:[%s215] sm:$0xff]
      %v222 = vld [vmem:[%s1] sm:$0x1]
      %v223 = vld [vmem:[%s2] sm:$0x1]
      %vm224 = vcmask 261120
      %v225 = vsel %vm224, %v221, 0.0
      %226 = vadd.xlane.f32.xlu0 %v225
      %v227 = vpop.xlane.xlu0 %226
      %v228 = vrcp.pop 32.0
      %v229 = vmul.f32 %v227, %v228
      %v230 = vsub.f32 %v221, %v229
      %v231 = vmul.f32 %v230, %v230
      %v232 = vsel %vm224, %v231, 0.0
      %233 = vadd.xlane.f32.xlu0 %v232
      %v234 = vpop.xlane.xlu0 %233
      %v235 = vmul.f32 %v234, %v228
      %v236 = vadd.f32 %v235, 1e-06
      %v237 = vrsqrt.pop %v236
      %v238 = vmul.f32 %v230, %v237
      %v240 = vlaneseq
      %v241 = vshrl.u32 %v240, 7
      %v242 = vsub.s32 0, %v241
      %v243 = vrot.slane %v222, %v242
      %v245 = vmul.f32 %v238, %v243
      %v247 = vlaneseq
      %v248 = vshrl.u32 %v247, 7
      %v249 = vsub.s32 0, %v248
      %v250 = vrot.slane %v223, %v249
      %v252 = vadd.f32 %v245, %v250
      %v253 = vpack.c.bf16 %v252, %v252
      %v254 = vld [vmem:[%s3] sm:$0xf]
      %v255 = vld [vmem:[%s3 + $0x4] sm:$0xf]
      %v256 = vld [vmem:[%s3 + $0x8] sm:$0xf]
      %v257 = vld [vmem:[%s3 + $0xc] sm:$0xf]
      %v258 = vld [vmem:[%s4] sm:$0x1]
      %v260 = vlaneseq
      %v261 = vshrl.u32 %v260, 7
      %v262 = vsub.s32 0, %v261
      %v263 = vrot.slane %v258, %v262
      %v269 = vunpack.c.l.b16 %v254
      %v270 = vunpack.c.l.b16 %v255
      %v271 = vunpack.c.l.b16 %v256
      %v272 = vunpack.c.l.b16 %v257
      %v273 = vpack.c.b16 %v270, %v269
      %v274 = vpack.c.b16 %v272, %v271
      %v278 = vsel %vm224, %v253, 0
      %280 = vmatprep.subr.bf16.mxu0 0
      %281 = vmatpush1.bf16.msra.mxu0 0
      %282 = vmatprep.subr.bf16.mxu0 0
      %283 = vmatpush1.bf16.msra.mxu0 0
      %284 = vmatprep.subr.bf16.mxu0 0
      %285 = vmatpush1.bf16.msra.mxu0 0
      %286 = vmatprep.subr.bf16.mxu0 0
      %287 = vmatpush1.bf16.msra.mxu0 0
      %288 = vmatprep.subr.bf16.mxu0 0
      %289 = vmatpush1.bf16.msra.mxu0 0
      %290 = vmatprep.subr.bf16.mxu0 0
      %291 = vmatpush1.bf16.msra.mxu0 0
      %292 = vmatprep.subr.bf16.mxu0 0
      %293 = vmatpush1.bf16.msra.mxu0 %v274
      %294 = vmatprep.subr.bf16.mxu0 0
      %295 = vmatpush1.bf16.msra.mxu0 %v273
      %296 = vmatprep.subr.bf16.mxu0 0
      %297 = vmatpush2.bf16.msra.mxu0 0
      %298 = vmatprep.subr.bf16.mxu0 0
      %299 = vmatpush2.bf16.msra.mxu0 0
      %300 = vmatprep.subr.bf16.mxu0 0
      %301 = vmatpush2.bf16.msra.mxu0 0
      %302 = vmatprep.subr.bf16.mxu0 0
      %303 = vmatpush2.bf16.msra.mxu0 0
      %304 = vmatprep.subr.bf16.mxu0 0
      %305 = vmatpush2.bf16.msra.mxu0 0
      %306 = vmatprep.subr.bf16.mxu0 0
      %307 = vmatpush2.bf16.msra.mxu0 0
      %308 = vmatprep.subr.bf16.mxu0 0
      %309 = vmatpush2.bf16.msra.mxu0 0
      %310 = vmatprep.subr.bf16.mxu0 0
      %311 = vmatpush2.bf16.msra.mxu0 0
      %312 = vmatprep.mubr.bf16.mxu0 0
      %313 = vmatmul.mubr.bf16.gmra.mxu0 %v278
      %v314 = vpop.f32.mrf.mxu0
      %v315 = vadd.f32 %v263, %v314
      %v316 = vpop.f32.mrf.mxu0
      %v317 = vpop.f32.mrf.mxu0
      %v318 = vpop.f32.mrf.mxu0
      %319 = vdwg.mxu0
      %v320 = vmax.f32 %v315, 0.0
      %v321 = vpack.c.bf16 %v320, %v320
      %vm322 = vcmask 519168
      %323 = vst.msk [vmem:[%s219] sm:$0xf] %vm322, %v321
      %p324 = scmp.lt.s32.totalorder %s16, 1
      %s325 = scalar_select %p324, %s16, 1
      %s326 = smul.addr %s325, 4
      %s327 = scalar_lea.vmem %s5, %s326
      // Predicated region
      $region41: #{decoder_tx_forward.28} parent=39 // pred_check
        %p328 = pneg %p144
      $region42: #{decoder_tx_forward.28} parent=39 // pred_check_branch
        %330 = sbr.rel (%p328) target = $region44
      $region43: #{decoder_tx_forward.28} parent=39 // pred_region
        _
      $region44: #{decoder_tx_forward.28} parent=39 // pred_fallthru
        _
    $region40: #{decoder_tx_forward.28} parent=5 // pred_fallthru
      _
    %p331 = scmp.le.s32.totalorder 2, %s11
    // Predicated region
    $region45: #{decoder_tx_forward.28} parent=5 // pred_check
      %p332 = pneg %p331
    $region46: #{decoder_tx_forward.28} parent=5 // pred_check_branch
      %334 = sbr.rel (%p332) target = $region48
    $region47: #{decoder_tx_forward.28} parent=5 // pred_region
      %s335 = ssub.s32 %s11, 2
      // Predicated region
      $region49: #{decoder_tx_forward.28} parent=47 // pred_check
        %p336 = pneg %p150
      $region50: #{decoder_tx_forward.28} parent=47 // pred_check_branch
        %338 = sbr.rel (%p336) target = $region52
      $region51: #{decoder_tx_forward.28} parent=47 // pred_region
        %p339 = scmp.lt.s32.totalorder %s17, 1
        %s340 = scalar_select %p339, %s17, 1
        %s341 = smul.addr %s340, 4
        %s342 = scalar_lea.vmem %s5, %s341
      $region52: #{decoder_tx_forward.28} parent=47 // pred_fallthru
        _
    $region48: #{decoder_tx_forward.28} parent=5 // pred_fallthru
      _
  $region6: #{decoder_tx_forward.28} parent=0 // loop_footer
    %s15 = sadd.s32 1, %s11
  $region7: #{decoder_tx_forward.28} parent=0 // loop_footer_branch
    %10 = sbr.rel target = $region3
  $region8: #{decoder_tx_forward.28} parent=0 // loop_exit
    _

// kernel: decoder_tx_forward.29
$region0: #{decoder_tx_forward.29}
  #allocation0 [shape = 'u32[]', space=smem, size = 0x4, offset = 0x4, fixed_abs, tag = 'smem constant byte address 0x4 - core index']
  #allocation1 [shape = 'u32[144,128]{1,0:T(1,128)}', space=vmem, size = 0x12000, scoped, tag = 'internal scratch']
  %s0 = inlined_call_operand.vmem [shape: bf16[16,64], index: 0, kind: input, shape index: {}]
  %s1 = inlined_call_operand.vmem [shape: bf16[64,32], index: 1, kind: input, shape index: {}]
  %s2 = inlined_call_operand.vmem [shape: f32[1,32], index: 2, kind: input, shape index: {}]
  %s3 = inlined_call_operand.vmem [shape: f32[16,32], index: 3, kind: input, shape index: {}]
  %s4 = inlined_call_operand.vmem [shape: f32[16,32], index: 4, kind: output, shape index: {}]
  %s5 = sld [smem:[#allocation0]]
  $region49: #{decoder_tx_forward.29} parent=0
    _
  %s7 = ssub.s32 1, %s5
  %s8 = scalar_select 0, %s7, %s5
  loop: start=0, step=1, limit=4
  $region2: #{decoder_tx_forward.29} parent=0 // loop_pre_header
    _
  $region3: #{decoder_tx_forward.29} parent=0 // loop_header
    %s10 = sphi 0, %s14
    %p11 = scmp.ge.s32.totalorder %s10, 4
    %s20 = sphi 0, %s22
    %s23 = sphi 0, %s20
    %s24 = sphi 0, %s23
    %s40 = sphi 0, %s24
    %s44 = sphi 0, %s44
    %s46 = sphi 0, %s44
    %s47 = sphi 0, %s46
    %s61 = sphi 0, %s47
    %s65 = sphi 0, %s65
    %s67 = sphi 0, %s65
    %s68 = sphi 0, %s67
    %s82 = sphi 0, %s68
    %s88 = sphi 0, %s90
    %s91 = sphi 0, %s88
    %s92 = sphi 0, %s91
    %s108 = sphi 0, %s92
    %s114 = sphi 0, %s116
    %s117 = sphi 0, %s114
    %s118 = sphi 0, %s117
    %s134 = sphi 0, %s118
  $region4: #{decoder_tx_forward.29} parent=0 // loop_header_branch
    %13 = sbr.rel (%p11) target = $region8
  $region5: #{decoder_tx_forward.29} parent=0 // loop_body
    %s15 = ssub.s32 %s10, 1
    %s16 = ssub.s32 %s10, 2
    %s17 = sadd.s32 %s10, 1
    %s18 = ssub.s32 %s10, %s17
    %p19 = scmp.eq.s32.totalorder %s18, 0
    %s21 = sadd.s32 %s20, 1
    %s22 = scalar_select %p19, %s20, %s21
    %p25 = pneg %p19
    %p26 = scmp.eq.s32.totalorder %s10, 1
    %p27 = por %p25, %p26
    %p28 = scmp.ne.s32.totalorder %s20, %s23
    %p29 = scmp.eq.s32.totalorder %s10, 0
    %p30 = por %p28, %p29
    %p31 = scmp.ne.s32.totalorder %s20, %s23
    %p32 = scmp.eq.s32.totalorder %s15, 1
    %p33 = por %p31, %p32
    %p34 = scmp.ne.s32.totalorder %s23, %s24
    %p35 = scmp.eq.s32.totalorder %s15, 0
    %p36 = por %p34, %p35
    %p37 = scmp.ne.s32.totalorder %s23, %s24
    %p38 = scmp.eq.s32.totalorder %s16, 1
    %p39 = por %p37, %p38
    %p41 = scmp.ne.s32.totalorder %s24, %s40
    %p42 = scmp.eq.s32.totalorder %s16, 0
    %p43 = por %p41, %p42
    %s45 = sadd.s32 %s44, 1
    %p48 = scmp.eq.s32.totalorder %s10, 1
    %p49 = scmp.ne.s32.totalorder %s44, %s46
    %p50 = scmp.eq.s32.totalorder %s10, 0
    %p51 = por %p49, %p50
    %p52 = scmp.ne.s32.totalorder %s44, %s46
    %p53 = scmp.eq.s32.totalorder %s15, 1
    %p54 = por %p52, %p53
    %p55 = scmp.ne.s32.totalorder %s46, %s47
    %p56 = scmp.eq.s32.totalorder %s15, 0
    %p57 = por %p55, %p56
    %p58 = scmp.ne.s32.totalorder %s46, %s47
    %p59 = scmp.eq.s32.totalorder %s16, 1
    %p60 = por %p58, %p59
    %p62 = scmp.ne.s32.totalorder %s47, %s61
    %p63 = scmp.eq.s32.totalorder %s16, 0
    %p64 = por %p62, %p63
    %s66 = sadd.s32 %s65, 1
    %p69 = scmp.eq.s32.totalorder %s10, 1
    %p70 = scmp.ne.s32.totalorder %s65, %s67
    %p71 = scmp.eq.s32.totalorder %s10, 0
    %p72 = por %p70, %p71
    %p73 = scmp.ne.s32.totalorder %s65, %s67
    %p74 = scmp.eq.s32.totalorder %s15, 1
    %p75 = por %p73, %p74
    %p76 = scmp.ne.s32.totalorder %s67, %s68
    %p77 = scmp.eq.s32.totalorder %s15, 0
    %p78 = por %p76, %p77
    %p79 = scmp.ne.s32.totalorder %s67, %s68
    %p80 = scmp.eq.s32.totalorder %s16, 1
    %p81 = por %p79, %p80
    %p83 = scmp.ne.s32.totalorder %s68, %s82
    %p84 = scmp.eq.s32.totalorder %s16, 0
    %p85 = por %p83, %p84
    %s86 = ssub.s32 %s10, %s17
    %p87 = scmp.eq.s32.totalorder %s86, 0
    %s89 = sadd.s32 %s88, 1
    %s90 = scalar_select %p87, %s88, %s89
    %p93 = pneg %p87
    %p94 = scmp.eq.s32.totalorder %s10, 1
    %p95 = por %p93, %p94
    %p96 = scmp.ne.s32.totalorder %s88, %s91
    %p97 = scmp.eq.s32.totalorder %s10, 0
    %p98 = por %p96, %p97
    %p99 = scmp.ne.s32.totalorder %s88, %s91
    %p100 = scmp.eq.s32.totalorder %s15, 1
    %p101 = por %p99, %p100
    %p102 = scmp.ne.s32.totalorder %s91, %s92
    %p103 = scmp.eq.s32.totalorder %s15, 0
    %p104 = por %p102, %p103
    %p105 = scmp.ne.s32.totalorder %s91, %s92
    %p106 = scmp.eq.s32.totalorder %s16, 1
    %p107 = por %p105, %p106
    %p109 = scmp.ne.s32.totalorder %s92, %s108
    %p110 = scmp.eq.s32.totalorder %s16, 0
    %p111 = por %p109, %p110
    %s112 = ssub.s32 %s10, %s17
    %p113 = scmp.eq.s32.totalorder %s112, 0
    %s115 = sadd.s32 %s114, 1
    %s116 = scalar_select %p113, %s114, %s115
    %p119 = pneg %p113
    %p120 = scmp.eq.s32.totalorder %s10, 1
    %p121 = por %p119, %p120
    %p122 = scmp.ne.s32.totalorder %s114, %s117
    %p123 = scmp.eq.s32.totalorder %s10, 0
    %p124 = por %p122, %p123
    %p125 = scmp.ne.s32.totalorder %s114, %s117
    %p126 = scmp.eq.s32.totalorder %s15, 1
    %p127 = por %p125, %p126
    %p128 = scmp.ne.s32.totalorder %s117, %s118
    %p129 = scmp.eq.s32.totalorder %s15, 0
    %p130 = por %p128, %p129
    %p131 = scmp.ne.s32.totalorder %s117, %s118
    %p132 = scmp.eq.s32.totalorder %s16, 1
    %p133 = por %p131, %p132
    %p135 = scmp.ne.s32.totalorder %s118, %s134
    %p136 = scmp.eq.s32.totalorder %s16, 0
    %p137 = por %p135, %p136
    %p138 = scmp.le.s32.totalorder 1, %s10
    %p139 = scmp.lt.s32.totalorder %s10, 3
    %p140 = pnand %p138, %p139
    %p141 = pneg %p140
    // Predicated region
    $region9: #{decoder_tx_forward.29} parent=5 // pred_check
      _
    $region10: #{decoder_tx_forward.29} parent=5 // pred_check_branch
      %143 = sbr.rel (%p140) target = $region12
    $region11: #{decoder_tx_forward.29} parent=5 // pred_region
      %s144 = ssub.s32 %s10, 1
      // Predicated region
      $region13: #{decoder_tx_forward.29} parent=11 // pred_check
        %p145 = pneg %p57
      $region14: #{decoder_tx_forward.29} parent=11 // pred_check_branch
        %147 = sbr.rel (%p145) target = $region16
      $region15: #{decoder_tx_forward.29} parent=11 // pred_region
        _
      $region16: #{decoder_tx_forward.29} parent=11 // pred_fallthru
        _
      // Predicated region
      $region17: #{decoder_tx_forward.29} parent=11 // pred_check
        %p148 = pneg %p78
      $region18: #{decoder_tx_forward.29} parent=11 // pred_check_branch
        %150 = sbr.rel (%p148) target = $region20
      $region19: #{decoder_tx_forward.29} parent=11 // pred_region
        _
      $region20: #{decoder_tx_forward.29} parent=11 // pred_fallthru
        _
    $region12: #{decoder_tx_forward.29} parent=5 // pred_fallthru
      _
    %p151 = scmp.lt.s32.totalorder %s10, 2
    // Predicated region
    $region21: #{decoder_tx_forward.29} parent=5 // pred_check
      %p152 = pneg %p151
    $region22: #{decoder_tx_forward.29} parent=5 // pred_check_branch
      %154 = sbr.rel (%p152) target = $region24
    $region23: #{decoder_tx_forward.29} parent=5 // pred_region
      // Predicated region
      $region25: #{decoder_tx_forward.29} parent=23 // pred_check
        %p155 = pneg %p30
      $region26: #{decoder_tx_forward.29} parent=23 // pred_check_branch
        %157 = sbr.rel (%p155) target = $region28
      $region27: #{decoder_tx_forward.29} parent=23 // pred_region
        %p158 = scmp.lt.s32.totalorder %s10, 1
        %s159 = scalar_select %p158, %s10, 1
        %s160 = smul.addr %s159, 4
        %s161 = scalar_lea.vmem %s0, %s160
      $region28: #{decoder_tx_forward.29} parent=23 // pred_fallthru
        _
      // Predicated region
      $region29: #{decoder_tx_forward.29} parent=23 // pred_check
        %p162 = pneg %p98
      $region30: #{decoder_tx_forward.29} parent=23 // pred_check_branch
        %164 = sbr.rel (%p162) target = $region32
      $region31: #{decoder_tx_forward.29} parent=23 // pred_region
        %p165 = scmp.lt.s32.totalorder %s10, 1
        %s166 = scalar_select %p165, %s10, 1
        %s167 = smul.addr %s166, 8
        %s168 = scalar_lea.vmem %s3, %s167
      $region32: #{decoder_tx_forward.29} parent=23 // pred_fallthru
        _
    $region24: #{decoder_tx_forward.29} parent=5 // pred_fallthru
      _
    %p169 = scmp.le.s32.totalorder 1, %s10
    %p170 = scmp.lt.s32.totalorder %s10, 3
    %p171 = pnand %p169, %p170
    %p172 = pneg %p171
    // Predicated region
    $region33: #{decoder_tx_forward.29} parent=5 // pred_check
      _
    $region34: #{decoder_tx_forward.29} parent=5 // pred_check_branch
      %174 = sbr.rel (%p171) target = $region36
    $region35: #{decoder_tx_forward.29} parent=5 // pred_region
      %s175 = ssub.s32 %s10, 1
      %p176 = scmp.lt.s32.totalorder %s15, 1
      %s177 = scalar_select %p176, %s15, 1
      %s178 = smul.addr %s177, 4
      %s179 = scalar_lea.vmem %s0, %s178
      %p180 = pneg %p36
      %p181 = pneg %p33
      %p182 = pneg %p57
      %p183 = pneg %p54
      %p184 = pneg %p78
      %p185 = pneg %p75
      %p186 = scmp.lt.s32.totalorder %s15, 1
      %s187 = scalar_select %p186, %s15, 1
      %s188 = smul.addr %s187, 8
      %s189 = scalar_lea.vmem %s3, %s188
      %p190 = pneg %p104
      %p191 = pneg %p101
      %p192 = pneg %p130
      %p193 = pneg %p127
      %p194 = scmp.lt.s32.totalorder %s15, 1
      %s195 = scalar_select %p194, %s15, 1
      %s196 = smul.addr %s195, 8
      %s197 = scalar_lea.vmem %s4, %s196
      %p198 = scmp.lt.s32.totalorder %s15, 1
      %s199 = scalar_select %p198, %s15, 1
      %s200 = smul.addr %s199, 4
      %s201 = scalar_lea.vmem %s0, %s200
      %p202 = scmp.lt.s32.totalorder %s15, 1
      %s203 = scalar_select %p202, %s15, 1
      %s204 = smul.addr %s203, 8
      %s205 = scalar_lea.vmem %s3, %s204
      %p206 = scmp.lt.s32.totalorder %s15, 1
      %s207 = scalar_select %p206, %s15, 1
      %s208 = smul.addr %s207, 8
      %s209 = scalar_lea.vmem %s4, %s208
      %v211 = vld [vmem:[%s201] sm:$0xf]
      %v212 = vld [vmem:[%s1] sm:$0xf]
      %v213 = vld [vmem:[%s1 + $0x4] sm:$0xf]
      %v214 = vld [vmem:[%s1 + $0x8] sm:$0xf]
      %v215 = vld [vmem:[%s1 + $0xc] sm:$0xf]
      %v216 = vld [vmem:[%s1 + $0x10] sm:$0xf]
      %v217 = vld [vmem:[%s1 + $0x14] sm:$0xf]
      %v218 = vld [vmem:[%s1 + $0x18] sm:$0xf]
      %v219 = vld [vmem:[%s1 + $0x1c] sm:$0xf]
      %v220 = vld [vmem:[%s2] sm:$0x1]
      %v222 = vlaneseq
      %v223 = vshrl.u32 %v222, 7
      %v224 = vsub.s32 0, %v223
      %v225 = vrot.slane %v220, %v224
      %v235 = vunpack.c.l.b16 %v212
      %v236 = vunpack.c.l.b16 %v213
      %v237 = vunpack.c.l.b16 %v214
      %v238 = vunpack.c.l.b16 %v215
      %v239 = vunpack.c.l.b16 %v216
      %v240 = vunpack.c.l.b16 %v217
      %v241 = vunpack.c.l.b16 %v218
      %v242 = vunpack.c.l.b16 %v219
      %v243 = vpack.c.b16 %v236, %v235
      %v244 = vpack.c.b16 %v238, %v237
      %v245 = vpack.c.b16 %v240, %v239
      %v246 = vpack.c.b16 %v242, %v241
      %vm251 = vcmask 523264
      %v253 = vsel %vm251, %v211, 0
      %255 = vmatprep.subr.bf16.mxu0 0
      %256 = vmatpush1.bf16.msra.mxu0 0
      %257 = vmatprep.subr.bf16.mxu0 0
      %258 = vmatpush1.bf16.msra.mxu0 0
      %259 = vmatprep.subr.bf16.mxu0 0
      %260 = vmatpush1.bf16.msra.mxu0 0
      %261 = vmatprep.subr.bf16.mxu0 0
      %262 = vmatpush1.bf16.msra.mxu0 0
      %263 = vmatprep.subr.bf16.mxu0 0
      %264 = vmatpush1.bf16.msra.mxu0 %v246
      %265 = vmatprep.subr.bf16.mxu0 0
      %266 = vmatpush1.bf16.msra.mxu0 %v245
      %267 = vmatprep.subr.bf16.mxu0 0
      %268 = vmatpush1.bf16.msra.mxu0 %v244
      %269 = vmatprep.subr.bf16.mxu0 0
      %270 = vmatpush1.bf16.msra.mxu0 %v243
      %271 = vmatprep.subr.bf16.mxu0 0
      %272 = vmatpush2.bf16.msra.mxu0 0
      %273 = vmatprep.subr.bf16.mxu0 0
      %274 = vmatpush2.bf16.msra.mxu0 0
      %275 = vmatprep.subr.bf16.mxu0 0
      %276 = vmatpush2.bf16.msra.mxu0 0
      %277 = vmatprep.subr.bf16.mxu0 0
      %278 = vmatpush2.bf16.msra.mxu0 0
      %279 = vmatprep.subr.bf16.mxu0 0
      %280 = vmatpush2.bf16.msra.mxu0 0
      %281 = vmatprep.subr.bf16.mxu0 0
      %282 = vmatpush2.bf16.msra.mxu0 0
      %283 = vmatprep.subr.bf16.mxu0 0
      %284 = vmatpush2.bf16.msra.mxu0 0
      %285 = vmatprep.subr.bf16.mxu0 0
      %286 = vmatpush2.bf16.msra.mxu0 0
      %287 = vmatprep.mubr.bf16.mxu0 0
      %288 = vmatmul.mubr.bf16.gmra.mxu0 %v253
      %v289 = vpop.f32.mrf.mxu0
      %v290 = vadd.f32 %v225, %v289
      %v291 = vpop.f32.mrf.mxu0
      %v292 = vpop.f32.mrf.mxu0
      %v293 = vpop.f32.mrf.mxu0
      %294 = vdwg.mxu0
      %v295 = vld [vmem:[%s205] sm:$0xff]
      %v296 = vadd.f32 %v290, %v295
      %vm297 = vcmask 261120
      %298 = vst.msk [vmem:[%s209] sm:$0xff] %vm297, %v296
      %p299 = scmp.lt.s32.totalorder %s15, 1
      %s300 = scalar_select %p299, %s15, 1
      %s301 = smul.addr %s300, 8
      %s302 = scalar_lea.vmem %s4, %s301
      // Predicated region
      $region37: #{decoder_tx_forward.29} parent=35 // pred_check
        %p303 = pneg %p127
      $region38: #{decoder_tx_forward.29} parent=35 // pred_check_branch
        %305 = sbr.rel (%p303) target = $region40
      $region39: #{decoder_tx_forward.29} parent=35 // pred_region
        _
      $region40: #{decoder_tx_forward.29} parent=35 // pred_fallthru
        _
    $region36: #{decoder_tx_forward.29} parent=5 // pred_fallthru
      _
    %p306 = scmp.le.s32.totalorder 2, %s10
    // Predicated region
    $region41: #{decoder_tx_forward.29} parent=5 // pred_check
      %p307 = pneg %p306
    $region42: #{decoder_tx_forward.29} parent=5 // pred_check_branch
      %309 = sbr.rel (%p307) target = $region44
    $region43: #{decoder_tx_forward.29} parent=5 // pred_region
      %s310 = ssub.s32 %s10, 2
      // Predicated region
      $region45: #{decoder_tx_forward.29} parent=43 // pred_check
        %p311 = pneg %p133
      $region46: #{decoder_tx_forward.29} parent=43 // pred_check_branch
        %313 = sbr.rel (%p311) target = $region48
      $region47: #{decoder_tx_forward.29} parent=43 // pred_region
        %p314 = scmp.lt.s32.totalorder %s16, 1
        %s315 = scalar_select %p314, %s16, 1
        %s316 = smul.addr %s315, 8
        %s317 = scalar_lea.vmem %s4, %s316
      $region48: #{decoder_tx_forward.29} parent=43 // pred_fallthru
        _
    $region44: #{decoder_tx_forward.29} parent=5 // pred_fallthru
      _
  $region6: #{decoder_tx_forward.29} parent=0 // loop_footer
    %s14 = sadd.s32 1, %s10
  $region7: #{decoder_tx_forward.29} parent=0 // loop_footer_branch
    %9 = sbr.rel target = $region3
  $region8: #{decoder_tx_forward.29} parent=0 // loop_exit
    _

// kernel: decoder_tx_forward.39
$region0: #{decoder_tx_forward.39}
  #allocation0 [shape = 'u32[]', space=smem, size = 0x4, offset = 0x4, fixed_abs, tag = 'smem constant byte address 0x4 - core index']
  #allocation1 [shape = 'u32[144,128]{1,0:T(1,128)}', space=vmem, size = 0x12000, scoped, tag = 'internal scratch']
  %s0 = inlined_call_operand.vmem [shape: f32[16,32], index: 0, kind: input, shape index: {}]
  %s1 = inlined_call_operand.vmem [shape: f32[1,32], index: 1, kind: input, shape index: {}]
  %s2 = inlined_call_operand.vmem [shape: f32[1,32], index: 2, kind: input, shape index: {}]
  %s3 = inlined_call_operand.vmem [shape: bf16[32,128], index: 3, kind: input, shape index: {}]
  %s4 = inlined_call_operand.vmem [shape: f32[1,128], index: 4, kind: input, shape index: {}]
  %s5 = inlined_call_operand.vmem [shape: f32[16,128], index: 5, kind: output, shape index: {}]
  %s6 = sld [smem:[#allocation0]]
  $region53: #{decoder_tx_forward.39} parent=0
    _
  %s8 = ssub.s32 1, %s6
  %s9 = scalar_select 0, %s8, %s6
  loop: start=0, step=1, limit=4
  $region2: #{decoder_tx_forward.39} parent=0 // loop_pre_header
    _
  $region3: #{decoder_tx_forward.39} parent=0 // loop_header
    %s11 = sphi 0, %s15
    %p12 = scmp.ge.s32.totalorder %s11, 4
    %s21 = sphi 0, %s23
    %s24 = sphi 0, %s21
    %s25 = sphi 0, %s24
    %s41 = sphi 0, %s25
    %s45 = sphi 0, %s45
    %s47 = sphi 0, %s45
    %s48 = sphi 0, %s47
    %s62 = sphi 0, %s48
    %s66 = sphi 0, %s66
    %s68 = sphi 0, %s66
    %s69 = sphi 0, %s68
    %s83 = sphi 0, %s69
    %s87 = sphi 0, %s87
    %s89 = sphi 0, %s87
    %s90 = sphi 0, %s89
    %s104 = sphi 0, %s90
    %s108 = sphi 0, %s108
    %s110 = sphi 0, %s108
    %s111 = sphi 0, %s110
    %s125 = sphi 0, %s111
    %s131 = sphi 0, %s133
    %s134 = sphi 0, %s131
    %s135 = sphi 0, %s134
    %s151 = sphi 0, %s135
  $region4: #{decoder_tx_forward.39} parent=0 // loop_header_branch
    %14 = sbr.rel (%p12) target = $region8
  $region5: #{decoder_tx_forward.39} parent=0 // loop_body
    %s16 = ssub.s32 %s11, 1
    %s17 = ssub.s32 %s11, 2
    %s18 = sadd.s32 %s11, 1
    %s19 = ssub.s32 %s11, %s18
    %p20 = scmp.eq.s32.totalorder %s19, 0
    %s22 = sadd.s32 %s21, 1
    %s23 = scalar_select %p20, %s21, %s22
    %p26 = pneg %p20
    %p27 = scmp.eq.s32.totalorder %s11, 1
    %p28 = por %p26, %p27
    %p29 = scmp.ne.s32.totalorder %s21, %s24
    %p30 = scmp.eq.s32.totalorder %s11, 0
    %p31 = por %p29, %p30
    %p32 = scmp.ne.s32.totalorder %s21, %s24
    %p33 = scmp.eq.s32.totalorder %s16, 1
    %p34 = por %p32, %p33
    %p35 = scmp.ne.s32.totalorder %s24, %s25
    %p36 = scmp.eq.s32.totalorder %s16, 0
    %p37 = por %p35, %p36
    %p38 = scmp.ne.s32.totalorder %s24, %s25
    %p39 = scmp.eq.s32.totalorder %s17, 1
    %p40 = por %p38, %p39
    %p42 = scmp.ne.s32.totalorder %s25, %s41
    %p43 = scmp.eq.s32.totalorder %s17, 0
    %p44 = por %p42, %p43
    %s46 = sadd.s32 %s45, 1
    %p49 = scmp.eq.s32.totalorder %s11, 1
    %p50 = scmp.ne.s32.totalorder %s45, %s47
    %p51 = scmp.eq.s32.totalorder %s11, 0
    %p52 = por %p50, %p51
    %p53 = scmp.ne.s32.totalorder %s45, %s47
    %p54 = scmp.eq.s32.totalorder %s16, 1
    %p55 = por %p53, %p54
    %p56 = scmp.ne.s32.totalorder %s47, %s48
    %p57 = scmp.eq.s32.totalorder %s16, 0
    %p58 = por %p56, %p57
    %p59 = scmp.ne.s32.totalorder %s47, %s48
    %p60 = scmp.eq.s32.totalorder %s17, 1
    %p61 = por %p59, %p60
    %p63 = scmp.ne.s32.totalorder %s48, %s62
    %p64 = scmp.eq.s32.totalorder %s17, 0
    %p65 = por %p63, %p64
    %s67 = sadd.s32 %s66, 1
    %p70 = scmp.eq.s32.totalorder %s11, 1
    %p71 = scmp.ne.s32.totalorder %s66, %s68
    %p72 = scmp.eq.s32.totalorder %s11, 0
    %p73 = por %p71, %p72
    %p74 = scmp.ne.s32.totalorder %s66, %s68
    %p75 = scmp.eq.s32.totalorder %s16, 1
    %p76 = por %p74, %p75
    %p77 = scmp.ne.s32.totalorder %s68, %s69
    %p78 = scmp.eq.s32.totalorder %s16, 0
    %p79 = por %p77, %p78
    %p80 = scmp.ne.s32.totalorder %s68, %s69
    %p81 = scmp.eq.s32.totalorder %s17, 1
    %p82 = por %p80, %p81
    %p84 = scmp.ne.s32.totalorder %s69, %s83
    %p85 = scmp.eq.s32.totalorder %s17, 0
    %p86 = por %p84, %p85
    %s88 = sadd.s32 %s87, 1
    %p91 = scmp.eq.s32.totalorder %s11, 1
    %p92 = scmp.ne.s32.totalorder %s87, %s89
    %p93 = scmp.eq.s32.totalorder %s11, 0
    %p94 = por %p92, %p93
    %p95 = scmp.ne.s32.totalorder %s87, %s89
    %p96 = scmp.eq.s32.totalorder %s16, 1
    %p97 = por %p95, %p96
    %p98 = scmp.ne.s32.totalorder %s89, %s90
    %p99 = scmp.eq.s32.totalorder %s16, 0
    %p100 = por %p98, %p99
    %p101 = scmp.ne.s32.totalorder %s89, %s90
    %p102 = scmp.eq.s32.totalorder %s17, 1
    %p103 = por %p101, %p102
    %p105 = scmp.ne.s32.totalorder %s90, %s104
    %p106 = scmp.eq.s32.totalorder %s17, 0
    %p107 = por %p105, %p106
    %s109 = sadd.s32 %s108, 1
    %p112 = scmp.eq.s32.totalorder %s11, 1
    %p113 = scmp.ne.s32.totalorder %s108, %s110
    %p114 = scmp.eq.s32.totalorder %s11, 0
    %p115 = por %p113, %p114
    %p116 = scmp.ne.s32.totalorder %s108, %s110
    %p117 = scmp.eq.s32.totalorder %s16, 1
    %p118 = por %p116, %p117
    %p119 = scmp.ne.s32.totalorder %s110, %s111
    %p120 = scmp.eq.s32.totalorder %s16, 0
    %p121 = por %p119, %p120
    %p122 = scmp.ne.s32.totalorder %s110, %s111
    %p123 = scmp.eq.s32.totalorder %s17, 1
    %p124 = por %p122, %p123
    %p126 = scmp.ne.s32.totalorder %s111, %s125
    %p127 = scmp.eq.s32.totalorder %s17, 0
    %p128 = por %p126, %p127
    %s129 = ssub.s32 %s11, %s18
    %p130 = scmp.eq.s32.totalorder %s129, 0
    %s132 = sadd.s32 %s131, 1
    %s133 = scalar_select %p130, %s131, %s132
    %p136 = pneg %p130
    %p137 = scmp.eq.s32.totalorder %s11, 1
    %p138 = por %p136, %p137
    %p139 = scmp.ne.s32.totalorder %s131, %s134
    %p140 = scmp.eq.s32.totalorder %s11, 0
    %p141 = por %p139, %p140
    %p142 = scmp.ne.s32.totalorder %s131, %s134
    %p143 = scmp.eq.s32.totalorder %s16, 1
    %p144 = por %p142, %p143
    %p145 = scmp.ne.s32.totalorder %s134, %s135
    %p146 = scmp.eq.s32.totalorder %s16, 0
    %p147 = por %p145, %p146
    %p148 = scmp.ne.s32.totalorder %s134, %s135
    %p149 = scmp.eq.s32.totalorder %s17, 1
    %p150 = por %p148, %p149
    %p152 = scmp.ne.s32.totalorder %s135, %s151
    %p153 = scmp.eq.s32.totalorder %s17, 0
    %p154 = por %p152, %p153
    %p155 = scmp.le.s32.totalorder 1, %s11
    %p156 = scmp.lt.s32.totalorder %s11, 3
    %p157 = pnand %p155, %p156
    %p158 = pneg %p157
    // Predicated region
    $region9: #{decoder_tx_forward.39} parent=5 // pred_check
      _
    $region10: #{decoder_tx_forward.39} parent=5 // pred_check_branch
      %160 = sbr.rel (%p157) target = $region12
    $region11: #{decoder_tx_forward.39} parent=5 // pred_region
      %s161 = ssub.s32 %s11, 1
      // Predicated region
      $region13: #{decoder_tx_forward.39} parent=11 // pred_check
        %p162 = pneg %p58
      $region14: #{decoder_tx_forward.39} parent=11 // pred_check_branch
        %164 = sbr.rel (%p162) target = $region16
      $region15: #{decoder_tx_forward.39} parent=11 // pred_region
        _
      $region16: #{decoder_tx_forward.39} parent=11 // pred_fallthru
        _
      // Predicated region
      $region17: #{decoder_tx_forward.39} parent=11 // pred_check
        %p165 = pneg %p79
      $region18: #{decoder_tx_forward.39} parent=11 // pred_check_branch
        %167 = sbr.rel (%p165) target = $region20
      $region19: #{decoder_tx_forward.39} parent=11 // pred_region
        _
      $region20: #{decoder_tx_forward.39} parent=11 // pred_fallthru
        _
      // Predicated region
      $region21: #{decoder_tx_forward.39} parent=11 // pred_check
        %p168 = pneg %p100
      $region22: #{decoder_tx_forward.39} parent=11 // pred_check_branch
        %170 = sbr.rel (%p168) target = $region24
      $region23: #{decoder_tx_forward.39} parent=11 // pred_region
        _
      $region24: #{decoder_tx_forward.39} parent=11 // pred_fallthru
        _
      // Predicated region
      $region25: #{decoder_tx_forward.39} parent=11 // pred_check
        %p171 = pneg %p121
      $region26: #{decoder_tx_forward.39} parent=11 // pred_check_branch
        %173 = sbr.rel (%p171) target = $region28
      $region27: #{decoder_tx_forward.39} parent=11 // pred_region
        _
      $region28: #{decoder_tx_forward.39} parent=11 // pred_fallthru
        _
    $region12: #{decoder_tx_forward.39} parent=5 // pred_fallthru
      _
    %p174 = scmp.lt.s32.totalorder %s11, 2
    // Predicated region
    $region29: #{decoder_tx_forward.39} parent=5 // pred_check
      %p175 = pneg %p174
    $region30: #{decoder_tx_forward.39} parent=5 // pred_check_branch
      %177 = sbr.rel (%p175) target = $region32
    $region31: #{decoder_tx_forward.39} parent=5 // pred_region
      // Predicated region
      $region33: #{decoder_tx_forward.39} parent=31 // pred_check
        %p178 = pneg %p31
      $region34: #{decoder_tx_forward.39} parent=31 // pred_check_branch
        %180 = sbr.rel (%p178) target = $region36
      $region35: #{decoder_tx_forward.39} parent=31 // pred_region
        %p181 = scmp.lt.s32.totalorder %s11, 1
        %s182 = scalar_select %p181, %s11, 1
        %s183 = smul.addr %s182, 8
        %s184 = scalar_lea.vmem %s0, %s183
      $region36: #{decoder_tx_forward.39} parent=31 // pred_fallthru
        _
    $region32: #{decoder_tx_forward.39} parent=5 // pred_fallthru
      _
    %p185 = scmp.le.s32.totalorder 1, %s11
    %p186 = scmp.lt.s32.totalorder %s11, 3
    %p187 = pnand %p185, %p186
    %p188 = pneg %p187
    // Predicated region
    $region37: #{decoder_tx_forward.39} parent=5 // pred_check
      _
    $region38: #{decoder_tx_forward.39} parent=5 // pred_check_branch
      %190 = sbr.rel (%p187) target = $region40
    $region39: #{decoder_tx_forward.39} parent=5 // pred_region
      %s191 = ssub.s32 %s11, 1
      %p192 = scmp.lt.s32.totalorder %s16, 1
      %s193 = scalar_select %p192, %s16, 1
      %s194 = smul.addr %s193, 8
      %s195 = scalar_lea.vmem %s0, %s194
      %p196 = pneg %p37
      %p197 = pneg %p34
      %p198 = pneg %p58
      %p199 = pneg %p55
      %p200 = pneg %p79
      %p201 = pneg %p76
      %p202 = pneg %p100
      %p203 = pneg %p97
      %p204 = pneg %p121
      %p205 = pneg %p118
      %p206 = pneg %p147
      %p207 = pneg %p144
      %p208 = scmp.lt.s32.totalorder %s16, 1
      %s209 = scalar_select %p208, %s16, 1
      %s210 = smul.addr %s209, 8
      %s211 = scalar_lea.vmem %s5, %s210
      %p212 = scmp.lt.s32.totalorder %s16, 1
      %s213 = scalar_select %p212, %s16, 1
      %s214 = smul.addr %s213, 8
      %s215 = scalar_lea.vmem %s0, %s214
      %p216 = scmp.lt.s32.totalorder %s16, 1
      %s217 = scalar_select %p216, %s16, 1
      %s218 = smul.addr %s217, 8
      %s219 = scalar_lea.vmem %s5, %s218
      %v221 = vld [vmem:[%s215] sm:$0xff]
      %v222 = vld [vmem:[%s1] sm:$0x1]
      %v223 = vld [vmem:[%s2] sm:$0x1]
      %vm224 = vcmask 261120
      %v225 = vsel %vm224, %v221, 0.0
      %226 = vadd.xlane.f32.xlu0 %v225
      %v227 = vpop.xlane.xlu0 %226
      %v228 = vrcp.pop 32.0
      %v229 = vmul.f32 %v227, %v228
      %v230 = vsub.f32 %v221, %v229
      %v231 = vmul.f32 %v230, %v230
      %v232 = vsel %vm224, %v231, 0.0
      %233 = vadd.xlane.f32.xlu0 %v232
      %v234 = vpop.xlane.xlu0 %233
      %v235 = vmul.f32 %v234, %v228
      %v236 = vadd.f32 %v235, 1e-06
      %v237 = vrsqrt.pop %v236
      %v238 = vmul.f32 %v230, %v237
      %v240 = vlaneseq
      %v241 = vshrl.u32 %v240, 7
      %v242 = vsub.s32 0, %v241
      %v243 = vrot.slane %v222, %v242
      %v245 = vmul.f32 %v238, %v243
      %v247 = vlaneseq
      %v248 = vshrl.u32 %v247, 7
      %v249 = vsub.s32 0, %v248
      %v250 = vrot.slane %v223, %v249
      %v252 = vadd.f32 %v245, %v250
      %v253 = vpack.c.bf16 %v252, %v252
      %v254 = vld [vmem:[%s3] sm:$0xf]
      %v255 = vld [vmem:[%s3 + $0x4] sm:$0xf]
      %v256 = vld [vmem:[%s3 + $0x8] sm:$0xf]
      %v257 = vld [vmem:[%s3 + $0xc] sm:$0xf]
      %v258 = vld [vmem:[%s4] sm:$0x1]
      %v260 = vlaneseq
      %v261 = vshrl.u32 %v260, 7
      %v262 = vsub.s32 0, %v261
      %v263 = vrot.slane %v258, %v262
      %v269 = vunpack.c.l.b16 %v254
      %v270 = vunpack.c.l.b16 %v255
      %v271 = vunpack.c.l.b16 %v256
      %v272 = vunpack.c.l.b16 %v257
      %v273 = vpack.c.b16 %v270, %v269
      %v274 = vpack.c.b16 %v272, %v271
      %v278 = vsel %vm224, %v253, 0
      %280 = vmatprep.subr.bf16.mxu0 0
      %281 = vmatpush1.bf16.msra.mxu0 0
      %282 = vmatprep.subr.bf16.mxu0 0
      %283 = vmatpush1.bf16.msra.mxu0 0
      %284 = vmatprep.subr.bf16.mxu0 0
      %285 = vmatpush1.bf16.msra.mxu0 0
      %286 = vmatprep.subr.bf16.mxu0 0
      %287 = vmatpush1.bf16.msra.mxu0 0
      %288 = vmatprep.subr.bf16.mxu0 0
      %289 = vmatpush1.bf16.msra.mxu0 0
      %290 = vmatprep.subr.bf16.mxu0 0
      %291 = vmatpush1.bf16.msra.mxu0 0
      %292 = vmatprep.subr.bf16.mxu0 0
      %293 = vmatpush1.bf16.msra.mxu0 %v274
      %294 = vmatprep.subr.bf16.mxu0 0
      %295 = vmatpush1.bf16.msra.mxu0 %v273
      %296 = vmatprep.subr.bf16.mxu0 0
      %297 = vmatpush2.bf16.msra.mxu0 0
      %298 = vmatprep.subr.bf16.mxu0 0
      %299 = vmatpush2.bf16.msra.mxu0 0
      %300 = vmatprep.subr.bf16.mxu0 0
      %301 = vmatpush2.bf16.msra.mxu0 0
      %302 = vmatprep.subr.bf16.mxu0 0
      %303 = vmatpush2.bf16.msra.mxu0 0
      %304 = vmatprep.subr.bf16.mxu0 0
      %305 = vmatpush2.bf16.msra.mxu0 0
      %306 = vmatprep.subr.bf16.mxu0 0
      %307 = vmatpush2.bf16.msra.mxu0 0
      %308 = vmatprep.subr.bf16.mxu0 0
      %309 = vmatpush2.bf16.msra.mxu0 0
      %310 = vmatprep.subr.bf16.mxu0 0
      %311 = vmatpush2.bf16.msra.mxu0 0
      %312 = vmatprep.mubr.bf16.mxu0 0
      %313 = vmatmul.mubr.bf16.gmra.mxu0 %v278
      %v314 = vpop.f32.mrf.mxu0
      %v315 = vadd.f32 %v263, %v314
      %v316 = vpop.f32.mrf.mxu0
      %v317 = vpop.f32.mrf.mxu0
      %v318 = vpop.f32.mrf.mxu0
      %319 = vdwg.mxu0
      %320 = vst [vmem:[%s219] sm:$0xff] %v315
      %p321 = scmp.lt.s32.totalorder %s16, 1
      %s322 = scalar_select %p321, %s16, 1
      %s323 = smul.addr %s322, 8
      %s324 = scalar_lea.vmem %s5, %s323
      // Predicated region
      $region41: #{decoder_tx_forward.39} parent=39 // pred_check
        %p325 = pneg %p144
      $region42: #{decoder_tx_forward.39} parent=39 // pred_check_branch
        %327 = sbr.rel (%p325) target = $region44
      $region43: #{decoder_tx_forward.39} parent=39 // pred_region
        _
      $region44: #{decoder_tx_forward.39} parent=39 // pred_fallthru
        _
    $region40: #{decoder_tx_forward.39} parent=5 // pred_fallthru
      _
    %p328 = scmp.le.s32.totalorder 2, %s11
    // Predicated region
    $region45: #{decoder_tx_forward.39} parent=5 // pred_check
      %p329 = pneg %p328
    $region46: #{decoder_tx_forward.39} parent=5 // pred_check_branch
      %331 = sbr.rel (%p329) target = $region48
    $region47: #{decoder_tx_forward.39} parent=5 // pred_region
      %s332 = ssub.s32 %s11, 2
      // Predicated region
      $region49: #{decoder_tx_forward.39} parent=47 // pred_check
        %p333 = pneg %p150
      $region50: #{decoder_tx_forward.39} parent=47 // pred_check_branch
        %335 = sbr.rel (%p333) target = $region52
      $region51: #{decoder_tx_forward.39} parent=47 // pred_region
        %p336 = scmp.lt.s32.totalorder %s17, 1
        %s337 = scalar_select %p336, %s17, 1
        %s338 = smul.addr %s337, 8
        %s339 = scalar_lea.vmem %s5, %s338
      $region52: #{decoder_tx_forward.39} parent=47 // pred_fallthru
        _
    $region48: #{decoder_tx_forward.39} parent=5 // pred_fallthru
      _
  $region6: #{decoder_tx_forward.39} parent=0 // loop_footer
    %s15 = sadd.s32 1, %s11
  $region7: #{decoder_tx_forward.39} parent=0 // loop_footer_branch
    %10 = sbr.rel target = $region3
  $region8: #{decoder_tx_forward.39} parent=0 // loop_exit
    _

// kernel: decoder_tx_forward.26
$region0: #{decoder_tx_forward.26}
  #allocation0 [shape = 'u32[]', space=smem, size = 0x4, offset = 0x4, fixed_abs, tag = 'smem constant byte address 0x4 - core index']
  #allocation1 [shape = 'u32[144,128]{1,0:T(1,128)}', space=vmem, size = 0x12000, scoped, tag = 'internal scratch']
  #allocation2 [shape = 's32[1]{0}', space=sflag, size = 0x4, scoped, tag = 'scoped memory for decoder_tx_forward.26']
  #allocation3 [shape = 'u8[512]{0}', space=smem, size = 0x200, scoped, tag = 'prefetched SMEM operand 0']
  %s0 = inlined_call_operand.vmem [shape: s32[2], index: 0, kind: input, shape index: {}]
  %s1 = inlined_call_operand.vmem [shape: bf16[2,8,32], index: 1, kind: input, shape index: {}]
  %s2 = inlined_call_operand.vmem [shape: bf16[2,16,64], index: 2, kind: input, shape index: {}]
  %s3 = inlined_call_operand.vmem [shape: bf16[2,8,32], index: 3, kind: output, shape index: {}]
  %s4 = sld [smem:[#allocation0]]
  $region41: #{decoder_tx_forward.26} parent=0
    _
  %s6 = ssub.s32 1, %s4
  %s7 = scalar_select 0, %s6, %s4
  %s8 = sshll.u32 %s0, 4
  %s9 = int_to_ptr.vmem [resolvable:$true] %s8
  %11 = dma.vmem_to_smem %s9, 16, [#allocation3], [#allocation2]
  %12 = dma.done [#allocation2], 16
  %13 = sfence
  loop: start=0, step=1, limit=4
  $region2: #{decoder_tx_forward.26} parent=0 // loop_pre_header
    _
  $region3: #{decoder_tx_forward.26} parent=0 // loop_header
    %s15 = sphi 0, %s19
    %p16 = scmp.ge.s32.totalorder %s15, 4
    %s22 = sphi 0, %s34
    %s23 = sphi 0, %s30
    %s24 = sphi 0, %s22
    %s25 = sphi 0, %s23
    %s26 = sphi 0, %s24
    %s27 = sphi 0, %s25
    %s39 = sphi 0, %s41
    %s42 = sphi 0, %s39
    %s43 = sphi 0, %s42
    %s59 = sphi 0, %s43
    %s65 = sphi 0, %s67
    %s68 = sphi 0, %s65
    %s69 = sphi 0, %s68
    %s85 = sphi 0, %s69
    %s93 = sphi 0, %s95
    %s96 = sphi 0, %s93
    %s97 = sphi 0, %s96
    %s113 = sphi 0, %s97
  $region4: #{decoder_tx_forward.26} parent=0 // loop_header_branch
    %18 = sbr.rel (%p16) target = $region8
  $region5: #{decoder_tx_forward.26} parent=0 // loop_body
    %s20 = ssub.s32 %s15, 1
    %s21 = ssub.s32 %s15, 2
    %s28 = sadd.s32 1, %s23
    %p29 = scmp.ge.s32.totalorder %s28, 1
    %s30 = scalar_select %p29, 0, %s28
    %s31 = sadd.s32 1, %s22
    %s32 = scalar_select %p29, %s31, %s22
    %p33 = scmp.ge.s32.totalorder %s32, 2
    %s34 = scalar_select %p33, 0, %s32
    %s35 = ssub.s32 %s22, %s34
    %s36 = ssub.s32 %s23, %s30
    %s37 = sor.u32 %s35, %s36
    %p38 = scmp.eq.s32.totalorder %s37, 0
    %s40 = sadd.s32 %s39, 1
    %s41 = scalar_select %p38, %s39, %s40
    %p44 = pneg %p38
    %p45 = scmp.eq.s32.totalorder %s15, 1
    %p46 = por %p44, %p45
    %p47 = scmp.ne.s32.totalorder %s39, %s42
    %p48 = scmp.eq.s32.totalorder %s15, 0
    %p49 = por %p47, %p48
    %p50 = scmp.ne.s32.totalorder %s39, %s42
    %p51 = scmp.eq.s32.totalorder %s20, 1
    %p52 = por %p50, %p51
    %p53 = scmp.ne.s32.totalorder %s42, %s43
    %p54 = scmp.eq.s32.totalorder %s20, 0
    %p55 = por %p53, %p54
    %p56 = scmp.ne.s32.totalorder %s42, %s43
    %p57 = scmp.eq.s32.totalorder %s21, 1
    %p58 = por %p56, %p57
    %p60 = scmp.ne.s32.totalorder %s43, %s59
    %p61 = scmp.eq.s32.totalorder %s21, 0
    %p62 = por %p60, %p61
    %s63 = ssub.s32 %s22, %s34
    %p64 = scmp.eq.s32.totalorder %s63, 0
    %s66 = sadd.s32 %s65, 1
    %s67 = scalar_select %p64, %s65, %s66
    %p70 = pneg %p64
    %p71 = scmp.eq.s32.totalorder %s15, 1
    %p72 = por %p70, %p71
    %p73 = scmp.ne.s32.totalorder %s65, %s68
    %p74 = scmp.eq.s32.totalorder %s15, 0
    %p75 = por %p73, %p74
    %p76 = scmp.ne.s32.totalorder %s65, %s68
    %p77 = scmp.eq.s32.totalorder %s20, 1
    %p78 = por %p76, %p77
    %p79 = scmp.ne.s32.totalorder %s68, %s69
    %p80 = scmp.eq.s32.totalorder %s20, 0
    %p81 = por %p79, %p80
    %p82 = scmp.ne.s32.totalorder %s68, %s69
    %p83 = scmp.eq.s32.totalorder %s21, 1
    %p84 = por %p82, %p83
    %p86 = scmp.ne.s32.totalorder %s69, %s85
    %p87 = scmp.eq.s32.totalorder %s21, 0
    %p88 = por %p86, %p87
    %s89 = ssub.s32 %s22, %s34
    %s90 = ssub.s32 %s23, %s30
    %s91 = sor.u32 %s89, %s90
    %p92 = scmp.eq.s32.totalorder %s91, 0
    %s94 = sadd.s32 %s93, 1
    %s95 = scalar_select %p92, %s93, %s94
    %p98 = pneg %p92
    %p99 = scmp.eq.s32.totalorder %s15, 1
    %p100 = por %p98, %p99
    %p101 = scmp.ne.s32.totalorder %s93, %s96
    %p102 = scmp.eq.s32.totalorder %s15, 0
    %p103 = por %p101, %p102
    %p104 = scmp.ne.s32.totalorder %s93, %s96
    %p105 = scmp.eq.s32.totalorder %s20, 1
    %p106 = por %p104, %p105
    %p107 = scmp.ne.s32.totalorder %s96, %s97
    %p108 = scmp.eq.s32.totalorder %s20, 0
    %p109 = por %p107, %p108
    %p110 = scmp.ne.s32.totalorder %s96, %s97
    %p111 = scmp.eq.s32.totalorder %s21, 1
    %p112 = por %p110, %p111
    %p114 = scmp.ne.s32.totalorder %s97, %s113
    %p115 = scmp.eq.s32.totalorder %s21, 0
    %p116 = por %p114, %p115
    %p117 = scmp.le.s32.totalorder 1, %s15
    %p118 = scmp.lt.s32.totalorder %s15, 3
    %p119 = pnand %p117, %p118
    %p120 = pneg %p119
    // Predicated region
    $region9: #{decoder_tx_forward.26} parent=5 // pred_check
      _
    $region10: #{decoder_tx_forward.26} parent=5 // pred_check_branch
      %122 = sbr.rel (%p119) target = $region12
    $region11: #{decoder_tx_forward.26} parent=5 // pred_region
      %s123 = ssub.s32 %s15, 1
    $region12: #{decoder_tx_forward.26} parent=5 // pred_fallthru
      _
    %p124 = scmp.lt.s32.totalorder %s15, 2
    // Predicated region
    $region13: #{decoder_tx_forward.26} parent=5 // pred_check
      %p125 = pneg %p124
    $region14: #{decoder_tx_forward.26} parent=5 // pred_check_branch
      %127 = sbr.rel (%p125) target = $region16
    $region15: #{decoder_tx_forward.26} parent=5 // pred_region
      // Predicated region
      $region17: #{decoder_tx_forward.26} parent=15 // pred_check
        %p128 = pneg %p49
      $region18: #{decoder_tx_forward.26} parent=15 // pred_check_branch
        %130 = sbr.rel (%p128) target = $region20
      $region19: #{decoder_tx_forward.26} parent=15 // pred_region
        %p131 = scmp.lt.s32.totalorder %s22, 1
        %s132 = scalar_select %p131, %s22, 1
        %p133 = scmp.lt.s32.totalorder %s23, 0
        %s134 = scalar_select %p133, %s23, 0
        %s135 = sadd.s32 %s134, %s132
        %s136 = smul.addr %s135, 4
        %s137 = scalar_lea.vmem %s1, %s136
      $region20: #{decoder_tx_forward.26} parent=15 // pred_fallthru
        _
      // Predicated region
      $region21: #{decoder_tx_forward.26} parent=15 // pred_check
        %p138 = pneg %p75
      $region22: #{decoder_tx_forward.26} parent=15 // pred_check_branch
        %140 = sbr.rel (%p138) target = $region24
      $region23: #{decoder_tx_forward.26} parent=15 // pred_region
        %p141 = scmp.lt.s32.totalorder %s22, 1
        %s142 = scalar_select %p141, %s22, 1
        %s143 = smul.addr %s142, 2
        %s144 = smul.addr %s143, 4
        %s145 = scalar_lea.vmem %s2, %s144
      $region24: #{decoder_tx_forward.26} parent=15 // pred_fallthru
        _
    $region16: #{decoder_tx_forward.26} parent=5 // pred_fallthru
      _
    %p146 = scmp.le.s32.totalorder 1, %s15
    %p147 = scmp.lt.s32.totalorder %s15, 3
    %p148 = pnand %p146, %p147
    %p149 = pneg %p148
    // Predicated region
    $region25: #{decoder_tx_forward.26} parent=5 // pred_check
      _
    $region26: #{decoder_tx_forward.26} parent=5 // pred_check_branch
      %151 = sbr.rel (%p148) target = $region28
    $region27: #{decoder_tx_forward.26} parent=5 // pred_region
      %s152 = ssub.s32 %s15, 1
      %p153 = scmp.lt.s32.totalorder %s24, 1
      %s154 = scalar_select %p153, %s24, 1
      %p155 = scmp.lt.s32.totalorder %s25, 0
      %s156 = scalar_select %p155, %s25, 0
      %s157 = sadd.s32 %s156, %s154
      %s158 = smul.addr %s157, 4
      %s159 = scalar_lea.vmem %s1, %s158
      %p160 = pneg %p55
      %p161 = pneg %p52
      %p162 = scmp.lt.s32.totalorder %s24, 1
      %s163 = scalar_select %p162, %s24, 1
      %s164 = smul.addr %s163, 2
      %s165 = smul.addr %s164, 4
      %s166 = scalar_lea.vmem %s2, %s165
      %p167 = pneg %p81
      %p168 = pneg %p78
      %p169 = pneg %p109
      %p170 = pneg %p106
      %p171 = scmp.lt.s32.totalorder %s24, 1
      %s172 = scalar_select %p171, %s24, 1
      %p173 = scmp.lt.s32.totalorder %s25, 0
      %s174 = scalar_select %p173, %s25, 0
      %s175 = sadd.s32 %s174, %s172
      %s176 = smul.addr %s175, 4
      %s177 = scalar_lea.vmem %s3, %s176
      %p178 = scmp.lt.s32.totalorder %s24, 1
      %s179 = scalar_select %p178, %s24, 1
      %p180 = scmp.lt.s32.totalorder %s25, 0
      %s181 = scalar_select %p180, %s25, 0
      %s182 = sadd.s32 %s181, %s179
      %s183 = smul.addr %s182, 4
      %s184 = scalar_lea.vmem %s1, %s183
      %p185 = scmp.lt.s32.totalorder %s24, 1
      %s186 = scalar_select %p185, %s24, 1
      %s187 = smul.addr %s186, 2
      %s188 = smul.addr %s187, 4
      %s189 = scalar_lea.vmem %s2, %s188
      %p190 = scmp.lt.s32.totalorder %s24, 1
      %s191 = scalar_select %p190, %s24, 1
      %p192 = scmp.lt.s32.totalorder %s25, 0
      %s193 = scalar_select %p192, %s25, 0
      %s194 = sadd.s32 %s193, %s191
      %s195 = smul.addr %s194, 4
      %s196 = scalar_lea.vmem %s3, %s195
      %s198 = sld [smem:[#allocation3 + %s24]]
      %v199 = vld [vmem:[%s184] sm:$0xf]
      %v200 = vld [vmem:[%s189] sm:$0xf]
      %v201 = vld [vmem:[%s189 + $0x4] sm:$0xf]
      %v202 = vlaneseq
      %v203 = vand.u32 %v202, 127
      %v204 = vstv %s198
      %vm205 = vcmp.ge.s32.totalorder %v203, %v204
      %v206 = vsel %vm205, -1e+09, 0.0
      %v209 = vunpack.c.l.b16 %v200
      %v210 = vunpack.c.l.b16 %v201
      %v211 = vpack.c.b16 %v210, %v209
      %vm212 = vcmask 64512
      %v214 = vsel %vm212, %v199, 0
      %v217 = vsel %vm212, %v211, 0
      %219 = vmatprep.subr.bf16.mxu0 0
      %220 = vmatpush1.bf16.xpose.msra.mxu0 0
      %221 = vmatprep.subr.bf16.mxu0 0
      %222 = vmatpush1.bf16.xpose.msra.mxu0 0
      %223 = vmatprep.subr.bf16.mxu0 0
      %224 = vmatpush1.bf16.xpose.msra.mxu0 0
      %225 = vmatprep.subr.bf16.mxu0 0
      %226 = vmatpush1.bf16.xpose.msra.mxu0 0
      %227 = vmatprep.subr.bf16.mxu0 0
      %228 = vmatpush1.bf16.xpose.msra.mxu0 0
      %229 = vmatprep.subr.bf16.mxu0 0
      %230 = vmatpush1.bf16.xpose.msra.mxu0 0
      %231 = vmatprep.subr.bf16.mxu0 0
      %232 = vmatpush1.bf16.xpose.msra.mxu0 0
      %233 = vmatprep.subr.bf16.mxu0 0
      %234 = vmatpush1.bf16.xpose.msra.mxu0 %v217
      %235 = vmatprep.subr.bf16.mxu0 0
      %236 = vmatpush2.bf16.xpose.msra.mxu0 0
      %237 = vmatprep.subr.bf16.mxu0 0
      %238 = vmatpush2.bf16.xpose.msra.mxu0 0
      %239 = vmatprep.subr.bf16.mxu0 0
      %240 = vmatpush2.bf16.xpose.msra.mxu0 0
      %241 = vmatprep.subr.bf16.mxu0 0
      %242 = vmatpush2.bf16.xpose.msra.mxu0 0
      %243 = vmatprep.subr.bf16.mxu0 0
      %244 = vmatpush2.bf16.xpose.msra.mxu0 0
      %245 = vmatprep.subr.bf16.mxu0 0
      %246 = vmatpush2.bf16.xpose.msra.mxu0 0
      %247 = vmatprep.subr.bf16.mxu0 0
      %248 = vmatpush2.bf16.xpose.msra.mxu0 0
      %249 = vmatprep.subr.bf16.mxu0 0
      %250 = vmatpush2.bf16.xpose.msra.mxu0 0
      %251 = vmatprep.mubr.bf16.mxu0 0
      %252 = vmatmul.mubr.bf16.gmra.mxu0 %v214
      %v253 = vpop.f32.mrf.mxu0
      %v254 = vadd.f32 0.0, %v253
      %v255 = vpop.f32.mrf.mxu0
      %v256 = vpop.f32.mrf.mxu0
      %v257 = vpop.f32.mrf.mxu0
      %258 = vdwg.mxu0
      %v259 = vmul.f32 %v254, 0.35355338
      %v260 = vadd.f32 %v259, %v206
      %vm261 = vcmask 130048
      %v262 = vsel %vm261, %v260, -inf
      %263 = vmax.xlane.f32.xlu0 %v262
      %v264 = vpop.xlane.xlu0 %263
      %v265 = vsub.f32 %v260, %v264
      %v266 = vmul.f32 %v265, 1.442695
      %v267 = vpow.pop %v266
      %v268 = vsel %vm261, %v267, 0.0
      %269 = vadd.xlane.f32.xlu0 %v268
      %v270 = vpop.xlane.xlu0 %269
      %v271 = vrcp.pop %v270
      %v272 = vmul.f32 %v267, %v271
      %v273 = vpack.c.bf16 %v272, %v272
      %274 = vrot.lane.b32.xlu0 %v211, 96
      %v275 = vpop.permute.xlu0 %274
      %v278 = vsel %vm261, %v273, 0
      %280 = vmatprep.subr.bf16.mxu0 0
      %281 = vmatpush1.bf16.msra.mxu0 0
      %282 = vmatprep.subr.bf16.mxu0 0
      %283 = vmatpush1.bf16.msra.mxu0 0
      %284 = vmatprep.subr.bf16.mxu0 0
      %285 = vmatpush1.bf16.msra.mxu0 0
      %286 = vmatprep.subr.bf16.mxu0 0
      %287 = vmatpush1.bf16.msra.mxu0 0
      %288 = vmatprep.subr.bf16.mxu0 0
      %289 = vmatpush1.bf16.msra.mxu0 0
      %290 = vmatprep.subr.bf16.mxu0 0
      %291 = vmatpush1.bf16.msra.mxu0 0
      %292 = vmatprep.subr.bf16.mxu0 0
      %293 = vmatpush1.bf16.msra.mxu0 0
      %294 = vmatprep.subr.bf16.mxu0 0
      %295 = vmatpush1.bf16.msra.mxu0 %v275
      %296 = vmatprep.subr.bf16.mxu0 0
      %297 = vmatpush2.bf16.msra.mxu0 0
      %298 = vmatprep.subr.bf16.mxu0 0
      %299 = vmatpush2.bf16.msra.mxu0 0
      %300 = vmatprep.subr.bf16.mxu0 0
      %301 = vmatpush2.bf16.msra.mxu0 0
      %302 = vmatprep.subr.bf16.mxu0 0
      %303 = vmatpush2.bf16.msra.mxu0 0
      %304 = vmatprep.subr.bf16.mxu0 0
      %305 = vmatpush2.bf16.msra.mxu0 0
      %306 = vmatprep.subr.bf16.mxu0 0
      %307 = vmatpush2.bf16.msra.mxu0 0
      %308 = vmatprep.subr.bf16.mxu0 0
      %309 = vmatpush2.bf16.msra.mxu0 0
      %310 = vmatprep.subr.bf16.mxu0 0
      %311 = vmatpush2.bf16.msra.mxu0 0
      %312 = vmatprep.mubr.bf16.mxu0 0
      %313 = vmatmul.mubr.bf16.gmra.mxu0 %v278
      %v314 = vpop.f32.mrf.mxu0
      %v315 = vadd.f32 0.0, %v314
      %v316 = vpop.f32.mrf.mxu0
      %v317 = vpop.f32.mrf.mxu0
      %v318 = vpop.f32.mrf.mxu0
      %319 = vdwg.mxu0
      %v321 = vunpack.c.l.b16 %v199
      %v322 = vpack.c.b16 %v321, %v321
      %323 = vrot.lane.b32.xlu0 %v322, 120
      %v324 = vpop.permute.xlu0 %323
      %325 = vrot.lane.b32.xlu0 %v211, 120
      %v326 = vpop.permute.xlu0 %325
      %v328 = vsel %vm212, %v324, 0
      %v331 = vsel %vm212, %v326, 0
      %333 = vmatprep.subr.bf16.mxu0 0
      %334 = vmatpush1.bf16.xpose.msra.mxu0 0
      %335 = vmatprep.subr.bf16.mxu0 0
      %336 = vmatpush1.bf16.xpose.msra.mxu0 0
      %337 = vmatprep.subr.bf16.mxu0 0
      %338 = vmatpush1.bf16.xpose.msra.mxu0 0
      %339 = vmatprep.subr.bf16.mxu0 0
      %340 = vmatpush1.bf16.xpose.msra.mxu0 0
      %341 = vmatprep.subr.bf16.mxu0 0
      %342 = vmatpush1.bf16.xpose.msra.mxu0 0
      %343 = vmatprep.subr.bf16.mxu0 0
      %344 = vmatpush1.bf16.xpose.msra.mxu0 0
      %345 = vmatprep.subr.bf16.mxu0 0
      %346 = vmatpush1.bf16.xpose.msra.mxu0 0
      %347 = vmatprep.subr.bf16.mxu0 0
      %348 = vmatpush1.bf16.xpose.msra.mxu0 %v331
      %349 = vmatprep.subr.bf16.mxu0 0
      %350 = vmatpush2.bf16.xpose.msra.mxu0 0
      %351 = vmatprep.subr.bf16.mxu0 0
      %352 = vmatpush2.bf16.xpose.msra.mxu0 0
      %353 = vmatprep.subr.bf16.mxu0 0
      %354 = vmatpush2.bf16.xpose.msra.mxu0 0
      %355 = vmatprep.subr.bf16.mxu0 0
      %356 = vmatpush2.bf16.xpose.msra.mxu0 0
      %357 = vmatprep.subr.bf16.mxu0 0
      %358 = vmatpush2.bf16.xpose.msra.mxu0 0
      %359 = vmatprep.subr.bf16.mxu0 0
      %360 = vmatpush2.bf16.xpose.msra.mxu0 0
      %361 = vmatprep.subr.bf16.mxu0 0
      %362 = vmatpush2.bf16.xpose.msra.mxu0 0
      %363 = vmatprep.subr.bf16.mxu0 0
      %364 = vmatpush2.bf16.xpose.msra.mxu0 0
      %365 = vmatprep.mubr.bf16.mxu0 0
      %366 = vmatmul.mubr.bf16.gmra.mxu0 %v328
      %v367 = vpop.f32.mrf.mxu0
      %v368 = vadd.f32 0.0, %v367
      %v369 = vpop.f32.mrf.mxu0
      %v370 = vpop.f32.mrf.mxu0
      %v371 = vpop.f32.mrf.mxu0
      %372 = vdwg.mxu0
      %v373 = vmul.f32 %v368, 0.35355338
      %v374 = vadd.f32 %v373, %v206
      %v375 = vsel %vm261, %v374, -inf
      %376 = vmax.xlane.f32.xlu0 %v375
      %v377 = vpop.xlane.xlu0 %376
      %v378 = vsub.f32 %v374, %v377
      %v379 = vmul.f32 %v378, 1.442695
      %v380 = vpow.pop %v379
      %v381 = vsel %vm261, %v380, 0.0
      %382 = vadd.xlane.f32.xlu0 %v381
      %v383 = vpop.xlane.xlu0 %382
      %v384 = vrcp.pop %v383
      %v385 = vmul.f32 %v380, %v384
      %v386 = vpack.c.bf16 %v385, %v385
      %387 = vrot.lane.b32.xlu0 %v211, 88
      %v388 = vpop.permute.xlu0 %387
      %v391 = vsel %vm261, %v386, 0
      %393 = vmatprep.subr.bf16.mxu0 0
      %394 = vmatpush1.bf16.msra.mxu0 0
      %395 = vmatprep.subr.bf16.mxu0 0
      %396 = vmatpush1.bf16.msra.mxu0 0
      %397 = vmatprep.subr.bf16.mxu0 0
      %398 = vmatpush1.bf16.msra.mxu0 0
      %399 = vmatprep.subr.bf16.mxu0 0
      %400 = vmatpush1.bf16.msra.mxu0 0
      %401 = vmatprep.subr.bf16.mxu0 0
      %402 = vmatpush1.bf16.msra.mxu0 0
      %403 = vmatprep.subr.bf16.mxu0 0
      %404 = vmatpush1.bf16.msra.mxu0 0
      %405 = vmatprep.subr.bf16.mxu0 0
      %406 = vmatpush1.bf16.msra.mxu0 0
      %407 = vmatprep.subr.bf16.mxu0 0
      %408 = vmatpush1.bf16.msra.mxu0 %v388
      %409 = vmatprep.subr.bf16.mxu0 0
      %410 = vmatpush2.bf16.msra.mxu0 0
      %411 = vmatprep.subr.bf16.mxu0 0
      %412 = vmatpush2.bf16.msra.mxu0 0
      %413 = vmatprep.subr.bf16.mxu0 0
      %414 = vmatpush2.bf16.msra.mxu0 0
      %415 = vmatprep.subr.bf16.mxu0 0
      %416 = vmatpush2.bf16.msra.mxu0 0
      %417 = vmatprep.subr.bf16.mxu0 0
      %418 = vmatpush2.bf16.msra.mxu0 0
      %419 = vmatprep.subr.bf16.mxu0 0
      %420 = vmatpush2.bf16.msra.mxu0 0
      %421 = vmatprep.subr.bf16.mxu0 0
      %422 = vmatpush2.bf16.msra.mxu0 0
      %423 = vmatprep.subr.bf16.mxu0 0
      %424 = vmatpush2.bf16.msra.mxu0 0
      %425 = vmatprep.mubr.bf16.mxu0 0
      %426 = vmatmul.mubr.bf16.gmra.mxu0 %v391
      %v427 = vpop.f32.mrf.mxu0
      %v428 = vadd.f32 0.0, %v427
      %v429 = vpop.f32.mrf.mxu0
      %v430 = vpop.f32.mrf.mxu0
      %v431 = vpop.f32.mrf.mxu0
      %432 = vdwg.mxu0
      %433 = vrot.lane.b32.xlu0 %v322, 112
      %v434 = vpop.permute.xlu0 %433
      %435 = vrot.lane.b32.xlu0 %v211, 112
      %v436 = vpop.permute.xlu0 %435
      %v438 = vsel %vm212, %v434, 0
      %v441 = vsel %vm212, %v436, 0
      %443 = vmatprep.subr.bf16.mxu0 0
      %444 = vmatpush1.bf16.xpose.msra.mxu0 0
      %445 = vmatprep.subr.bf16.mxu0 0
      %446 = vmatpush1.bf16.xpose.msra.mxu0 0
      %447 = vmatprep.subr.bf16.mxu0 0
      %448 = vmatpush1.bf16.xpose.msra.mxu0 0
      %449 = vmatprep.subr.bf16.mxu0 0
      %450 = vmatpush1.bf16.xpose.msra.mxu0 0
      %451 = vmatprep.subr.bf16.mxu0 0
      %452 = vmatpush1.bf16.xpose.msra.mxu0 0
      %453 = vmatprep.subr.bf16.mxu0 0
      %454 = vmatpush1.bf16.xpose.msra.mxu0 0
      %455 = vmatprep.subr.bf16.mxu0 0
      %456 = vmatpush1.bf16.xpose.msra.mxu0 0
      %457 = vmatprep.subr.bf16.mxu0 0
      %458 = vmatpush1.bf16.xpose.msra.mxu0 %v441
      %459 = vmatprep.subr.bf16.mxu0 0
      %460 = vmatpush2.bf16.xpose.msra.mxu0 0
      %461 = vmatprep.subr.bf16.mxu0 0
      %462 = vmatpush2.bf16.xpose.msra.mxu0 0
      %463 = vmatprep.subr.bf16.mxu0 0
      %464 = vmatpush2.bf16.xpose.msra.mxu0 0
      %465 = vmatprep.subr.bf16.mxu0 0
      %466 = vmatpush2.bf16.xpose.msra.mxu0 0
      %467 = vmatprep.subr.bf16.mxu0 0
      %468 = vmatpush2.bf16.xpose.msra.mxu0 0
      %469 = vmatprep.subr.bf16.mxu0 0
      %470 = vmatpush2.bf16.xpose.msra.mxu0 0
      %471 = vmatprep.subr.bf16.mxu0 0
      %472 = vmatpush2.bf16.xpose.msra.mxu0 0
      %473 = vmatprep.subr.bf16.mxu0 0
      %474 = vmatpush2.bf16.xpose.msra.mxu0 0
      %475 = vmatprep.mubr.bf16.mxu0 0
      %476 = vmatmul.mubr.bf16.gmra.mxu0 %v438
      %v477 = vpop.f32.mrf.mxu0
      %v478 = vadd.f32 0.0, %v477
      %v479 = vpop.f32.mrf.mxu0
      %v480 = vpop.f32.mrf.mxu0
      %v481 = vpop.f32.mrf.mxu0
      %482 = vdwg.mxu0
      %v483 = vmul.f32 %v478, 0.35355338
      %v484 = vadd.f32 %v483, %v206
      %v485 = vsel %vm261, %v484, -inf
      %486 = vmax.xlane.f32.xlu0 %v485
      %v487 = vpop.xlane.xlu0 %486
      %v488 = vsub.f32 %v484, %v487
      %v489 = vmul.f32 %v488, 1.442695
      %v490 = vpow.pop %v489
      %v491 = vsel %vm261, %v490, 0.0
      %492 = vadd.xlane.f32.xlu0 %v491
      %v493 = vpop.xlane.xlu0 %492
      %v494 = vrcp.pop %v493
      %v495 = vmul.f32 %v490, %v494
      %v496 = vpack.c.bf16 %v495, %v495
      %497 = vrot.lane.b32.xlu0 %v211, 80
      %v498 = vpop.permute.xlu0 %497
      %v501 = vsel %vm261, %v496, 0
      %503 = vmatprep.subr.bf16.mxu0 0
      %504 = vmatpush1.bf16.msra.mxu0 0
      %505 = vmatprep.subr.bf16.mxu0 0
      %506 = vmatpush1.bf16.msra.mxu0 0
      %507 = vmatprep.subr.bf16.mxu0 0
      %508 = vmatpush1.bf16.msra.mxu0 0
      %509 = vmatprep.subr.bf16.mxu0 0
      %510 = vmatpush1.bf16.msra.mxu0 0
      %511 = vmatprep.subr.bf16.mxu0 0
      %512 = vmatpush1.bf16.msra.mxu0 0
      %513 = vmatprep.subr.bf16.mxu0 0
      %514 = vmatpush1.bf16.msra.mxu0 0
      %515 = vmatprep.subr.bf16.mxu0 0
      %516 = vmatpush1.bf16.msra.mxu0 0
      %517 = vmatprep.subr.bf16.mxu0 0
      %518 = vmatpush1.bf16.msra.mxu0 %v498
      %519 = vmatprep.subr.bf16.mxu0 0
      %520 = vmatpush2.bf16.msra.mxu0 0
      %521 = vmatprep.subr.bf16.mxu0 0
      %522 = vmatpush2.bf16.msra.mxu0 0
      %523 = vmatprep.subr.bf16.mxu0 0
      %524 = vmatpush2.bf16.msra.mxu0 0
      %525 = vmatprep.subr.bf16.mxu0 0
      %526 = vmatpush2.bf16.msra.mxu0 0
      %527 = vmatprep.subr.bf16.mxu0 0
      %528 = vmatpush2.bf16.msra.mxu0 0
      %529 = vmatprep.subr.bf16.mxu0 0
      %530 = vmatpush2.bf16.msra.mxu0 0
      %531 = vmatprep.subr.bf16.mxu0 0
      %532 = vmatpush2.bf16.msra.mxu0 0
      %533 = vmatprep.subr.bf16.mxu0 0
      %534 = vmatpush2.bf16.msra.mxu0 0
      %535 = vmatprep.mubr.bf16.mxu0 0
      %536 = vmatmul.mubr.bf16.gmra.mxu0 %v501
      %v537 = vpop.f32.mrf.mxu0
      %v538 = vadd.f32 0.0, %v537
      %v539 = vpop.f32.mrf.mxu0
      %v540 = vpop.f32.mrf.mxu0
      %v541 = vpop.f32.mrf.mxu0
      %542 = vdwg.mxu0
      %543 = vrot.lane.b32.xlu0 %v322, 104
      %v544 = vpop.permute.xlu0 %543
      %545 = vrot.lane.b32.xlu0 %v211, 104
      %v546 = vpop.permute.xlu0 %545
      %v548 = vsel %vm212, %v544, 0
      %v551 = vsel %vm212, %v546, 0
      %553 = vmatprep.subr.bf16.mxu0 0
      %554 = vmatpush1.bf16.xpose.msra.mxu0 0
      %555 = vmatprep.subr.bf16.mxu0 0
      %556 = vmatpush1.bf16.xpose.msra.mxu0 0
      %557 = vmatprep.subr.bf16.mxu0 0
      %558 = vmatpush1.bf16.xpose.msra.mxu0 0
      %559 = vmatprep.subr.bf16.mxu0 0
      %560 = vmatpush1.bf16.xpose.msra.mxu0 0
      %561 = vmatprep.subr.bf16.mxu0 0
      %562 = vmatpush1.bf16.xpose.msra.mxu0 0
      %563 = vmatprep.subr.bf16.mxu0 0
      %564 = vmatpush1.bf16.xpose.msra.mxu0 0
      %565 = vmatprep.subr.bf16.mxu0 0
      %566 = vmatpush1.bf16.xpose.msra.mxu0 0
      %567 = vmatprep.subr.bf16.mxu0 0
      %568 = vmatpush1.bf16.xpose.msra.mxu0 %v551
      %569 = vmatprep.subr.bf16.mxu0 0
      %570 = vmatpush2.bf16.xpose.msra.mxu0 0
      %571 = vmatprep.subr.bf16.mxu0 0
      %572 = vmatpush2.bf16.xpose.msra.mxu0 0
      %573 = vmatprep.subr.bf16.mxu0 0
      %574 = vmatpush2.bf16.xpose.msra.mxu0 0
      %575 = vmatprep.subr.bf16.mxu0 0
      %576 = vmatpush2.bf16.xpose.msra.mxu0 0
      %577 = vmatprep.subr.bf16.mxu0 0
      %578 = vmatpush2.bf16.xpose.msra.mxu0 0
      %579 = vmatprep.subr.bf16.mxu0 0
      %580 = vmatpush2.bf16.xpose.msra.mxu0 0
      %581 = vmatprep.subr.bf16.mxu0 0
      %582 = vmatpush2.bf16.xpose.msra.mxu0 0
      %583 = vmatprep.subr.bf16.mxu0 0
      %584 = vmatpush2.bf16.xpose.msra.mxu0 0
      %585 = vmatprep.mubr.bf16.mxu0 0
      %586 = vmatmul.mubr.bf16.gmra.mxu0 %v548
      %v587 = vpop.f32.mrf.mxu0
      %v588 = vadd.f32 0.0, %v587
      %v589 = vpop.f32.mrf.mxu0
      %v590 = vpop.f32.mrf.mxu0
      %v591 = vpop.f32.mrf.mxu0
      %592 = vdwg.mxu0
      %v593 = vmul.f32 %v588, 0.35355338
      %v594 = vadd.f32 %v593, %v206
      %v595 = vsel %vm261, %v594, -inf
      %596 = vmax.xlane.f32.xlu0 %v595
      %v597 = vpop.xlane.xlu0 %596
      %v598 = vsub.f32 %v594, %v597
      %v599 = vmul.f32 %v598, 1.442695
      %v600 = vpow.pop %v599
      %v601 = vsel %vm261, %v600, 0.0
      %602 = vadd.xlane.f32.xlu0 %v601
      %v603 = vpop.xlane.xlu0 %602
      %v604 = vrcp.pop %v603
      %v605 = vmul.f32 %v600, %v604
      %v606 = vpack.c.bf16 %v605, %v605
      %607 = vrot.lane.b32.xlu0 %v211, 72
      %v608 = vpop.permute.xlu0 %607
      %v611 = vsel %vm261, %v606, 0
      %613 = vmatprep.subr.bf16.mxu0 0
      %614 = vmatpush1.bf16.msra.mxu0 0
      %615 = vmatprep.subr.bf16.mxu0 0
      %616 = vmatpush1.bf16.msra.mxu0 0
      %617 = vmatprep.subr.bf16.mxu0 0
      %618 = vmatpush1.bf16.msra.mxu0 0
      %619 = vmatprep.subr.bf16.mxu0 0
      %620 = vmatpush1.bf16.msra.mxu0 0
      %621 = vmatprep.subr.bf16.mxu0 0
      %622 = vmatpush1.bf16.msra.mxu0 0
      %623 = vmatprep.subr.bf16.mxu0 0
      %624 = vmatpush1.bf16.msra.mxu0 0
      %625 = vmatprep.subr.bf16.mxu0 0
      %626 = vmatpush1.bf16.msra.mxu0 0
      %627 = vmatprep.subr.bf16.mxu0 0
      %628 = vmatpush1.bf16.msra.mxu0 %v608
      %629 = vmatprep.subr.bf16.mxu0 0
      %630 = vmatpush2.bf16.msra.mxu0 0
      %631 = vmatprep.subr.bf16.mxu0 0
      %632 = vmatpush2.bf16.msra.mxu0 0
      %633 = vmatprep.subr.bf16.mxu0 0
      %634 = vmatpush2.bf16.msra.mxu0 0
      %635 = vmatprep.subr.bf16.mxu0 0
      %636 = vmatpush2.bf16.msra.mxu0 0
      %637 = vmatprep.subr.bf16.mxu0 0
      %638 = vmatpush2.bf16.msra.mxu0 0
      %639 = vmatprep.subr.bf16.mxu0 0
      %640 = vmatpush2.bf16.msra.mxu0 0
      %641 = vmatprep.subr.bf16.mxu0 0
      %642 = vmatpush2.bf16.msra.mxu0 0
      %643 = vmatprep.subr.bf16.mxu0 0
      %644 = vmatpush2.bf16.msra.mxu0 0
      %645 = vmatprep.mubr.bf16.mxu0 0
      %646 = vmatmul.mubr.bf16.gmra.mxu0 %v611
      %v647 = vpop.f32.mrf.mxu0
      %v648 = vadd.f32 0.0, %v647
      %v649 = vpop.f32.mrf.mxu0
      %v650 = vpop.f32.mrf.mxu0
      %v651 = vpop.f32.mrf.mxu0
      %652 = vdwg.mxu0
      %654 = vrot.lane.b32.xlu0 %v428, 8
      %v655 = vpop.permute.xlu0 %654
      %658 = vrot.lane.b32.xlu0 %v538, 16
      %v659 = vpop.permute.xlu0 %658
      %662 = vrot.lane.b32.xlu0 %v648, 24
      %v663 = vpop.permute.xlu0 %662
      %v665 = vsel %vm212, %v315, %v655
      %v666 = vsel %vm261, %v665, %v659
      %vm667 = vcmask 195584
      %v668 = vsel %vm667, %v666, %v663
      %v669 = vpack.c.bf16 %v668, %v668
      %vm670 = vcmask 257024
      %671 = vst.msk [vmem:[%s196] sm:$0xf] %vm670, %v669
      %p672 = scmp.lt.s32.totalorder %s24, 1
      %s673 = scalar_select %p672, %s24, 1
      %p674 = scmp.lt.s32.totalorder %s25, 0
      %s675 = scalar_select %p674, %s25, 0
      %s676 = sadd.s32 %s675, %s673
      %s677 = smul.addr %s676, 4
      %s678 = scalar_lea.vmem %s3, %s677
      // Predicated region
      $region29: #{decoder_tx_forward.26} parent=27 // pred_check
        %p679 = pneg %p106
      $region30: #{decoder_tx_forward.26} parent=27 // pred_check_branch
        %681 = sbr.rel (%p679) target = $region32
      $region31: #{decoder_tx_forward.26} parent=27 // pred_region
        _
      $region32: #{decoder_tx_forward.26} parent=27 // pred_fallthru
        _
    $region28: #{decoder_tx_forward.26} parent=5 // pred_fallthru
      _
    %p682 = scmp.le.s32.totalorder 2, %s15
    // Predicated region
    $region33: #{decoder_tx_forward.26} parent=5 // pred_check
      %p683 = pneg %p682
    $region34: #{decoder_tx_forward.26} parent=5 // pred_check_branch
      %685 = sbr.rel (%p683) target = $region36
    $region35: #{decoder_tx_forward.26} parent=5 // pred_region
      %s686 = ssub.s32 %s15, 2
      // Predicated region
      $region37: #{decoder_tx_forward.26} parent=35 // pred_check
        %p687 = pneg %p112
      $region38: #{decoder_tx_forward.26} parent=35 // pred_check_branch
        %689 = sbr.rel (%p687) target = $region40
      $region39: #{decoder_tx_forward.26} parent=35 // pred_region
        %p690 = scmp.lt.s32.totalorder %s26, 1
        %s691 = scalar_select %p690, %s26, 1
        %p692 = scmp.lt.s32.totalorder %s27, 0
        %s693 = scalar_select %p692, %s27, 0
        %s694 = sadd.s32 %s693, %s691
        %s695 = smul.addr %s694, 4
        %s696 = scalar_lea.vmem %s3, %s695
      $region40: #{decoder_tx_forward.26} parent=35 // pred_fallthru
        _
    $region36: #{decoder_tx_forward.26} parent=5 // pred_fallthru
      _
  $region6: #{decoder_tx_forward.26} parent=0 // loop_footer
    %s19 = sadd.s32 1, %s15
  $region7: #{decoder_tx_forward.26} parent=0 // loop_footer_branch
    %14 = sbr.rel target = $region3
  $region8: #{decoder_tx_forward.26} parent=0 // loop_exit
    _

</llo_original>
